<compile_context>
chip_gen: v5e
topology: v5e:2x2
jax: 0.10.0
libtpu: 0.0.40
codegen_flags: <defaults>
</compile_context>

<pallas_src>
import functools
import math

import jax
import jax.numpy as jnp
from jax.experimental import pallas as pl
from jax.experimental.pallas import tpu as pltpu


# ---------------------------------------------------------------------------
# Fused Pallas kernel: one (image, row-tile) per grid step.
# ---------------------------------------------------------------------------
def _aspp_fused_kernel(x_ref, w1_ref, w3_ref, bsh_ref, wp_ref, bp_ref, o_ref, *,
                       rates, pad, row_tile, w_al):
    cin = x_ref.shape[-1]
    rt = pl.program_id(1)
    trh = row_tile + 2 * pad            # halo'ed rows needed by this tile
    m = row_tile * w_al                 # flattened output rows of this tile

    # Haloed row window of the padded image.  The dynamic offset is along the
    # leading (untiled) H dim only -> plain address arithmetic, no relayout.
    win = x_ref[0, pl.ds(rt * row_tile, trh), :, :]        # (trh, Wp_al, Cin)

    def col_shift(dx):
        # One sublane-relayout column shift, reused by all 3 ky taps of a
        # branch (and dx == 0 is shared by every branch): 7 shifts, not 28.
        return win[:, pad + dx: pad + dx + w_al, :]        # (trh, W_al, Cin)

    def tap(shifted, dy):
        # Row shifts along the leading dim are free; W_al % 8 == 0 keeps the
        # flatten layout-preserving.
        return shifted[pad + dy: pad + dy + row_tile].reshape(m, cin)

    center = col_shift(0)

    # --- branch 0: 1x1 conv (+ folded-BN shift, ReLU), then its projection slice
    b = jnp.dot(tap(center, 0), w1_ref[...], preferred_element_type=jnp.float32)
    b = jnp.maximum(b + bsh_ref[0:1, :], 0.0)
    acc = jnp.dot(b.astype(wp_ref.dtype), wp_ref[0],
                  preferred_element_type=jnp.float32)      # (m, Cout) f32

    # --- dilated 3x3 branches: one im2col strip -> ONE MXU GEMM each (K = 9*Cin)
    for bi, r in enumerate(rates):
        shifts = {0: center, -r: col_shift(-r), r: col_shift(r)}
        taps = [tap(shifts[(kx - 1) * r], (ky - 1) * r)
                for ky in range(3) for kx in range(3)]
        strip = jnp.concatenate(taps, axis=-1)             # (m, 9*Cin)
        b = jnp.dot(strip, w3_ref[bi], preferred_element_type=jnp.float32)
        b = jnp.maximum(b + bsh_ref[bi + 1:bi + 2, :], 0.0)
        acc = acc + jnp.dot(b.astype(wp_ref.dtype), wp_ref[bi + 1],
                            preferred_element_type=jnp.float32)

    # Pooled branch (per-batch constant, already pushed through the projection;
    # includes the projection BN shift) + final ReLU.
    o_ref[0] = jnp.maximum(acc + bp_ref[0], 0.0).astype(o_ref.dtype)


# ---------------------------------------------------------------------------
# Parameter folding / packing for the fused kernel.
# ---------------------------------------------------------------------------
def _fold_bn_into_weight(w, scale):
    # (x @ w) * scale == x @ (w * scale)
    return w * scale[None, :]


def prepare_aspp_kernel_params(params, out_channels=256,
                               compute_dtype=jnp.bfloat16,
                               out_dtype=jnp.float32):
    rates = tuple(params["rates"])
    cout = out_channels
    n_br = 1 + len(rates)

    w1 = _fold_bn_into_weight(params["b0_w"], params["b0_scale"])
    w3 = jnp.stack(
        [_fold_bn_into_weight(params[f"b{i+1}_w"], params[f"b{i+1}_scale"])
         for i in range(len(rates))], axis=0)                    # (R, 9*Cin, Cout)
    bshift = jnp.stack(
        [params["b0_shift"]]
        + [params[f"b{i+1}_shift"] for i in range(len(rates))], axis=0)

    wp = _fold_bn_into_weight(params["proj_w"], params["proj_scale"])

    return {
        "rates": rates,
        "pad": max(rates),
        "w1": w1.astype(compute_dtype),                          # (Cin, Cout)
        "w3": w3.astype(compute_dtype),                          # (R, 9*Cin, Cout)
        "bshift": bshift.astype(jnp.float32),                    # (n_br, Cout)
        "wp_conv": wp[:n_br * cout].reshape(n_br, cout, cout).astype(compute_dtype),
        "bp_w": _fold_bn_into_weight(params["bp_w"], params["bp_scale"]),
        "bp_shift": params["bp_shift"].astype(jnp.float32),
        "wp_pool": wp[n_br * cout:].astype(compute_dtype),       # (Cout, Cout)
        "proj_shift": params["proj_shift"].astype(jnp.float32),
        "compute_dtype": compute_dtype,
        "out_dtype": out_dtype,
    }


# ---------------------------------------------------------------------------
# Row-tile / VMEM sizing helpers.
# ---------------------------------------------------------------------------
def _pick_row_tile(h, w_al, target_rows=512):
    """Largest divisor of H whose (TR * W_al) tile stays small; prefer >=2 tiles."""
    tr = 1
    for cand in range(1, h + 1):
        if h % cand == 0 and cand * w_al <= target_rows:
            tr = cand
    if tr == h and h > 1:   # keep >=2 row tiles for pipeline depth / megacore
        tr = max(d for d in range(1, h) if h % d == 0)
    return tr


def _nbytes(shape, dtype):
    return math.prod(shape) * jnp.dtype(dtype).itemsize


# ---------------------------------------------------------------------------
# ASPP forward (NCHW in / NCHW out to match the PyTorch module interface;
# inside a full NHWC model these boundary transposes would be dropped).
# ---------------------------------------------------------------------------
def aspp_forward(x_nchw, kparams):
    rates = kparams["rates"]
    pad = kparams["pad"]
    cd = kparams["compute_dtype"]
    od = kparams["out_dtype"]
    cout = int(kparams["bshift"].shape[-1])
    n_br = int(kparams["bshift"].shape[0])
    n_rates = len(rates)

    x = jnp.transpose(x_nchw, (0, 2, 3, 1)).astype(jnp.float32)   # NHWC, f32
    N, H, W, Cin = x.shape

    # Pooling branch: AdaptiveAvgPool2d(1) + 1x1 conv + BN + ReLU.  The bilinear
    # upsample of a 1x1 map (align_corners=False) is a broadcast, so the whole
    # branch is a per-batch (N, Cout) constant pushed through the projection
    # weight here (never materialized spatially).
    pooled = jnp.mean(x, axis=(1, 2))                             # (N, Cin) f32
    bp_out = jnp.maximum(pooled @ kparams["bp_w"]
                         + kparams["bp_shift"][None, :], 0.0)
    bp_term = (jnp.dot(bp_out.astype(cd), kparams["wp_pool"],
                       preferred_element_type=jnp.float32)
               + kparams["proj_shift"][None, :]).reshape(N, 1, cout)
    bp_term = bp_term.astype(jnp.float32)

    # Cast to the compute dtype ONCE, then a single pad that provides the
    # dilation halo and rounds W up to a multiple of 8 (layout-preserving
    # flatten, unmasked stores).
    w_al = ((W + 7) // 8) * 8
    xpad = jnp.pad(x.astype(cd),
                   ((0, 0), (pad, pad), (pad, pad + (w_al - W)), (0, 0)))
    Hp, Wp_al = H + 2 * pad, w_al + 2 * pad

    TR = _pick_row_tile(H, w_al)
    n_rt = H // TR
    m = TR * w_al

    # Scoped-VMEM budget from the actual block shapes (double-buffered) plus
    # in-kernel intermediates, clamped to stay well below v7x's 64 MiB.
    blk = (_nbytes((1, Hp, Wp_al, Cin), cd) + _nbytes((Cin, cout), cd)
           + _nbytes((n_rates, 9 * Cin, cout), cd)
           + _nbytes((n_br, cout), jnp.float32)
           + _nbytes((n_br, cout, cout), cd)
           + _nbytes((1, 1, cout), jnp.float32)
           + _nbytes((1, m, cout), od))
    inter = (_nbytes((m, 9 * Cin), cd)
             + 3 * _nbytes((TR + 2 * pad, w_al, Cin), cd)
             + 3 * _nbytes((m, cout), jnp.float32))
    vmem_limit = int(min(60 * 2**20, max(32 * 2**20, 2 * blk + 2 * inter)))

    kernel = functools.partial(_aspp_fused_kernel, rates=rates, pad=pad,
                               row_tile=TR, w_al=w_al)

    out = pl.pallas_call(
        kernel,
        out_shape=jax.ShapeDtypeStruct((N, H * w_al, cout), od),
        grid_spec=pltpu.PrefetchScalarGridSpec(
            num_scalar_prefetch=0,
            grid=(N, n_rt),
            in_specs=[
                # Whole padded image (compute dtype); constant over the inner
                # row-tile axis so it is DMA'd once per image.
                pl.BlockSpec((1, Hp, Wp_al, Cin), lambda n, rt: (n, 0, 0, 0)),
                pl.BlockSpec((Cin, cout), lambda n, rt: (0, 0)),               # 1x1 weight
                pl.BlockSpec((n_rates, 9 * Cin, cout), lambda n, rt: (0, 0, 0)),  # 3x3 weights
                pl.BlockSpec((n_br, cout), lambda n, rt: (0, 0)),              # branch BN shifts
                pl.BlockSpec((n_br, cout, cout), lambda n, rt: (0, 0, 0)),     # projection blocks
                pl.BlockSpec((1, 1, cout), lambda n, rt: (n, 0, 0)),           # pooled-branch term
            ],
            out_specs=pl.BlockSpec((1, m, cout), lambda n, rt: (n, rt, 0)),
        ),
        compiler_params=pltpu.CompilerParams(
            dimension_semantics=("parallel", "parallel"),
            vmem_limit_bytes=vmem_limit,
        ),
    )(xpad, kparams["w1"], kparams["w3"], kparams["bshift"],
      kparams["wp_conv"], bp_term)

    out = out.reshape(N, H, w_al, cout)[:, :, :W, :]
    return jnp.transpose(out, (0, 3, 1, 2))                        # NCHW


# ---------------------------------------------------------------------------
# Synthetic parameters (deterministic).  BatchNorm folded to inference-mode
# scale/shift: scale = gamma / sqrt(var + eps), shift = beta - mean * scale.
# ---------------------------------------------------------------------------
def _folded_bn(key, c, eps=1e-5):
    k1, k2, k3, k4 = jax.random.split(key, 4)
    gamma = 1.0 + 0.1 * jax.random.normal(k1, (c,), jnp.float32)
    beta = 0.1 * jax.random.normal(k2, (c,), jnp.float32)
    mean = 0.1 * jax.random.normal(k3, (c,), jnp.float32)
    var = 1.0 + 0.1 * jnp.abs(jax.random.normal(k4, (c,), jnp.float32))
    scale = gamma / jnp.sqrt(var + eps)
    shift = beta - mean * scale
    return scale, shift


def init_aspp_params(key, in_channels, atrous_rates, out_channels=256):
    params = {"rates": tuple(atrous_rates)}
    keys = jax.random.split(key, 12)

    params["b0_w"] = 0.1 * jax.random.normal(
        keys[0], (in_channels, out_channels), jnp.float32)
    params["b0_scale"], params["b0_shift"] = _folded_bn(keys[1], out_channels)

    for i in range(3):
        params[f"b{i+1}_w"] = 0.1 * jax.random.normal(
            keys[2 + 2 * i], (9 * in_channels, out_channels), jnp.float32)
        params[f"b{i+1}_scale"], params[f"b{i+1}_shift"] = _folded_bn(
            keys[3 + 2 * i], out_channels)

    params["bp_w"] = 0.1 * jax.random.normal(
        keys[8], (in_channels, out_channels), jnp.float32)
    params["bp_scale"], params["bp_shift"] = _folded_bn(keys[9], out_channels)

    params["proj_w"] = 0.1 * jax.random.normal(
        keys[10], (5 * out_channels, out_channels), jnp.float32)
    params["proj_scale"], params["proj_shift"] = _folded_bn(keys[11], out_channels)
    return params


# ---------------------------------------------------------------------------
# Pure-JAX reference (lax.conv).  compute_dtype lets us match the bf16-fed
# MXU path (f32 accumulate) for an apples-to-apples precision check.
# ---------------------------------------------------------------------------
def aspp_forward_ref(x_nchw, params, out_channels=256,
                     compute_dtype=jnp.float32):
    cd = compute_dtype
    x = jnp.transpose(x_nchw, (0, 2, 3, 1)).astype(jnp.float32)
    N, H, W, Cin = x.shape
    dn = ("NHWC", "HWIO", "NHWC")

    def conv_bn_relu(w2d, scale, shift, ksize, rate):
        w = (w2d * scale[None, :]).reshape(ksize, ksize, Cin, out_channels)
        p = rate * (ksize // 2)
        y = jax.lax.conv_general_dilated(
            x.astype(cd), w.astype(cd), window_strides=(1, 1),
            padding=[(p, p), (p, p)], rhs_dilation=(rate, rate),
            dimension_numbers=dn, preferred_element_type=jnp.float32)
        return jnp.maximum(y + shift, 0.0)

    outs = [conv_bn_relu(params["b0_w"], params["b0_scale"],
                         params["b0_shift"], 1, 1)]
    for i, r in enumerate(params["rates"]):
        outs.append(conv_bn_relu(params[f"b{i+1}_w"], params[f"b{i+1}_scale"],
                                 params[f"b{i+1}_shift"], 3, r))

    pooled = jnp.mean(x, axis=(1, 2))
    op = jnp.maximum(pooled @ (params["bp_w"] * params["bp_scale"][None, :])
                     + params["bp_shift"], 0.0)
    outs.append(jnp.broadcast_to(op[:, None, None, :], (N, H, W, out_channels)))

    cat = jnp.concatenate(outs, axis=-1).reshape(N * H * W, 5 * out_channels)
    wp = params["proj_w"] * params["proj_scale"][None, :]
    proj = jnp.maximum(
        jnp.dot(cat.astype(cd), wp.astype(cd),
                preferred_element_type=jnp.float32)
        + params["proj_shift"], 0.0).reshape(N, H, W, out_channels)
    return jnp.transpose(proj, (0, 3, 1, 2))


if __name__ == "__main__":
    key = jax.random.PRNGKey(0)
    k_x, k_p = jax.random.split(key)

    # Small shapes consistent with the module: N=2, Cin=4, H=W=16, rates=(1,2,3).
    in_channels = 4
    atrous_rates = (1, 2, 3)
    x = jax.random.normal(k_x, (2, in_channels, 16, 16), jnp.float32)  # NCHW

    params = init_aspp_params(k_p, in_channels, atrous_rates)

    # bf16-fed MXU (all TPU generations), f32 accumulation / epilogues.
    kp = prepare_aspp_kernel_params(params, compute_dtype=jnp.bfloat16)
    fwd = jax.jit(functools.partial(aspp_forward, kparams=kp))
    out = jax.block_until_ready(fwd(x))
    assert out.shape == (2, 256, 16, 16), out.shape

    ref = jax.block_until_ready(
        aspp_forward_ref(x, params, compute_dtype=jnp.bfloat16))
    max_err = float(jnp.max(jnp.abs(out - ref)))
    assert jnp.allclose(out, ref, rtol=1e-2, atol=1e-2), max_err

    print("KERNEL_OK")
</pallas_src>

<mosaic_0001>
module attributes {stable_mosaic.version = 11 : i64} {
  func.func @_aspp_fused_kernel(%arg0: i32, %arg1: i32, %arg2: memref<1x22x22x4xbf16, #tpu.memory_space<vmem>>, %arg3: memref<4x256xbf16, #tpu.memory_space<vmem>>, %arg4: memref<3x36x256xbf16, #tpu.memory_space<vmem>>, %arg5: memref<4x256xf32, #tpu.memory_space<vmem>>, %arg6: memref<4x256x256xbf16, #tpu.memory_space<vmem>>, %arg7: memref<1x1x256xf32, #tpu.memory_space<vmem>>, %arg8: memref<1x128x256xf32, #tpu.memory_space<vmem>>) attributes {dimension_semantics = [#tpu.dimension_semantics<parallel>, #tpu.dimension_semantics<parallel>], iteration_bounds = array<i64: 2, 2>, scalar_prefetch = 0 : i64, scratch_operands = 0 : i64, tpu.core_type = #tpu.core_type<tc>, window_params = [{transform_indices = @transform_0, window_bounds = array<i64: 1, 22, 22, 4>}, {pipeline_mode = #tpu.pipeline_mode<synchronous>, transform_indices = @transform_1, window_bounds = array<i64: 4, 256>}, {pipeline_mode = #tpu.pipeline_mode<synchronous>, transform_indices = @transform_2, window_bounds = array<i64: 3, 36, 256>}, {pipeline_mode = #tpu.pipeline_mode<synchronous>, transform_indices = @transform_3, window_bounds = array<i64: 4, 256>}, {pipeline_mode = #tpu.pipeline_mode<synchronous>, transform_indices = @transform_4, window_bounds = array<i64: 4, 256, 256>}, {transform_indices = @transform_5, window_bounds = array<i64: 1, 1, 256>}, {transform_indices = @transform_6, window_bounds = array<i64: 1, 128, 256>}]} {
    %c8_i32 = arith.constant 8 : i32
    %0 = arith.muli %arg1, %c8_i32 : i32
    %c0 = arith.constant 0 : index
    %1 = arith.index_cast %0 : i32 to index
    %c0_0 = arith.constant 0 : index
    %c0_1 = arith.constant 0 : index
    %2 = vector.load %arg2[%c0, %1, %c0_0, %c0_1] : memref<1x22x22x4xbf16, #tpu.memory_space<vmem>>, vector<1x14x22x4xbf16>
    %3 = vector.shape_cast %2 : vector<1x14x22x4xbf16> to vector<14x22x4xbf16>
    %4 = vector.extract_strided_slice %3 {offsets = [0, 3, 0], sizes = [14, 16, 4], strides = [1, 1, 1]} : vector<14x22x4xbf16> to vector<14x16x4xbf16>
    %5 = vector.extract_strided_slice %4 {offsets = [3, 0, 0], sizes = [8, 16, 4], strides = [1, 1, 1]} : vector<14x16x4xbf16> to vector<8x16x4xbf16>
    %6 = vector.shape_cast %5 : vector<8x16x4xbf16> to vector<128x4xbf16>
    %c0_2 = arith.constant 0 : index
    %c0_3 = arith.constant 0 : index
    %7 = vector.load %arg3[%c0_2, %c0_3] : memref<4x256xbf16, #tpu.memory_space<vmem>>, vector<4x256xbf16>
    %cst = arith.constant dense<0.000000e+00> : vector<128x256xf32>
    %8 = tpu.matmul %6, %7, %cst {dimension_numbers = #tpu.dot_dimension_numbers<[1], [0], [0], [1], [0, 0, 1, 1], [], []>} : vector<128x4xbf16>, vector<4x256xbf16>, vector<128x256xf32> -> vector<128x256xf32>
    %c0_4 = arith.constant 0 : index
    %c0_5 = arith.constant 0 : index
    %9 = vector.load %arg5[%c0_4, %c0_5] : memref<4x256xf32, #tpu.memory_space<vmem>>, vector<1x256xf32>
    %10 = vector.broadcast %9 : vector<1x256xf32> to vector<128x256xf32>
    %11 = arith.addf %8, %10 : vector<128x256xf32>
    %cst_6 = arith.constant 0.000000e+00 : f32
    %12 = vector.broadcast %cst_6 : f32 to vector<128x256xf32>
    %13 = arith.maximumf %11, %12 : vector<128x256xf32>
    %14 = arith.truncf %13 : vector<128x256xf32> to vector<128x256xbf16>
    %c0_7 = arith.constant 0 : index
    %c0_8 = arith.constant 0 : index
    %c0_9 = arith.constant 0 : index
    %15 = vector.load %arg6[%c0_7, %c0_8, %c0_9] : memref<4x256x256xbf16, #tpu.memory_space<vmem>>, vector<1x256x256xbf16>
    %16 = vector.shape_cast %15 : vector<1x256x256xbf16> to vector<256x256xbf16>
    %cst_10 = arith.constant dense<0.000000e+00> : vector<128x256xf32>
    %17 = tpu.matmul %14, %16, %cst_10 {dimension_numbers = #tpu.dot_dimension_numbers<[1], [0], [0], [1], [0, 0, 1, 1], [], []>} : vector<128x256xbf16>, vector<256x256xbf16>, vector<128x256xf32> -> vector<128x256xf32>
    %18 = vector.extract_strided_slice %3 {offsets = [0, 2, 0], sizes = [14, 16, 4], strides = [1, 1, 1]} : vector<14x22x4xbf16> to vector<14x16x4xbf16>
    %19 = vector.extract_strided_slice %3 {offsets = [0, 4, 0], sizes = [14, 16, 4], strides = [1, 1, 1]} : vector<14x22x4xbf16> to vector<14x16x4xbf16>
    %20 = vector.extract_strided_slice %18 {offsets = [2, 0, 0], sizes = [8, 16, 4], strides = [1, 1, 1]} : vector<14x16x4xbf16> to vector<8x16x4xbf16>
    %21 = vector.shape_cast %20 : vector<8x16x4xbf16> to vector<128x4xbf16>
    %22 = vector.extract_strided_slice %4 {offsets = [2, 0, 0], sizes = [8, 16, 4], strides = [1, 1, 1]} : vector<14x16x4xbf16> to vector<8x16x4xbf16>
    %23 = vector.shape_cast %22 : vector<8x16x4xbf16> to vector<128x4xbf16>
    %24 = vector.extract_strided_slice %19 {offsets = [2, 0, 0], sizes = [8, 16, 4], strides = [1, 1, 1]} : vector<14x16x4xbf16> to vector<8x16x4xbf16>
    %25 = vector.shape_cast %24 : vector<8x16x4xbf16> to vector<128x4xbf16>
    %26 = vector.extract_strided_slice %18 {offsets = [3, 0, 0], sizes = [8, 16, 4], strides = [1, 1, 1]} : vector<14x16x4xbf16> to vector<8x16x4xbf16>
    %27 = vector.shape_cast %26 : vector<8x16x4xbf16> to vector<128x4xbf16>
    %28 = vector.extract_strided_slice %4 {offsets = [3, 0, 0], sizes = [8, 16, 4], strides = [1, 1, 1]} : vector<14x16x4xbf16> to vector<8x16x4xbf16>
    %29 = vector.shape_cast %28 : vector<8x16x4xbf16> to vector<128x4xbf16>
    %30 = vector.extract_strided_slice %19 {offsets = [3, 0, 0], sizes = [8, 16, 4], strides = [1, 1, 1]} : vector<14x16x4xbf16> to vector<8x16x4xbf16>
    %31 = vector.shape_cast %30 : vector<8x16x4xbf16> to vector<128x4xbf16>
    %32 = vector.extract_strided_slice %18 {offsets = [4, 0, 0], sizes = [8, 16, 4], strides = [1, 1, 1]} : vector<14x16x4xbf16> to vector<8x16x4xbf16>
    %33 = vector.shape_cast %32 : vector<8x16x4xbf16> to vector<128x4xbf16>
    %34 = vector.extract_strided_slice %4 {offsets = [4, 0, 0], sizes = [8, 16, 4], strides = [1, 1, 1]} : vector<14x16x4xbf16> to vector<8x16x4xbf16>
    %35 = vector.shape_cast %34 : vector<8x16x4xbf16> to vector<128x4xbf16>
    %36 = vector.extract_strided_slice %19 {offsets = [4, 0, 0], sizes = [8, 16, 4], strides = [1, 1, 1]} : vector<14x16x4xbf16> to vector<8x16x4xbf16>
    %37 = vector.shape_cast %36 : vector<8x16x4xbf16> to vector<128x4xbf16>
    %38 = tpu.concatenate %21, %23, %25, %27, %29, %31, %33, %35, %37 in 1 : vector<128x4xbf16>, vector<128x4xbf16>, vector<128x4xbf16>, vector<128x4xbf16>, vector<128x4xbf16>, vector<128x4xbf16>, vector<128x4xbf16>, vector<128x4xbf16>, vector<128x4xbf16> -> vector<128x36xbf16>
    %c0_11 = arith.constant 0 : index
    %c0_12 = arith.constant 0 : index
    %c0_13 = arith.constant 0 : index
    %39 = vector.load %arg4[%c0_11, %c0_12, %c0_13] : memref<3x36x256xbf16, #tpu.memory_space<vmem>>, vector<1x36x256xbf16>
    %40 = vector.shape_cast %39 : vector<1x36x256xbf16> to vector<36x256xbf16>
    %cst_14 = arith.constant dense<0.000000e+00> : vector<128x256xf32>
    %41 = tpu.matmul %38, %40, %cst_14 {dimension_numbers = #tpu.dot_dimension_numbers<[1], [0], [0], [1], [0, 0, 1, 1], [], []>} : vector<128x36xbf16>, vector<36x256xbf16>, vector<128x256xf32> -> vector<128x256xf32>
    %c1 = arith.constant 1 : index
    %c0_15 = arith.constant 0 : index
    %42 = vector.load %arg5[%c1, %c0_15] : memref<4x256xf32, #tpu.memory_space<vmem>>, vector<1x256xf32>
    %43 = vector.broadcast %42 : vector<1x256xf32> to vector<128x256xf32>
    %44 = arith.addf %41, %43 : vector<128x256xf32>
    %cst_16 = arith.constant 0.000000e+00 : f32
    %45 = vector.broadcast %cst_16 : f32 to vector<128x256xf32>
    %46 = arith.maximumf %44, %45 : vector<128x256xf32>
    %47 = arith.truncf %46 : vector<128x256xf32> to vector<128x256xbf16>
    %c1_17 = arith.constant 1 : index
    %c0_18 = arith.constant 0 : index
    %c0_19 = arith.constant 0 : index
    %48 = vector.load %arg6[%c1_17, %c0_18, %c0_19] : memref<4x256x256xbf16, #tpu.memory_space<vmem>>, vector<1x256x256xbf16>
    %49 = vector.shape_cast %48 : vector<1x256x256xbf16> to vector<256x256xbf16>
    %cst_20 = arith.constant dense<0.000000e+00> : vector<128x256xf32>
    %50 = tpu.matmul %47, %49, %cst_20 {dimension_numbers = #tpu.dot_dimension_numbers<[1], [0], [0], [1], [0, 0, 1, 1], [], []>} : vector<128x256xbf16>, vector<256x256xbf16>, vector<128x256xf32> -> vector<128x256xf32>
    %51 = arith.addf %17, %50 : vector<128x256xf32>
    %52 = vector.extract_strided_slice %3 {offsets = [0, 1, 0], sizes = [14, 16, 4], strides = [1, 1, 1]} : vector<14x22x4xbf16> to vector<14x16x4xbf16>
    %53 = vector.extract_strided_slice %3 {offsets = [0, 5, 0], sizes = [14, 16, 4], strides = [1, 1, 1]} : vector<14x22x4xbf16> to vector<14x16x4xbf16>
    %54 = vector.extract_strided_slice %52 {offsets = [1, 0, 0], sizes = [8, 16, 4], strides = [1, 1, 1]} : vector<14x16x4xbf16> to vector<8x16x4xbf16>
    %55 = vector.shape_cast %54 : vector<8x16x4xbf16> to vector<128x4xbf16>
    %56 = vector.extract_strided_slice %4 {offsets = [1, 0, 0], sizes = [8, 16, 4], strides = [1, 1, 1]} : vector<14x16x4xbf16> to vector<8x16x4xbf16>
    %57 = vector.shape_cast %56 : vector<8x16x4xbf16> to vector<128x4xbf16>
    %58 = vector.extract_strided_slice %53 {offsets = [1, 0, 0], sizes = [8, 16, 4], strides = [1, 1, 1]} : vector<14x16x4xbf16> to vector<8x16x4xbf16>
    %59 = vector.shape_cast %58 : vector<8x16x4xbf16> to vector<128x4xbf16>
    %60 = vector.extract_strided_slice %52 {offsets = [3, 0, 0], sizes = [8, 16, 4], strides = [1, 1, 1]} : vector<14x16x4xbf16> to vector<8x16x4xbf16>
    %61 = vector.shape_cast %60 : vector<8x16x4xbf16> to vector<128x4xbf16>
    %62 = vector.extract_strided_slice %4 {offsets = [3, 0, 0], sizes = [8, 16, 4], strides = [1, 1, 1]} : vector<14x16x4xbf16> to vector<8x16x4xbf16>
    %63 = vector.shape_cast %62 : vector<8x16x4xbf16> to vector<128x4xbf16>
    %64 = vector.extract_strided_slice %53 {offsets = [3, 0, 0], sizes = [8, 16, 4], strides = [1, 1, 1]} : vector<14x16x4xbf16> to vector<8x16x4xbf16>
    %65 = vector.shape_cast %64 : vector<8x16x4xbf16> to vector<128x4xbf16>
    %66 = vector.extract_strided_slice %52 {offsets = [5, 0, 0], sizes = [8, 16, 4], strides = [1, 1, 1]} : vector<14x16x4xbf16> to vector<8x16x4xbf16>
    %67 = vector.shape_cast %66 : vector<8x16x4xbf16> to vector<128x4xbf16>
    %68 = vector.extract_strided_slice %4 {offsets = [5, 0, 0], sizes = [8, 16, 4], strides = [1, 1, 1]} : vector<14x16x4xbf16> to vector<8x16x4xbf16>
    %69 = vector.shape_cast %68 : vector<8x16x4xbf16> to vector<128x4xbf16>
    %70 = vector.extract_strided_slice %53 {offsets = [5, 0, 0], sizes = [8, 16, 4], strides = [1, 1, 1]} : vector<14x16x4xbf16> to vector<8x16x4xbf16>
    %71 = vector.shape_cast %70 : vector<8x16x4xbf16> to vector<128x4xbf16>
    %72 = tpu.concatenate %55, %57, %59, %61, %63, %65, %67, %69, %71 in 1 : vector<128x4xbf16>, vector<128x4xbf16>, vector<128x4xbf16>, vector<128x4xbf16>, vector<128x4xbf16>, vector<128x4xbf16>, vector<128x4xbf16>, vector<128x4xbf16>, vector<128x4xbf16> -> vector<128x36xbf16>
    %c1_21 = arith.constant 1 : index
    %c0_22 = arith.constant 0 : index
    %c0_23 = arith.constant 0 : index
    %73 = vector.load %arg4[%c1_21, %c0_22, %c0_23] : memref<3x36x256xbf16, #tpu.memory_space<vmem>>, vector<1x36x256xbf16>
    %74 = vector.shape_cast %73 : vector<1x36x256xbf16> to vector<36x256xbf16>
    %cst_24 = arith.constant dense<0.000000e+00> : vector<128x256xf32>
    %75 = tpu.matmul %72, %74, %cst_24 {dimension_numbers = #tpu.dot_dimension_numbers<[1], [0], [0], [1], [0, 0, 1, 1], [], []>} : vector<128x36xbf16>, vector<36x256xbf16>, vector<128x256xf32> -> vector<128x256xf32>
    %c2 = arith.constant 2 : index
    %c0_25 = arith.constant 0 : index
    %76 = vector.load %arg5[%c2, %c0_25] : memref<4x256xf32, #tpu.memory_space<vmem>>, vector<1x256xf32>
    %77 = vector.broadcast %76 : vector<1x256xf32> to vector<128x256xf32>
    %78 = arith.addf %75, %77 : vector<128x256xf32>
    %cst_26 = arith.constant 0.000000e+00 : f32
    %79 = vector.broadcast %cst_26 : f32 to vector<128x256xf32>
    %80 = arith.maximumf %78, %79 : vector<128x256xf32>
    %81 = arith.truncf %80 : vector<128x256xf32> to vector<128x256xbf16>
    %c2_27 = arith.constant 2 : index
    %c0_28 = arith.constant 0 : index
    %c0_29 = arith.constant 0 : index
    %82 = vector.load %arg6[%c2_27, %c0_28, %c0_29] : memref<4x256x256xbf16, #tpu.memory_space<vmem>>, vector<1x256x256xbf16>
    %83 = vector.shape_cast %82 : vector<1x256x256xbf16> to vector<256x256xbf16>
    %cst_30 = arith.constant dense<0.000000e+00> : vector<128x256xf32>
    %84 = tpu.matmul %81, %83, %cst_30 {dimension_numbers = #tpu.dot_dimension_numbers<[1], [0], [0], [1], [0, 0, 1, 1], [], []>} : vector<128x256xbf16>, vector<256x256xbf16>, vector<128x256xf32> -> vector<128x256xf32>
    %85 = arith.addf %51, %84 : vector<128x256xf32>
    %86 = vector.extract_strided_slice %3 {offsets = [0, 0, 0], sizes = [14, 16, 4], strides = [1, 1, 1]} : vector<14x22x4xbf16> to vector<14x16x4xbf16>
    %87 = vector.extract_strided_slice %3 {offsets = [0, 6, 0], sizes = [14, 16, 4], strides = [1, 1, 1]} : vector<14x22x4xbf16> to vector<14x16x4xbf16>
    %88 = vector.extract_strided_slice %86 {offsets = [0, 0, 0], sizes = [8, 16, 4], strides = [1, 1, 1]} : vector<14x16x4xbf16> to vector<8x16x4xbf16>
    %89 = vector.shape_cast %88 : vector<8x16x4xbf16> to vector<128x4xbf16>
    %90 = vector.extract_strided_slice %4 {offsets = [0, 0, 0], sizes = [8, 16, 4], strides = [1, 1, 1]} : vector<14x16x4xbf16> to vector<8x16x4xbf16>
    %91 = vector.shape_cast %90 : vector<8x16x4xbf16> to vector<128x4xbf16>
    %92 = vector.extract_strided_slice %87 {offsets = [0, 0, 0], sizes = [8, 16, 4], strides = [1, 1, 1]} : vector<14x16x4xbf16> to vector<8x16x4xbf16>
    %93 = vector.shape_cast %92 : vector<8x16x4xbf16> to vector<128x4xbf16>
    %94 = vector.extract_strided_slice %86 {offsets = [3, 0, 0], sizes = [8, 16, 4], strides = [1, 1, 1]} : vector<14x16x4xbf16> to vector<8x16x4xbf16>
    %95 = vector.shape_cast %94 : vector<8x16x4xbf16> to vector<128x4xbf16>
    %96 = vector.extract_strided_slice %4 {offsets = [3, 0, 0], sizes = [8, 16, 4], strides = [1, 1, 1]} : vector<14x16x4xbf16> to vector<8x16x4xbf16>
    %97 = vector.shape_cast %96 : vector<8x16x4xbf16> to vector<128x4xbf16>
    %98 = vector.extract_strided_slice %87 {offsets = [3, 0, 0], sizes = [8, 16, 4], strides = [1, 1, 1]} : vector<14x16x4xbf16> to vector<8x16x4xbf16>
    %99 = vector.shape_cast %98 : vector<8x16x4xbf16> to vector<128x4xbf16>
    %100 = vector.extract_strided_slice %86 {offsets = [6, 0, 0], sizes = [8, 16, 4], strides = [1, 1, 1]} : vector<14x16x4xbf16> to vector<8x16x4xbf16>
    %101 = vector.shape_cast %100 : vector<8x16x4xbf16> to vector<128x4xbf16>
    %102 = vector.extract_strided_slice %4 {offsets = [6, 0, 0], sizes = [8, 16, 4], strides = [1, 1, 1]} : vector<14x16x4xbf16> to vector<8x16x4xbf16>
    %103 = vector.shape_cast %102 : vector<8x16x4xbf16> to vector<128x4xbf16>
    %104 = vector.extract_strided_slice %87 {offsets = [6, 0, 0], sizes = [8, 16, 4], strides = [1, 1, 1]} : vector<14x16x4xbf16> to vector<8x16x4xbf16>
    %105 = vector.shape_cast %104 : vector<8x16x4xbf16> to vector<128x4xbf16>
    %106 = tpu.concatenate %89, %91, %93, %95, %97, %99, %101, %103, %105 in 1 : vector<128x4xbf16>, vector<128x4xbf16>, vector<128x4xbf16>, vector<128x4xbf16>, vector<128x4xbf16>, vector<128x4xbf16>, vector<128x4xbf16>, vector<128x4xbf16>, vector<128x4xbf16> -> vector<128x36xbf16>
    %c2_31 = arith.constant 2 : index
    %c0_32 = arith.constant 0 : index
    %c0_33 = arith.constant 0 : index
    %107 = vector.load %arg4[%c2_31, %c0_32, %c0_33] : memref<3x36x256xbf16, #tpu.memory_space<vmem>>, vector<1x36x256xbf16>
    %108 = vector.shape_cast %107 : vector<1x36x256xbf16> to vector<36x256xbf16>
    %cst_34 = arith.constant dense<0.000000e+00> : vector<128x256xf32>
    %109 = tpu.matmul %106, %108, %cst_34 {dimension_numbers = #tpu.dot_dimension_numbers<[1], [0], [0], [1], [0, 0, 1, 1], [], []>} : vector<128x36xbf16>, vector<36x256xbf16>, vector<128x256xf32> -> vector<128x256xf32>
    %c3 = arith.constant 3 : index
    %c0_35 = arith.constant 0 : index
    %110 = vector.load %arg5[%c3, %c0_35] : memref<4x256xf32, #tpu.memory_space<vmem>>, vector<1x256xf32>
    %111 = vector.broadcast %110 : vector<1x256xf32> to vector<128x256xf32>
    %112 = arith.addf %109, %111 : vector<128x256xf32>
    %cst_36 = arith.constant 0.000000e+00 : f32
    %113 = vector.broadcast %cst_36 : f32 to vector<128x256xf32>
    %114 = arith.maximumf %112, %113 : vector<128x256xf32>
    %115 = arith.truncf %114 : vector<128x256xf32> to vector<128x256xbf16>
    %c3_37 = arith.constant 3 : index
    %c0_38 = arith.constant 0 : index
    %c0_39 = arith.constant 0 : index
    %116 = vector.load %arg6[%c3_37, %c0_38, %c0_39] : memref<4x256x256xbf16, #tpu.memory_space<vmem>>, vector<1x256x256xbf16>
    %117 = vector.shape_cast %116 : vector<1x256x256xbf16> to vector<256x256xbf16>
    %cst_40 = arith.constant dense<0.000000e+00> : vector<128x256xf32>
    %118 = tpu.matmul %115, %117, %cst_40 {dimension_numbers = #tpu.dot_dimension_numbers<[1], [0], [0], [1], [0, 0, 1, 1], [], []>} : vector<128x256xbf16>, vector<256x256xbf16>, vector<128x256xf32> -> vector<128x256xf32>
    %119 = arith.addf %85, %118 : vector<128x256xf32>
    %c0_41 = arith.constant 0 : index
    %c0_42 = arith.constant 0 : index
    %c0_43 = arith.constant 0 : index
    %120 = vector.load %arg7[%c0_41, %c0_42, %c0_43] : memref<1x1x256xf32, #tpu.memory_space<vmem>>, vector<1x1x256xf32>
    %121 = vector.shape_cast %120 : vector<1x1x256xf32> to vector<1x256xf32>
    %122 = vector.broadcast %121 : vector<1x256xf32> to vector<128x256xf32>
    %123 = arith.addf %119, %122 : vector<128x256xf32>
    %cst_44 = arith.constant 0.000000e+00 : f32
    %124 = vector.broadcast %cst_44 : f32 to vector<128x256xf32>
    %125 = arith.maximumf %123, %124 : vector<128x256xf32>
    %c0_45 = arith.constant 0 : index
    %c0_46 = arith.constant 0 : index
    %c0_47 = arith.constant 0 : index
    %126 = vector.load %arg8[%c0_45, %c0_46, %c0_47] : memref<1x128x256xf32, #tpu.memory_space<vmem>>, vector<1x128x256xf32>
    %127 = vector.shape_cast %126 : vector<1x128x256xf32> to vector<128x256xf32>
    %128 = vector.shape_cast %125 : vector<128x256xf32> to vector<1x128x256xf32>
    tpu.vector_store %arg8[%c0_45, %c0_46, %c0_47], %128 {strides = array<i32>} : memref<1x128x256xf32, #tpu.memory_space<vmem>>, vector<1x128x256xf32>,
    return
  }
  func.func @transform_0(%arg0: i32, %arg1: i32) -> (i32, i32, i32, i32) {
    %c0_i32 = arith.constant 0 : i32
    %c0_i32_0 = arith.constant 0 : i32
    %c0_i32_1 = arith.constant 0 : i32
    %c0_i32_2 = arith.constant 0 : i32
    return %arg0, %c0_i32, %c0_i32_0, %c0_i32_1 : i32, i32, i32, i32
  }
  func.func @transform_1(%arg0: i32, %arg1: i32) -> (i32, i32) {
    %c0_i32 = arith.constant 0 : i32
    %c0_i32_0 = arith.constant 0 : i32
    %c0_i32_1 = arith.constant 0 : i32
    return %c0_i32, %c0_i32_0 : i32, i32
  }
  func.func @transform_2(%arg0: i32, %arg1: i32) -> (i32, i32, i32) {
    %c0_i32 = arith.constant 0 : i32
    %c0_i32_0 = arith.constant 0 : i32
    %c0_i32_1 = arith.constant 0 : i32
    %c0_i32_2 = arith.constant 0 : i32
    return %c0_i32, %c0_i32_0, %c0_i32_1 : i32, i32, i32
  }
  func.func @transform_3(%arg0: i32, %arg1: i32) -> (i32, i32) {
    %c0_i32 = arith.constant 0 : i32
    %c0_i32_0 = arith.constant 0 : i32
    %c0_i32_1 = arith.constant 0 : i32
    return %c0_i32, %c0_i32_0 : i32, i32
  }
  func.func @transform_4(%arg0: i32, %arg1: i32) -> (i32, i32, i32) {
    %c0_i32 = arith.constant 0 : i32
    %c0_i32_0 = arith.constant 0 : i32
    %c0_i32_1 = arith.constant 0 : i32
    %c0_i32_2 = arith.constant 0 : i32
    return %c0_i32, %c0_i32_0, %c0_i32_1 : i32, i32, i32
  }
  func.func @transform_5(%arg0: i32, %arg1: i32) -> (i32, i32, i32) {
    %c0_i32 = arith.constant 0 : i32
    %c0_i32_0 = arith.constant 0 : i32
    %c0_i32_1 = arith.constant 0 : i32
    return %arg0, %c0_i32, %c0_i32_0 : i32, i32, i32
  }
  func.func @transform_6(%arg0: i32, %arg1: i32) -> (i32, i32, i32) {
    %c0_i32 = arith.constant 0 : i32
    %c0_i32_0 = arith.constant 0 : i32
    return %arg0, %arg1, %c0_i32 : i32, i32, i32
  }
}

</mosaic_0001>

<llo_original>
// kernel: aspp_forward.1
$region0: #{aspp_forward.1}
  #allocation0 [shape = 'u32[]', space=smem, size = 0x4, offset = 0x4, fixed_abs, tag = 'smem constant byte address 0x4 - core index']
  #allocation1 [shape = 'u32[72,128]{1,0:T(1,128)}', space=vmem, size = 0x9000, scoped, tag = 'internal scratch']
  %s0 = inlined_call_operand.vmem [shape: bf16[2,22,22,4], index: 0, kind: input, shape index: {}]
  %s1 = inlined_call_operand.vmem [shape: bf16[4,256], index: 1, kind: input, shape index: {}]
  %s2 = inlined_call_operand.vmem [shape: bf16[3,36,256], index: 2, kind: input, shape index: {}]
  %s3 = inlined_call_operand.vmem [shape: f32[4,256], index: 3, kind: input, shape index: {}]
  %s4 = inlined_call_operand.vmem [shape: bf16[4,256,256], index: 4, kind: input, shape index: {}]
  %s5 = inlined_call_operand.vmem [shape: f32[2,1,256], index: 5, kind: input, shape index: {}]
  %s6 = inlined_call_operand.hbm [shape: f32[2,256,256], index: 6, kind: output, shape index: {}]
  %s7 = sld [smem:[#allocation0]]
  $region57: #{aspp_forward.1} parent=0
    _
  %s9 = ssub.s32 1, %s7
  %s10 = scalar_select 0, %s9, %s7
  $region1: #{aspp_forward.1} parent=0
    #allocation2 [shape = 'u8[262144]{0}', space=vmem, size = 0x40000, scoped, tag = 'output window, operand 0']
    #allocation3 [shape = 's32[2]{0}', space=sflag, size = 0x8, scoped, tag = 'scoped memory for aspp_forward.1']
    %11 = vsyncpa [#allocation3], 0
    %s12 = scalar_lea.sflag [#allocation3], 1
    %13 = vsyncpa %s12, 0
    loop: start=0, step=1, limit=6
    $region2: #{aspp_forward.1} parent=1 // loop_pre_header
      _
    $region3: #{aspp_forward.1} parent=1 // loop_header
      %s15 = sphi 0, %s19
      %p16 = scmp.ge.s32.totalorder %s15, 6
      %s22 = sphi 0, %s34
      %s23 = sphi 0, %s30
      %s24 = sphi 0, %s22
      %s25 = sphi 0, %s23
      %s26 = sphi 0, %s24
      %s27 = sphi 0, %s25
      %s37 = sphi 0, %s39
      %s40 = sphi 0, %s37
      %s41 = sphi 0, %s40
      %s57 = sphi 0, %s41
      %s61 = sphi 0, %s61
      %s63 = sphi 0, %s61
      %s64 = sphi 0, %s63
      %s78 = sphi 0, %s64
      %s82 = sphi 0, %s82
      %s84 = sphi 0, %s82
      %s85 = sphi 0, %s84
      %s99 = sphi 0, %s85
      %s103 = sphi 0, %s103
      %s105 = sphi 0, %s103
      %s106 = sphi 0, %s105
      %s120 = sphi 0, %s106
      %s124 = sphi 0, %s124
      %s126 = sphi 0, %s124
      %s127 = sphi 0, %s126
      %s141 = sphi 0, %s127
      %s147 = sphi 0, %s149
      %s150 = sphi 0, %s147
      %s151 = sphi 0, %s150
      %s167 = sphi 0, %s151
      %s175 = sphi 0, %s177
      %s178 = sphi 0, %s175
      %s179 = sphi 0, %s178
      %s195 = sphi 0, %s179
    $region4: #{aspp_forward.1} parent=1 // loop_header_branch
      %18 = sbr.rel (%p16) target = $region8
    $region5: #{aspp_forward.1} parent=1 // loop_body
      %s20 = ssub.s32 %s15, 1
      %s21 = ssub.s32 %s15, 2
      %s28 = sadd.s32 1, %s23
      %p29 = scmp.ge.s32.totalorder %s28, 2
      %s30 = scalar_select %p29, 0, %s28
      %s31 = sadd.s32 1, %s22
      %s32 = scalar_select %p29, %s31, %s22
      %p33 = scmp.ge.s32.totalorder %s32, 2
      %s34 = scalar_select %p33, 0, %s32
      %s35 = ssub.s32 %s22, %s34
      %p36 = scmp.eq.s32.totalorder %s35, 0
      %s38 = sadd.s32 %s37, 1
      %s39 = scalar_select %p36, %s37, %s38
      %p42 = pneg %p36
      %p43 = scmp.eq.s32.totalorder %s15, 3
      %p44 = por %p42, %p43
      %p45 = scmp.ne.s32.totalorder %s37, %s40
      %p46 = scmp.eq.s32.totalorder %s15, 0
      %p47 = por %p45, %p46
      %p48 = scmp.ne.s32.totalorder %s37, %s40
      %p49 = scmp.eq.s32.totalorder %s20, 3
      %p50 = por %p48, %p49
      %p51 = scmp.ne.s32.totalorder %s40, %s41
      %p52 = scmp.eq.s32.totalorder %s20, 0
      %p53 = por %p51, %p52
      %p54 = scmp.ne.s32.totalorder %s40, %s41
      %p55 = scmp.eq.s32.totalorder %s21, 3
      %p56 = por %p54, %p55
      %p58 = scmp.ne.s32.totalorder %s41, %s57
      %p59 = scmp.eq.s32.totalorder %s21, 0
      %p60 = por %p58, %p59
      %s62 = sadd.s32 %s61, 1
      %p65 = scmp.eq.s32.totalorder %s15, 3
      %p66 = scmp.ne.s32.totalorder %s61, %s63
      %p67 = scmp.eq.s32.totalorder %s15, 0
      %p68 = por %p66, %p67
      %p69 = scmp.ne.s32.totalorder %s61, %s63
      %p70 = scmp.eq.s32.totalorder %s20, 3
      %p71 = por %p69, %p70
      %p72 = scmp.ne.s32.totalorder %s63, %s64
      %p73 = scmp.eq.s32.totalorder %s20, 0
      %p74 = por %p72, %p73
      %p75 = scmp.ne.s32.totalorder %s63, %s64
      %p76 = scmp.eq.s32.totalorder %s21, 3
      %p77 = por %p75, %p76
      %p79 = scmp.ne.s32.totalorder %s64, %s78
      %p80 = scmp.eq.s32.totalorder %s21, 0
      %p81 = por %p79, %p80
      %s83 = sadd.s32 %s82, 1
      %p86 = scmp.eq.s32.totalorder %s15, 3
      %p87 = scmp.ne.s32.totalorder %s82, %s84
      %p88 = scmp.eq.s32.totalorder %s15, 0
      %p89 = por %p87, %p88
      %p90 = scmp.ne.s32.totalorder %s82, %s84
      %p91 = scmp.eq.s32.totalorder %s20, 3
      %p92 = por %p90, %p91
      %p93 = scmp.ne.s32.totalorder %s84, %s85
      %p94 = scmp.eq.s32.totalorder %s20, 0
      %p95 = por %p93, %p94
      %p96 = scmp.ne.s32.totalorder %s84, %s85
      %p97 = scmp.eq.s32.totalorder %s21, 3
      %p98 = por %p96, %p97
      %p100 = scmp.ne.s32.totalorder %s85, %s99
      %p101 = scmp.eq.s32.totalorder %s21, 0
      %p102 = por %p100, %p101
      %s104 = sadd.s32 %s103, 1
      %p107 = scmp.eq.s32.totalorder %s15, 3
      %p108 = scmp.ne.s32.totalorder %s103, %s105
      %p109 = scmp.eq.s32.totalorder %s15, 0
      %p110 = por %p108, %p109
      %p111 = scmp.ne.s32.totalorder %s103, %s105
      %p112 = scmp.eq.s32.totalorder %s20, 3
      %p113 = por %p111, %p112
      %p114 = scmp.ne.s32.totalorder %s105, %s106
      %p115 = scmp.eq.s32.totalorder %s20, 0
      %p116 = por %p114, %p115
      %p117 = scmp.ne.s32.totalorder %s105, %s106
      %p118 = scmp.eq.s32.totalorder %s21, 3
      %p119 = por %p117, %p118
      %p121 = scmp.ne.s32.totalorder %s106, %s120
      %p122 = scmp.eq.s32.totalorder %s21, 0
      %p123 = por %p121, %p122
      %s125 = sadd.s32 %s124, 1
      %p128 = scmp.eq.s32.totalorder %s15, 3
      %p129 = scmp.ne.s32.totalorder %s124, %s126
      %p130 = scmp.eq.s32.totalorder %s15, 0
      %p131 = por %p129, %p130
      %p132 = scmp.ne.s32.totalorder %s124, %s126
      %p133 = scmp.eq.s32.totalorder %s20, 3
      %p134 = por %p132, %p133
      %p135 = scmp.ne.s32.totalorder %s126, %s127
      %p136 = scmp.eq.s32.totalorder %s20, 0
      %p137 = por %p135, %p136
      %p138 = scmp.ne.s32.totalorder %s126, %s127
      %p139 = scmp.eq.s32.totalorder %s21, 3
      %p140 = por %p138, %p139
      %p142 = scmp.ne.s32.totalorder %s127, %s141
      %p143 = scmp.eq.s32.totalorder %s21, 0
      %p144 = por %p142, %p143
      %s145 = ssub.s32 %s22, %s34
      %p146 = scmp.eq.s32.totalorder %s145, 0
      %s148 = sadd.s32 %s147, 1
      %s149 = scalar_select %p146, %s147, %s148
      %p152 = pneg %p146
      %p153 = scmp.eq.s32.totalorder %s15, 3
      %p154 = por %p152, %p153
      %p155 = scmp.ne.s32.totalorder %s147, %s150
      %p156 = scmp.eq.s32.totalorder %s15, 0
      %p157 = por %p155, %p156
      %p158 = scmp.ne.s32.totalorder %s147, %s150
      %p159 = scmp.eq.s32.totalorder %s20, 3
      %p160 = por %p158, %p159
      %p161 = scmp.ne.s32.totalorder %s150, %s151
      %p162 = scmp.eq.s32.totalorder %s20, 0
      %p163 = por %p161, %p162
      %p164 = scmp.ne.s32.totalorder %s150, %s151
      %p165 = scmp.eq.s32.totalorder %s21, 3
      %p166 = por %p164, %p165
      %p168 = scmp.ne.s32.totalorder %s151, %s167
      %p169 = scmp.eq.s32.totalorder %s21, 0
      %p170 = por %p168, %p169
      %s171 = ssub.s32 %s22, %s34
      %s172 = ssub.s32 %s23, %s30
      %s173 = sor.u32 %s171, %s172
      %p174 = scmp.eq.s32.totalorder %s173, 0
      %s176 = sadd.s32 %s175, 1
      %s177 = scalar_select %p174, %s175, %s176
      %p180 = pneg %p174
      %p181 = scmp.eq.s32.totalorder %s15, 3
      %p182 = por %p180, %p181
      %p183 = scmp.ne.s32.totalorder %s175, %s178
      %p184 = scmp.eq.s32.totalorder %s15, 0
      %p185 = por %p183, %p184
      %p186 = scmp.ne.s32.totalorder %s175, %s178
      %p187 = scmp.eq.s32.totalorder %s20, 3
      %p188 = por %p186, %p187
      %p189 = scmp.ne.s32.totalorder %s178, %s179
      %p190 = scmp.eq.s32.totalorder %s20, 0
      %p191 = por %p189, %p190
      %p192 = scmp.ne.s32.totalorder %s178, %s179
      %p193 = scmp.eq.s32.totalorder %s21, 3
      %p194 = por %p192, %p193
      %p196 = scmp.ne.s32.totalorder %s179, %s195
      %p197 = scmp.eq.s32.totalorder %s21, 0
      %p198 = por %p196, %p197
      %p199 = scmp.le.s32.totalorder 1, %s15
      %p200 = scmp.lt.s32.totalorder %s15, 5
      %p201 = pnand %p199, %p200
      %p202 = pneg %p201
      // Predicated region
      $region9: #{aspp_forward.1} parent=5 // pred_check
        _
      $region10: #{aspp_forward.1} parent=5 // pred_check_branch
        %204 = sbr.rel (%p201) target = $region12
      $region11: #{aspp_forward.1} parent=5 // pred_region
        %s205 = ssub.s32 %s15, 1
        // Predicated region
        $region13: #{aspp_forward.1} parent=11 // pred_check
          %p206 = pneg %p74
        $region14: #{aspp_forward.1} parent=11 // pred_check_branch
          %208 = sbr.rel (%p206) target = $region16
        $region15: #{aspp_forward.1} parent=11 // pred_region
          _
        $region16: #{aspp_forward.1} parent=11 // pred_fallthru
          _
        // Predicated region
        $region17: #{aspp_forward.1} parent=11 // pred_check
          %p209 = pneg %p95
        $region18: #{aspp_forward.1} parent=11 // pred_check_branch
          %211 = sbr.rel (%p209) target = $region20
        $region19: #{aspp_forward.1} parent=11 // pred_region
          _
        $region20: #{aspp_forward.1} parent=11 // pred_fallthru
          _
        // Predicated region
        $region21: #{aspp_forward.1} parent=11 // pred_check
          %p212 = pneg %p116
        $region22: #{aspp_forward.1} parent=11 // pred_check_branch
          %214 = sbr.rel (%p212) target = $region24
        $region23: #{aspp_forward.1} parent=11 // pred_region
          _
        $region24: #{aspp_forward.1} parent=11 // pred_fallthru
          _
        // Predicated region
        $region25: #{aspp_forward.1} parent=11 // pred_check
          %p215 = pneg %p137
        $region26: #{aspp_forward.1} parent=11 // pred_check_branch
          %217 = sbr.rel (%p215) target = $region28
        $region27: #{aspp_forward.1} parent=11 // pred_region
          _
        $region28: #{aspp_forward.1} parent=11 // pred_fallthru
          _
      $region12: #{aspp_forward.1} parent=5 // pred_fallthru
        _
      %p218 = scmp.lt.s32.totalorder %s15, 4
      // Predicated region
      $region29: #{aspp_forward.1} parent=5 // pred_check
        %p219 = pneg %p218
      $region30: #{aspp_forward.1} parent=5 // pred_check_branch
        %221 = sbr.rel (%p219) target = $region32
      $region31: #{aspp_forward.1} parent=5 // pred_region
        // Predicated region
        $region33: #{aspp_forward.1} parent=31 // pred_check
          %p222 = pneg %p47
        $region34: #{aspp_forward.1} parent=31 // pred_check_branch
          %224 = sbr.rel (%p222) target = $region36
        $region35: #{aspp_forward.1} parent=31 // pred_region
          %p225 = scmp.lt.s32.totalorder %s22, 1
          %s226 = scalar_select %p225, %s22, 1
          %s227 = smul.addr %s226, 66
          %s228 = smul.addr %s227, 4
          %s229 = scalar_lea.vmem %s0, %s228
        $region36: #{aspp_forward.1} parent=31 // pred_fallthru
          _
        // Predicated region
        $region37: #{aspp_forward.1} parent=31 // pred_check
          %p230 = pneg %p157
        $region38: #{aspp_forward.1} parent=31 // pred_check_branch
          %232 = sbr.rel (%p230) target = $region40
        $region39: #{aspp_forward.1} parent=31 // pred_region
          %p233 = scmp.lt.s32.totalorder %s22, 1
          %s234 = scalar_select %p233, %s22, 1
          %s235 = smul.addr %s234, 2
          %s236 = scalar_lea.vmem %s5, %s235
        $region40: #{aspp_forward.1} parent=31 // pred_fallthru
          _
      $region32: #{aspp_forward.1} parent=5 // pred_fallthru
        _
      %p237 = scmp.le.s32.totalorder 1, %s15
      %p238 = scmp.lt.s32.totalorder %s15, 5
      %p239 = pnand %p237, %p238
      %p240 = pneg %p239
      // Predicated region
      $region41: #{aspp_forward.1} parent=5 // pred_check
        _
      $region42: #{aspp_forward.1} parent=5 // pred_check_branch
        %242 = sbr.rel (%p239) target = $region44
      $region43: #{aspp_forward.1} parent=5 // pred_region
        %s243 = ssub.s32 %s15, 1
        %p244 = scmp.lt.s32.totalorder %s24, 1
        %s245 = scalar_select %p244, %s24, 1
        %s246 = smul.addr %s245, 66
        %s247 = smul.addr %s246, 4
        %s248 = scalar_lea.vmem %s0, %s247
        %p249 = pneg %p53
        %p250 = pneg %p50
        %p251 = pneg %p74
        %p252 = pneg %p71
        %p253 = pneg %p95
        %p254 = pneg %p92
        %p255 = pneg %p116
        %p256 = pneg %p113
        %p257 = pneg %p137
        %p258 = pneg %p134
        %p259 = scmp.lt.s32.totalorder %s24, 1
        %s260 = scalar_select %p259, %s24, 1
        %s261 = smul.addr %s260, 2
        %s262 = scalar_lea.vmem %s5, %s261
        %p263 = pneg %p163
        %p264 = pneg %p160
        %p265 = pneg %p191
        %p266 = pneg %p188
        %s267 = sand.u32 %s178, 1
        %s268 = scalar_lea.sflag [#allocation3], %s267
        %s269 = sand.u32 %s178, 1
        %s270 = smul.addr %s269, 256
        %s271 = scalar_lea.vmem [#allocation2], %s270
        %p272 = scmp.lt.s32.totalorder %s24, 1
        %s273 = scalar_select %p272, %s24, 1
        %s274 = smul.addr %s273, 66
        %s275 = smul.addr %s274, 4
        %s276 = scalar_lea.vmem %s0, %s275
        %p277 = scmp.lt.s32.totalorder %s24, 1
        %s278 = scalar_select %p277, %s24, 1
        %s279 = smul.addr %s278, 2
        %s280 = scalar_lea.vmem %s5, %s279
        %s281 = smul.u32 16, %s25
        %s283 = smul.u32 %s25, 8
        %s284 = smul.u32 %s283, 3
        %s285 = smul.addr %s284, 4
        %s286 = scalar_lea.vmem %s276, %s285
        %v287 = vld [vmem:[%s286] sm:$0xf]
        %v288 = vld [vmem:[%s286 + $0x4] sm:$0xf]
        %v289 = vld [vmem:[%s286 + $0x8] sm:$0x7]
        %v290 = vld [vmem:[%s286 + $0xc] sm:$0xf]
        %v291 = vld [vmem:[%s286 + $0x10] sm:$0xf]
        %v292 = vld [vmem:[%s286 + $0x14] sm:$0x7]
        %v293 = vld [vmem:[%s286 + $0x18] sm:$0xf]
        %v294 = vld [vmem:[%s286 + $0x1c] sm:$0xf]
        %v295 = vld [vmem:[%s286 + $0x20] sm:$0x7]
        %v296 = vld [vmem:[%s286 + $0x24] sm:$0xf]
        %v297 = vld [vmem:[%s286 + $0x28] sm:$0xf]
        %v298 = vld [vmem:[%s286 + $0x2c] sm:$0x7]
        %v299 = vld [vmem:[%s286 + $0x30] sm:$0xf]
        %v300 = vld [vmem:[%s286 + $0x34] sm:$0xf]
        %v301 = vld [vmem:[%s286 + $0x38] sm:$0x7]
        %v302 = vld [vmem:[%s286 + $0x3c] sm:$0xf]
        %v303 = vld [vmem:[%s286 + $0x40] sm:$0xf]
        %v304 = vld [vmem:[%s286 + $0x44] sm:$0x7]
        %v305 = vld [vmem:[%s286 + $0x48] sm:$0xf]
        %v306 = vld [vmem:[%s286 + $0x4c] sm:$0xf]
        %v307 = vld [vmem:[%s286 + $0x50] sm:$0x7]
        %v308 = vld [vmem:[%s286 + $0x54] sm:$0xf]
        %v309 = vld [vmem:[%s286 + $0x58] sm:$0xf]
        %v310 = vld [vmem:[%s286 + $0x5c] sm:$0x7]
        %v311 = vld [vmem:[%s286 + $0x60] sm:$0xf]
        %v312 = vld [vmem:[%s286 + $0x64] sm:$0xf]
        %v313 = vld [vmem:[%s286 + $0x68] sm:$0x7]
        %v314 = vld [vmem:[%s286 + $0x6c] sm:$0xf]
        %v315 = vld [vmem:[%s286 + $0x70] sm:$0xf]
        %v316 = vld [vmem:[%s286 + $0x74] sm:$0x7]
        %v317 = vld [vmem:[%s286 + $0x78] sm:$0xf]
        %v318 = vld [vmem:[%s286 + $0x7c] sm:$0xf]
        %v319 = vld [vmem:[%s286 + $0x80] sm:$0x7]
        %v320 = vld [vmem:[%s286 + $0x84] sm:$0xf]
        %v321 = vld [vmem:[%s286 + $0x88] sm:$0xf]
        %v322 = vld [vmem:[%s286 + $0x8c] sm:$0x7]
        %v323 = vld [vmem:[%s286 + $0x90] sm:$0xf]
        %v324 = vld [vmem:[%s286 + $0x94] sm:$0xf]
        %v325 = vld [vmem:[%s286 + $0x98] sm:$0x7]
        %v326 = vld [vmem:[%s286 + $0x9c] sm:$0xf]
        %v327 = vld [vmem:[%s286 + $0xa0] sm:$0xf]
        %v328 = vld [vmem:[%s286 + $0xa4] sm:$0x7]
        %vm329 = vsmask.f32 2304
        %vm330 = vsmask.f32 6416
        %vm331 = vmor %vm329, %vm330
        %v333 = vshrl.u32 %v296, 16
        %v335 = vrot.slane %v333, 5
        %v336 = vshll.u32 %v296, 16
        %v338 = vrot.slane %v336, 6
        %v339 = vor.u32 %v335, %v338
        %v340 = vrot.slane %v339, 4
        %v342 = vshrl.u32 %v297, 16
        %v344 = vrot.slane %v342, 5
        %v345 = vshll.u32 %v297, 16
        %v347 = vrot.slane %v345, 6
        %v348 = vor.u32 %v344, %v347
        %v349 = vsel %vm331, %v340, %v348
        %v350 = vrot.slane %v348, 4
        %v352 = vshrl.u32 %v298, 16
        %v354 = vrot.slane %v352, 5
        %v355 = vshll.u32 %v298, 16
        %v357 = vrot.slane %v355, 6
        %v358 = vor.u32 %v354, %v357
        %v359 = vsel %vm331, %v350, %v358
        %v361 = vshrl.u32 %v299, 16
        %v363 = vrot.slane %v361, 5
        %v364 = vshll.u32 %v299, 16
        %v366 = vrot.slane %v364, 6
        %v367 = vor.u32 %v363, %v366
        %v368 = vrot.slane %v367, 4
        %v370 = vshrl.u32 %v300, 16
        %v372 = vrot.slane %v370, 5
        %v373 = vshll.u32 %v300, 16
        %v375 = vrot.slane %v373, 6
        %v376 = vor.u32 %v372, %v375
        %v377 = vsel %vm331, %v368, %v376
        %v378 = vrot.slane %v376, 4
        %v380 = vshrl.u32 %v301, 16
        %v382 = vrot.slane %v380, 5
        %v383 = vshll.u32 %v301, 16
        %v385 = vrot.slane %v383, 6
        %v386 = vor.u32 %v382, %v385
        %v387 = vsel %vm331, %v378, %v386
        %v389 = vshrl.u32 %v302, 16
        %v391 = vrot.slane %v389, 5
        %v392 = vshll.u32 %v302, 16
        %v394 = vrot.slane %v392, 6
        %v395 = vor.u32 %v391, %v394
        %v396 = vrot.slane %v395, 4
        %v398 = vshrl.u32 %v303, 16
        %v400 = vrot.slane %v398, 5
        %v401 = vshll.u32 %v303, 16
        %v403 = vrot.slane %v401, 6
        %v404 = vor.u32 %v400, %v403
        %v405 = vsel %vm331, %v396, %v404
        %v406 = vrot.slane %v404, 4
        %v408 = vshrl.u32 %v304, 16
        %v410 = vrot.slane %v408, 5
        %v411 = vshll.u32 %v304, 16
        %v413 = vrot.slane %v411, 6
        %v414 = vor.u32 %v410, %v413
        %v415 = vsel %vm331, %v406, %v414
        %v417 = vshrl.u32 %v305, 16
        %v419 = vrot.slane %v417, 5
        %v420 = vshll.u32 %v305, 16
        %v422 = vrot.slane %v420, 6
        %v423 = vor.u32 %v419, %v422
        %v424 = vrot.slane %v423, 4
        %v426 = vshrl.u32 %v306, 16
        %v428 = vrot.slane %v426, 5
        %v429 = vshll.u32 %v306, 16
        %v431 = vrot.slane %v429, 6
        %v432 = vor.u32 %v428, %v431
        %v433 = vsel %vm331, %v424, %v432
        %v434 = vrot.slane %v432, 4
        %v436 = vshrl.u32 %v307, 16
        %v438 = vrot.slane %v436, 5
        %v439 = vshll.u32 %v307, 16
        %v441 = vrot.slane %v439, 6
        %v442 = vor.u32 %v438, %v441
        %v443 = vsel %vm331, %v434, %v442
        %v445 = vshrl.u32 %v308, 16
        %v447 = vrot.slane %v445, 5
        %v448 = vshll.u32 %v308, 16
        %v450 = vrot.slane %v448, 6
        %v451 = vor.u32 %v447, %v450
        %v452 = vrot.slane %v451, 4
        %v454 = vshrl.u32 %v309, 16
        %v456 = vrot.slane %v454, 5
        %v457 = vshll.u32 %v309, 16
        %v459 = vrot.slane %v457, 6
        %v460 = vor.u32 %v456, %v459
        %v461 = vsel %vm331, %v452, %v460
        %v462 = vrot.slane %v460, 4
        %v464 = vshrl.u32 %v310, 16
        %v466 = vrot.slane %v464, 5
        %v467 = vshll.u32 %v310, 16
        %v469 = vrot.slane %v467, 6
        %v470 = vor.u32 %v466, %v469
        %v471 = vsel %vm331, %v462, %v470
        %v473 = vshrl.u32 %v311, 16
        %v475 = vrot.slane %v473, 5
        %v476 = vshll.u32 %v311, 16
        %v478 = vrot.slane %v476, 6
        %v479 = vor.u32 %v475, %v478
        %v480 = vrot.slane %v479, 4
        %v482 = vshrl.u32 %v312, 16
        %v484 = vrot.slane %v482, 5
        %v485 = vshll.u32 %v312, 16
        %v487 = vrot.slane %v485, 6
        %v488 = vor.u32 %v484, %v487
        %v489 = vsel %vm331, %v480, %v488
        %v490 = vrot.slane %v488, 4
        %v492 = vshrl.u32 %v313, 16
        %v494 = vrot.slane %v492, 5
        %v495 = vshll.u32 %v313, 16
        %v497 = vrot.slane %v495, 6
        %v498 = vor.u32 %v494, %v497
        %v499 = vsel %vm331, %v490, %v498
        %v501 = vshrl.u32 %v314, 16
        %v503 = vrot.slane %v501, 5
        %v504 = vshll.u32 %v314, 16
        %v506 = vrot.slane %v504, 6
        %v507 = vor.u32 %v503, %v506
        %v508 = vrot.slane %v507, 4
        %v510 = vshrl.u32 %v315, 16
        %v512 = vrot.slane %v510, 5
        %v513 = vshll.u32 %v315, 16
        %v515 = vrot.slane %v513, 6
        %v516 = vor.u32 %v512, %v515
        %v517 = vsel %vm331, %v508, %v516
        %v518 = vrot.slane %v516, 4
        %v520 = vshrl.u32 %v316, 16
        %v522 = vrot.slane %v520, 5
        %v523 = vshll.u32 %v316, 16
        %v525 = vrot.slane %v523, 6
        %v526 = vor.u32 %v522, %v525
        %v527 = vsel %vm331, %v518, %v526
        %v529 = vshrl.u32 %v317, 16
        %v531 = vrot.slane %v529, 5
        %v532 = vshll.u32 %v317, 16
        %v534 = vrot.slane %v532, 6
        %v535 = vor.u32 %v531, %v534
        %v536 = vrot.slane %v535, 4
        %v538 = vshrl.u32 %v318, 16
        %v540 = vrot.slane %v538, 5
        %v541 = vshll.u32 %v318, 16
        %v543 = vrot.slane %v541, 6
        %v544 = vor.u32 %v540, %v543
        %v545 = vsel %vm331, %v536, %v544
        %v546 = vrot.slane %v544, 4
        %v548 = vshrl.u32 %v319, 16
        %v550 = vrot.slane %v548, 5
        %v551 = vshll.u32 %v319, 16
        %v553 = vrot.slane %v551, 6
        %v554 = vor.u32 %v550, %v553
        %v555 = vsel %vm331, %v546, %v554
        %v556 = vld [vmem:[%s1] sm:$0xf]
        %v557 = vld [vmem:[%s3] ss:$4 sm:$0x3]
        %v559 = vperm.slane %v557, 0
        %v560 = vperm.slane %v557, 1
        %v563 = vunpack.c.l.b16 %v349
        %v564 = vunpack.c.l.b16 %v359
        %v565 = vunpack.c.l.b16 %v377
        %v566 = vunpack.c.l.b16 %v387
        %v567 = vunpack.c.l.b16 %v405
        %v568 = vunpack.c.l.b16 %v415
        %v569 = vunpack.c.l.b16 %v433
        %v570 = vunpack.c.l.b16 %v443
        %v571 = vunpack.c.l.b16 %v461
        %v572 = vunpack.c.l.b16 %v471
        %v573 = vunpack.c.l.b16 %v489
        %v574 = vunpack.c.l.b16 %v499
        %v575 = vunpack.c.l.b16 %v517
        %v576 = vunpack.c.l.b16 %v527
        %v577 = vunpack.c.l.b16 %v545
        %v578 = vunpack.c.l.b16 %v555
        %v579 = vpack.c.b16 %v564, %v563
        %v580 = vpack.c.b16 %v566, %v565
        %v581 = vpack.c.b16 %v568, %v567
        %v582 = vpack.c.b16 %v570, %v569
        %v583 = vpack.c.b16 %v572, %v571
        %v584 = vpack.c.b16 %v574, %v573
        %v585 = vpack.c.b16 %v576, %v575
        %v586 = vpack.c.b16 %v578, %v577
        %588 = vst [vmem:[#allocation1] ss:$4 sm:$0xff] %v556
        %v589 = vld.sshfl [vmem:[#allocation1] sm:$0xff pattern:$0x73625140]
        %v590 = vld.sshfl [vmem:[#allocation1 + $0x8] sm:$0xff pattern:$0x73625140]
        %vm591 = vcmask 31744
        %v593 = vsel %vm591, %v579, 0
        %v596 = vsel %vm591, %v580, 0
        %v599 = vsel %vm591, %v581, 0
        %v602 = vsel %vm591, %v582, 0
        %v605 = vsel %vm591, %v583, 0
        %v608 = vsel %vm591, %v584, 0
        %v611 = vsel %vm591, %v585, 0
        %v614 = vsel %vm591, %v586, 0
        %vm616 = vcmask 1041408
        %v617 = vsel %vm616, %v589, 0
        %v619 = vsel %vm616, %v590, 0
        %621 = vmatpush.bf16.msra.mxu0 0
        %622 = vmatpush.bf16.msra.mxu0 0
        %623 = vmatpush.bf16.msra.mxu0 0
        %624 = vmatpush.bf16.msra.mxu0 0
        %625 = vmatpush.bf16.msra.mxu0 0
        %626 = vmatpush.bf16.msra.mxu0 0
        %627 = vmatpush.bf16.msra.mxu0 0
        %628 = vmatpush.bf16.msra.mxu0 %v617
        %629 = vmatmul.bf16.gmra.mxu0 %v593
        %v630 = vpop.f32.mrf.mxu0
        %v631 = vadd.f32 %v559, %v630
        %v632 = vpop.f32.mrf.mxu0
        %v633 = vadd.f32 %v559, %v632
        %634 = vmatmul.bf16.gmra.mxu0 %v596
        %v635 = vpop.f32.mrf.mxu0
        %v636 = vadd.f32 %v559, %v635
        %v637 = vpop.f32.mrf.mxu0
        %v638 = vadd.f32 %v559, %v637
        %639 = vmatmul.bf16.gmra.mxu0 %v599
        %v640 = vpop.f32.mrf.mxu0
        %v641 = vadd.f32 %v559, %v640
        %v642 = vpop.f32.mrf.mxu0
        %v643 = vadd.f32 %v559, %v642
        %644 = vmatmul.bf16.gmra.mxu0 %v602
        %v645 = vpop.f32.mrf.mxu0
        %v646 = vadd.f32 %v559, %v645
        %v647 = vpop.f32.mrf.mxu0
        %v648 = vadd.f32 %v559, %v647
        %649 = vmatmul.bf16.gmra.mxu0 %v605
        %v650 = vpop.f32.mrf.mxu0
        %v651 = vadd.f32 %v559, %v650
        %v652 = vpop.f32.mrf.mxu0
        %v653 = vadd.f32 %v559, %v652
        %654 = vmatmul.bf16.gmra.mxu0 %v608
        %v655 = vpop.f32.mrf.mxu0
        %v656 = vadd.f32 %v559, %v655
        %v657 = vpop.f32.mrf.mxu0
        %v658 = vadd.f32 %v559, %v657
        %659 = vmatmul.bf16.gmra.mxu0 %v611
        %v660 = vpop.f32.mrf.mxu0
        %v661 = vadd.f32 %v559, %v660
        %v662 = vpop.f32.mrf.mxu0
        %v663 = vadd.f32 %v559, %v662
        %664 = vmatmul.bf16.gmra.mxu0 %v614
        %v665 = vpop.f32.mrf.mxu0
        %v666 = vadd.f32 %v559, %v665
        %v667 = vpop.f32.mrf.mxu0
        %v668 = vadd.f32 %v559, %v667
        %669 = vdwg.mxu0
        %670 = vmatpush.bf16.msra.mxu0 0
        %671 = vmatpush.bf16.msra.mxu0 0
        %672 = vmatpush.bf16.msra.mxu0 0
        %673 = vmatpush.bf16.msra.mxu0 0
        %674 = vmatpush.bf16.msra.mxu0 0
        %675 = vmatpush.bf16.msra.mxu0 0
        %676 = vmatpush.bf16.msra.mxu0 0
        %677 = vmatpush.bf16.msra.mxu0 %v619
        %678 = vmatmul.bf16.gmra.mxu0 %v593
        %v679 = vpop.f32.mrf.mxu0
        %v680 = vadd.f32 %v560, %v679
        %v681 = vpop.f32.mrf.mxu0
        %v682 = vadd.f32 %v560, %v681
        %683 = vmatmul.bf16.gmra.mxu0 %v596
        %v684 = vpop.f32.mrf.mxu0
        %v685 = vadd.f32 %v560, %v684
        %v686 = vpop.f32.mrf.mxu0
        %v687 = vadd.f32 %v560, %v686
        %688 = vmatmul.bf16.gmra.mxu0 %v599
        %v689 = vpop.f32.mrf.mxu0
        %v690 = vadd.f32 %v560, %v689
        %v691 = vpop.f32.mrf.mxu0
        %v692 = vadd.f32 %v560, %v691
        %693 = vmatmul.bf16.gmra.mxu0 %v602
        %v694 = vpop.f32.mrf.mxu0
        %v695 = vadd.f32 %v560, %v694
        %v696 = vpop.f32.mrf.mxu0
        %v697 = vadd.f32 %v560, %v696
        %698 = vmatmul.bf16.gmra.mxu0 %v605
        %v699 = vpop.f32.mrf.mxu0
        %v700 = vadd.f32 %v560, %v699
        %v701 = vpop.f32.mrf.mxu0
        %v702 = vadd.f32 %v560, %v701
        %703 = vmatmul.bf16.gmra.mxu0 %v608
        %v704 = vpop.f32.mrf.mxu0
        %v705 = vadd.f32 %v560, %v704
        %v706 = vpop.f32.mrf.mxu0
        %v707 = vadd.f32 %v560, %v706
        %708 = vmatmul.bf16.gmra.mxu0 %v611
        %v709 = vpop.f32.mrf.mxu0
        %v710 = vadd.f32 %v560, %v709
        %v711 = vpop.f32.mrf.mxu0
        %v712 = vadd.f32 %v560, %v711
        %713 = vmatmul.bf16.gmra.mxu0 %v614
        %v714 = vpop.f32.mrf.mxu0
        %v715 = vadd.f32 %v560, %v714
        %v716 = vpop.f32.mrf.mxu0
        %v717 = vadd.f32 %v560, %v716
        %718 = vdwg.mxu0
        %v719 = vmax.f32 %v631, 0.0
        %v720 = vmax.f32 %v680, 0.0
        %v721 = vmax.f32 %v633, 0.0
        %v722 = vmax.f32 %v682, 0.0
        %v723 = vmax.f32 %v636, 0.0
        %v724 = vmax.f32 %v685, 0.0
        %v725 = vmax.f32 %v638, 0.0
        %v726 = vmax.f32 %v687, 0.0
        %v727 = vmax.f32 %v641, 0.0
        %v728 = vmax.f32 %v690, 0.0
        %v729 = vmax.f32 %v643, 0.0
        %v730 = vmax.f32 %v692, 0.0
        %v731 = vmax.f32 %v646, 0.0
        %v732 = vmax.f32 %v695, 0.0
        %v733 = vmax.f32 %v648, 0.0
        %v734 = vmax.f32 %v697, 0.0
        %v735 = vmax.f32 %v651, 0.0
        %v736 = vmax.f32 %v700, 0.0
        %v737 = vmax.f32 %v653, 0.0
        %v738 = vmax.f32 %v702, 0.0
        %v739 = vmax.f32 %v656, 0.0
        %v740 = vmax.f32 %v705, 0.0
        %v741 = vmax.f32 %v658, 0.0
        %v742 = vmax.f32 %v707, 0.0
        %v743 = vmax.f32 %v661, 0.0
        %v744 = vmax.f32 %v710, 0.0
        %v745 = vmax.f32 %v663, 0.0
        %v746 = vmax.f32 %v712, 0.0
        %v747 = vmax.f32 %v666, 0.0
        %v748 = vmax.f32 %v715, 0.0
        %v749 = vmax.f32 %v668, 0.0
        %v750 = vmax.f32 %v717, 0.0
        %v751 = vpack.c.bf16 %v721, %v719
        %v752 = vpack.c.bf16 %v722, %v720
        %v753 = vpack.c.bf16 %v725, %v723
        %v754 = vpack.c.bf16 %v726, %v724
        %v755 = vpack.c.bf16 %v729, %v727
        %v756 = vpack.c.bf16 %v730, %v728
        %v757 = vpack.c.bf16 %v733, %v731
        %v758 = vpack.c.bf16 %v734, %v732
        %v759 = vpack.c.bf16 %v737, %v735
        %v760 = vpack.c.bf16 %v738, %v736
        %v761 = vpack.c.bf16 %v741, %v739
        %v762 = vpack.c.bf16 %v742, %v740
        %v763 = vpack.c.bf16 %v745, %v743
        %v764 = vpack.c.bf16 %v746, %v744
        %v765 = vpack.c.bf16 %v749, %v747
        %v766 = vpack.c.bf16 %v750, %v748
        %v767 = vld [vmem:[%s4] sm:$0xff]
        %v768 = vld [vmem:[%s4 + $0x8] sm:$0xff]
        %v769 = vld [vmem:[%s4 + $0x10] sm:$0xff]
        %v770 = vld [vmem:[%s4 + $0x18] sm:$0xff]
        %v771 = vld [vmem:[%s4 + $0x20] sm:$0xff]
        %v772 = vld [vmem:[%s4 + $0x28] sm:$0xff]
        %v773 = vld [vmem:[%s4 + $0x30] sm:$0xff]
        %v774 = vld [vmem:[%s4 + $0x38] sm:$0xff]
        %v775 = vld [vmem:[%s4 + $0x40] sm:$0xff]
        %v776 = vld [vmem:[%s4 + $0x48] sm:$0xff]
        %v777 = vld [vmem:[%s4 + $0x50] sm:$0xff]
        %v778 = vld [vmem:[%s4 + $0x58] sm:$0xff]
        %v779 = vld [vmem:[%s4 + $0x60] sm:$0xff]
        %v780 = vld [vmem:[%s4 + $0x68] sm:$0xff]
        %v781 = vld [vmem:[%s4 + $0x70] sm:$0xff]
        %v782 = vld [vmem:[%s4 + $0x78] sm:$0xff]
        %v783 = vld [vmem:[%s4 + $0x80] sm:$0xff]
        %v784 = vld [vmem:[%s4 + $0x88] sm:$0xff]
        %v785 = vld [vmem:[%s4 + $0x90] sm:$0xff]
        %v786 = vld [vmem:[%s4 + $0x98] sm:$0xff]
        %v787 = vld [vmem:[%s4 + $0xa0] sm:$0xff]
        %v788 = vld [vmem:[%s4 + $0xa8] sm:$0xff]
        %v789 = vld [vmem:[%s4 + $0xb0] sm:$0xff]
        %v790 = vld [vmem:[%s4 + $0xb8] sm:$0xff]
        %v791 = vld [vmem:[%s4 + $0xc0] sm:$0xff]
        %v792 = vld [vmem:[%s4 + $0xc8] sm:$0xff]
        %v793 = vld [vmem:[%s4 + $0xd0] sm:$0xff]
        %v794 = vld [vmem:[%s4 + $0xd8] sm:$0xff]
        %v795 = vld [vmem:[%s4 + $0xe0] sm:$0xff]
        %v796 = vld [vmem:[%s4 + $0xe8] sm:$0xff]
        %v797 = vld [vmem:[%s4 + $0xf0] sm:$0xff]
        %v798 = vld [vmem:[%s4 + $0xf8] sm:$0xff]
        %vm823 = vcmask 1042432
        %vm824 = vcmask 1046532
        %vm825 = vmor %vm823, %vm824
        %v826 = vrot.slane %v293, 5
        %v827 = vrot.slane %v826, 4
        %v828 = vrot.slane %v294, 5
        %v829 = vsel %vm825, %v827, %v828
        %v830 = vrot.slane %v828, 4
        %v831 = vrot.slane %v295, 5
        %v832 = vsel %vm825, %v830, %v831
        %v833 = vrot.slane %v296, 5
        %v834 = vrot.slane %v833, 4
        %v835 = vrot.slane %v297, 5
        %v836 = vsel %vm825, %v834, %v835
        %v837 = vrot.slane %v835, 4
        %v838 = vrot.slane %v298, 5
        %v839 = vsel %vm825, %v837, %v838
        %v840 = vrot.slane %v299, 5
        %v841 = vrot.slane %v840, 4
        %v842 = vrot.slane %v300, 5
        %v843 = vsel %vm825, %v841, %v842
        %v844 = vrot.slane %v842, 4
        %v845 = vrot.slane %v301, 5
        %v846 = vsel %vm825, %v844, %v845
        %v847 = vrot.slane %v302, 5
        %v848 = vrot.slane %v847, 4
        %v849 = vrot.slane %v303, 5
        %v850 = vsel %vm825, %v848, %v849
        %v851 = vrot.slane %v849, 4
        %v852 = vrot.slane %v304, 5
        %v853 = vsel %vm825, %v851, %v852
        %v854 = vrot.slane %v305, 5
        %v855 = vrot.slane %v854, 4
        %v856 = vrot.slane %v306, 5
        %v857 = vsel %vm825, %v855, %v856
        %v858 = vrot.slane %v856, 4
        %v859 = vrot.slane %v307, 5
        %v860 = vsel %vm825, %v858, %v859
        %v861 = vrot.slane %v308, 5
        %v862 = vrot.slane %v861, 4
        %v863 = vrot.slane %v309, 5
        %v864 = vsel %vm825, %v862, %v863
        %v865 = vrot.slane %v863, 4
        %v866 = vrot.slane %v310, 5
        %v867 = vsel %vm825, %v865, %v866
        %v868 = vrot.slane %v311, 5
        %v869 = vrot.slane %v868, 4
        %v870 = vrot.slane %v312, 5
        %v871 = vsel %vm825, %v869, %v870
        %v872 = vrot.slane %v870, 4
        %v873 = vrot.slane %v313, 5
        %v874 = vsel %vm825, %v872, %v873
        %v875 = vrot.slane %v314, 5
        %v876 = vrot.slane %v875, 4
        %v877 = vrot.slane %v315, 5
        %v878 = vsel %vm825, %v876, %v877
        %v879 = vrot.slane %v877, 4
        %v880 = vrot.slane %v316, 5
        %v881 = vsel %vm825, %v879, %v880
        %v883 = vshrl.u32 %v293, 16
        %v885 = vrot.slane %v883, 5
        %v886 = vshll.u32 %v293, 16
        %v888 = vrot.slane %v886, 6
        %v889 = vor.u32 %v885, %v888
        %v890 = vrot.slane %v889, 4
        %v892 = vshrl.u32 %v294, 16
        %v894 = vrot.slane %v892, 5
        %v895 = vshll.u32 %v294, 16
        %v897 = vrot.slane %v895, 6
        %v898 = vor.u32 %v894, %v897
        %v899 = vsel %vm331, %v890, %v898
        %v900 = vrot.slane %v898, 4
        %v902 = vshrl.u32 %v295, 16
        %v904 = vrot.slane %v902, 5
        %v905 = vshll.u32 %v295, 16
        %v907 = vrot.slane %v905, 6
        %v908 = vor.u32 %v904, %v907
        %v909 = vsel %vm331, %v900, %v908
        %vm910 = vcmask 1041408
        %vm911 = vcmask 1045508
        %vm912 = vmor %vm910, %vm911
        %v913 = vrot.slane %v293, 6
        %v914 = vrot.slane %v913, 4
        %v915 = vrot.slane %v294, 6
        %v916 = vsel %vm912, %v914, %v915
        %v917 = vrot.slane %v915, 4
        %v918 = vrot.slane %v295, 6
        %v919 = vsel %vm912, %v917, %v918
        %v920 = vrot.slane %v296, 6
        %v921 = vrot.slane %v920, 4
        %v922 = vrot.slane %v297, 6
        %v923 = vsel %vm912, %v921, %v922
        %v924 = vrot.slane %v922, 4
        %v925 = vrot.slane %v298, 6
        %v926 = vsel %vm912, %v924, %v925
        %v927 = vrot.slane %v299, 6
        %v928 = vrot.slane %v927, 4
        %v929 = vrot.slane %v300, 6
        %v930 = vsel %vm912, %v928, %v929
        %v931 = vrot.slane %v929, 4
        %v932 = vrot.slane %v301, 6
        %v933 = vsel %vm912, %v931, %v932
        %v934 = vrot.slane %v302, 6
        %v935 = vrot.slane %v934, 4
        %v936 = vrot.slane %v303, 6
        %v937 = vsel %vm912, %v935, %v936
        %v938 = vrot.slane %v936, 4
        %v939 = vrot.slane %v304, 6
        %v940 = vsel %vm912, %v938, %v939
        %v941 = vrot.slane %v305, 6
        %v942 = vrot.slane %v941, 4
        %v943 = vrot.slane %v306, 6
        %v944 = vsel %vm912, %v942, %v943
        %v945 = vrot.slane %v943, 4
        %v946 = vrot.slane %v307, 6
        %v947 = vsel %vm912, %v945, %v946
        %v948 = vrot.slane %v308, 6
        %v949 = vrot.slane %v948, 4
        %v950 = vrot.slane %v309, 6
        %v951 = vsel %vm912, %v949, %v950
        %v952 = vrot.slane %v950, 4
        %v953 = vrot.slane %v310, 6
        %v954 = vsel %vm912, %v952, %v953
        %v955 = vrot.slane %v311, 6
        %v956 = vrot.slane %v955, 4
        %v957 = vrot.slane %v312, 6
        %v958 = vsel %vm912, %v956, %v957
        %v959 = vrot.slane %v957, 4
        %v960 = vrot.slane %v313, 6
        %v961 = vsel %vm912, %v959, %v960
        %v962 = vrot.slane %v314, 6
        %v963 = vrot.slane %v962, 4
        %v964 = vrot.slane %v315, 6
        %v965 = vsel %vm912, %v963, %v964
        %v966 = vrot.slane %v964, 4
        %v967 = vrot.slane %v316, 6
        %v968 = vsel %vm912, %v966, %v967
        %v972 = vrot.slane %v317, 5
        %v973 = vrot.slane %v972, 4
        %v974 = vrot.slane %v318, 5
        %v975 = vsel %vm825, %v973, %v974
        %v976 = vrot.slane %v974, 4
        %v977 = vrot.slane %v319, 5
        %v978 = vsel %vm825, %v976, %v977
        %v979 = vrot.slane %v317, 6
        %v980 = vrot.slane %v979, 4
        %v981 = vrot.slane %v318, 6
        %v982 = vsel %vm912, %v980, %v981
        %v983 = vrot.slane %v981, 4
        %v984 = vrot.slane %v319, 6
        %v985 = vsel %vm912, %v983, %v984
        %v989 = vrot.slane %v320, 5
        %v990 = vrot.slane %v989, 4
        %v991 = vrot.slane %v321, 5
        %v992 = vsel %vm825, %v990, %v991
        %v993 = vrot.slane %v991, 4
        %v994 = vrot.slane %v322, 5
        %v995 = vsel %vm825, %v993, %v994
        %v997 = vshrl.u32 %v320, 16
        %v999 = vrot.slane %v997, 5
        %v1000 = vshll.u32 %v320, 16
        %v1002 = vrot.slane %v1000, 6
        %v1003 = vor.u32 %v999, %v1002
        %v1004 = vrot.slane %v1003, 4
        %v1006 = vshrl.u32 %v321, 16
        %v1008 = vrot.slane %v1006, 5
        %v1009 = vshll.u32 %v321, 16
        %v1011 = vrot.slane %v1009, 6
        %v1012 = vor.u32 %v1008, %v1011
        %v1013 = vsel %vm331, %v1004, %v1012
        %v1014 = vrot.slane %v1012, 4
        %v1016 = vshrl.u32 %v322, 16
        %v1018 = vrot.slane %v1016, 5
        %v1019 = vshll.u32 %v322, 16
        %v1021 = vrot.slane %v1019, 6
        %v1022 = vor.u32 %v1018, %v1021
        %v1023 = vsel %vm331, %v1014, %v1022
        %v1024 = vrot.slane %v320, 6
        %v1025 = vrot.slane %v1024, 4
        %v1026 = vrot.slane %v321, 6
        %v1027 = vsel %vm912, %v1025, %v1026
        %v1028 = vrot.slane %v1026, 4
        %v1029 = vrot.slane %v322, 6
        %v1030 = vsel %vm912, %v1028, %v1029
        %v1031 = vunpack.c.l.b16 %v829
        %v1032 = vunpack.c.l.b16 %v832
        %v1033 = vunpack.c.l.b16 %v836
        %v1034 = vunpack.c.l.b16 %v839
        %v1035 = vunpack.c.l.b16 %v843
        %v1036 = vunpack.c.l.b16 %v846
        %v1037 = vunpack.c.l.b16 %v850
        %v1038 = vunpack.c.l.b16 %v853
        %v1039 = vunpack.c.l.b16 %v857
        %v1040 = vunpack.c.l.b16 %v860
        %v1041 = vunpack.c.l.b16 %v864
        %v1042 = vunpack.c.l.b16 %v867
        %v1043 = vunpack.c.l.b16 %v871
        %v1044 = vunpack.c.l.b16 %v874
        %v1045 = vunpack.c.l.b16 %v878
        %v1046 = vunpack.c.l.b16 %v881
        %v1047 = vpack.c.b16 %v1032, %v1031
        %v1048 = vpack.c.b16 %v1034, %v1033
        %v1049 = vpack.c.b16 %v1036, %v1035
        %v1050 = vpack.c.b16 %v1038, %v1037
        %v1051 = vpack.c.b16 %v1040, %v1039
        %v1052 = vpack.c.b16 %v1042, %v1041
        %v1053 = vpack.c.b16 %v1044, %v1043
        %v1054 = vpack.c.b16 %v1046, %v1045
        %v1055 = vunpack.c.l.b16 %v899
        %v1056 = vunpack.c.l.b16 %v909
        %v1057 = vpack.c.b16 %v1056, %v1055
        %1058 = vrot.lane.b32.xlu0 %v1057, 4
        %v1059 = vpop.permute.xlu0 %1058
        %1060 = vrot.lane.b32.xlu0 %v579, 4
        %v1061 = vpop.permute.xlu0 %1060
        %1062 = vrot.lane.b32.xlu0 %v580, 4
        %v1063 = vpop.permute.xlu0 %1062
        %1064 = vrot.lane.b32.xlu0 %v581, 4
        %v1065 = vpop.permute.xlu0 %1064
        %1066 = vrot.lane.b32.xlu0 %v582, 4
        %v1067 = vpop.permute.xlu0 %1066
        %1068 = vrot.lane.b32.xlu0 %v583, 4
        %v1069 = vpop.permute.xlu0 %1068
        %1070 = vrot.lane.b32.xlu0 %v584, 4
        %v1071 = vpop.permute.xlu0 %1070
        %1072 = vrot.lane.b32.xlu0 %v585, 4
        %v1073 = vpop.permute.xlu0 %1072
        %v1074 = vunpack.c.l.b16 %v916
        %v1075 = vunpack.c.l.b16 %v919
        %v1076 = vunpack.c.l.b16 %v923
        %v1077 = vunpack.c.l.b16 %v926
        %v1078 = vunpack.c.l.b16 %v930
        %v1079 = vunpack.c.l.b16 %v933
        %v1080 = vunpack.c.l.b16 %v937
        %v1081 = vunpack.c.l.b16 %v940
        %v1082 = vunpack.c.l.b16 %v944
        %v1083 = vunpack.c.l.b16 %v947
        %v1084 = vunpack.c.l.b16 %v951
        %v1085 = vunpack.c.l.b16 %v954
        %v1086 = vunpack.c.l.b16 %v958
        %v1087 = vunpack.c.l.b16 %v961
        %v1088 = vunpack.c.l.b16 %v965
        %v1089 = vunpack.c.l.b16 %v968
        %v1090 = vpack.c.b16 %v1075, %v1074
        %v1091 = vpack.c.b16 %v1077, %v1076
        %v1092 = vpack.c.b16 %v1079, %v1078
        %v1093 = vpack.c.b16 %v1081, %v1080
        %v1094 = vpack.c.b16 %v1083, %v1082
        %v1095 = vpack.c.b16 %v1085, %v1084
        %v1096 = vpack.c.b16 %v1087, %v1086
        %v1097 = vpack.c.b16 %v1089, %v1088
        %1098 = vrot.lane.b32.xlu0 %v1090, 8
        %v1099 = vpop.permute.xlu0 %1098
        %1100 = vrot.lane.b32.xlu0 %v1091, 8
        %v1101 = vpop.permute.xlu0 %1100
        %1102 = vrot.lane.b32.xlu0 %v1092, 8
        %v1103 = vpop.permute.xlu0 %1102
        %1104 = vrot.lane.b32.xlu0 %v1093, 8
        %v1105 = vpop.permute.xlu0 %1104
        %1106 = vrot.lane.b32.xlu0 %v1094, 8
        %v1107 = vpop.permute.xlu0 %1106
        %1108 = vrot.lane.b32.xlu0 %v1095, 8
        %v1109 = vpop.permute.xlu0 %1108
        %1110 = vrot.lane.b32.xlu0 %v1096, 8
        %v1111 = vpop.permute.xlu0 %1110
        %1112 = vrot.lane.b32.xlu0 %v1097, 8
        %v1113 = vpop.permute.xlu0 %1112
        %v1114 = vunpack.c.l.b16 %v975
        %v1115 = vunpack.c.l.b16 %v978
        %v1116 = vpack.c.b16 %v1115, %v1114
        %1117 = vrot.lane.b32.xlu0 %v1048, 12
        %v1118 = vpop.permute.xlu0 %1117
        %1119 = vrot.lane.b32.xlu0 %v1049, 12
        %v1120 = vpop.permute.xlu0 %1119
        %1121 = vrot.lane.b32.xlu0 %v1050, 12
        %v1122 = vpop.permute.xlu0 %1121
        %1123 = vrot.lane.b32.xlu0 %v1051, 12
        %v1124 = vpop.permute.xlu0 %1123
        %1125 = vrot.lane.b32.xlu0 %v1052, 12
        %v1126 = vpop.permute.xlu0 %1125
        %1127 = vrot.lane.b32.xlu0 %v1053, 12
        %v1128 = vpop.permute.xlu0 %1127
        %1129 = vrot.lane.b32.xlu0 %v1054, 12
        %v1130 = vpop.permute.xlu0 %1129
        %1131 = vrot.lane.b32.xlu0 %v1116, 12
        %v1132 = vpop.permute.xlu0 %1131
        %1133 = vrot.lane.b32.xlu0 %v579, 16
        %v1134 = vpop.permute.xlu0 %1133
        %1135 = vrot.lane.b32.xlu0 %v580, 16
        %v1136 = vpop.permute.xlu0 %1135
        %1137 = vrot.lane.b32.xlu0 %v581, 16
        %v1138 = vpop.permute.xlu0 %1137
        %1139 = vrot.lane.b32.xlu0 %v582, 16
        %v1140 = vpop.permute.xlu0 %1139
        %1141 = vrot.lane.b32.xlu0 %v583, 16
        %v1142 = vpop.permute.xlu0 %1141
        %1143 = vrot.lane.b32.xlu0 %v584, 16
        %v1144 = vpop.permute.xlu0 %1143
        %1145 = vrot.lane.b32.xlu0 %v585, 16
        %v1146 = vpop.permute.xlu0 %1145
        %1147 = vrot.lane.b32.xlu0 %v586, 16
        %v1148 = vpop.permute.xlu0 %1147
        %v1149 = vunpack.c.l.b16 %v982
        %v1150 = vunpack.c.l.b16 %v985
        %v1151 = vpack.c.b16 %v1150, %v1149
        %1152 = vrot.lane.b32.xlu0 %v1091, 20
        %v1153 = vpop.permute.xlu0 %1152
        %1154 = vrot.lane.b32.xlu0 %v1092, 20
        %v1155 = vpop.permute.xlu0 %1154
        %1156 = vrot.lane.b32.xlu0 %v1093, 20
        %v1157 = vpop.permute.xlu0 %1156
        %1158 = vrot.lane.b32.xlu0 %v1094, 20
        %v1159 = vpop.permute.xlu0 %1158
        %1160 = vrot.lane.b32.xlu0 %v1095, 20
        %v1161 = vpop.permute.xlu0 %1160
        %1162 = vrot.lane.b32.xlu0 %v1096, 20
        %v1163 = vpop.permute.xlu0 %1162
        %1164 = vrot.lane.b32.xlu0 %v1097, 20
        %v1165 = vpop.permute.xlu0 %1164
        %1166 = vrot.lane.b32.xlu0 %v1151, 20
        %v1167 = vpop.permute.xlu0 %1166
        %v1168 = vunpack.c.l.b16 %v992
        %v1169 = vunpack.c.l.b16 %v995
        %v1170 = vpack.c.b16 %v1169, %v1168
        %1171 = vrot.lane.b32.xlu0 %v1049, 24
        %v1172 = vpop.permute.xlu0 %1171
        %1173 = vrot.lane.b32.xlu0 %v1050, 24
        %v1174 = vpop.permute.xlu0 %1173
        %1175 = vrot.lane.b32.xlu0 %v1051, 24
        %v1176 = vpop.permute.xlu0 %1175
        %1177 = vrot.lane.b32.xlu0 %v1052, 24
        %v1178 = vpop.permute.xlu0 %1177
        %1179 = vrot.lane.b32.xlu0 %v1053, 24
        %v1180 = vpop.permute.xlu0 %1179
        %1181 = vrot.lane.b32.xlu0 %v1054, 24
        %v1182 = vpop.permute.xlu0 %1181
        %1183 = vrot.lane.b32.xlu0 %v1116, 24
        %v1184 = vpop.permute.xlu0 %1183
        %1185 = vrot.lane.b32.xlu0 %v1170, 24
        %v1186 = vpop.permute.xlu0 %1185
        %v1187 = vunpack.c.l.b16 %v1013
        %v1188 = vunpack.c.l.b16 %v1023
        %v1189 = vpack.c.b16 %v1188, %v1187
        %1190 = vrot.lane.b32.xlu0 %v580, 28
        %v1191 = vpop.permute.xlu0 %1190
        %1192 = vrot.lane.b32.xlu0 %v581, 28
        %v1193 = vpop.permute.xlu0 %1192
        %1194 = vrot.lane.b32.xlu0 %v582, 28
        %v1195 = vpop.permute.xlu0 %1194
        %1196 = vrot.lane.b32.xlu0 %v583, 28
        %v1197 = vpop.permute.xlu0 %1196
        %1198 = vrot.lane.b32.xlu0 %v584, 28
        %v1199 = vpop.permute.xlu0 %1198
        %1200 = vrot.lane.b32.xlu0 %v585, 28
        %v1201 = vpop.permute.xlu0 %1200
        %1202 = vrot.lane.b32.xlu0 %v586, 28
        %v1203 = vpop.permute.xlu0 %1202
        %1204 = vrot.lane.b32.xlu0 %v1189, 28
        %v1205 = vpop.permute.xlu0 %1204
        %v1206 = vunpack.c.l.b16 %v1027
        %v1207 = vunpack.c.l.b16 %v1030
        %v1208 = vpack.c.b16 %v1207, %v1206
        %1209 = vrot.lane.b32.xlu0 %v1092, 32
        %v1210 = vpop.permute.xlu0 %1209
        %1211 = vrot.lane.b32.xlu0 %v1093, 32
        %v1212 = vpop.permute.xlu0 %1211
        %1213 = vrot.lane.b32.xlu0 %v1094, 32
        %v1214 = vpop.permute.xlu0 %1213
        %1215 = vrot.lane.b32.xlu0 %v1095, 32
        %v1216 = vpop.permute.xlu0 %1215
        %1217 = vrot.lane.b32.xlu0 %v1096, 32
        %v1218 = vpop.permute.xlu0 %1217
        %1219 = vrot.lane.b32.xlu0 %v1097, 32
        %v1220 = vpop.permute.xlu0 %1219
        %1221 = vrot.lane.b32.xlu0 %v1151, 32
        %v1222 = vpop.permute.xlu0 %1221
        %1223 = vrot.lane.b32.xlu0 %v1208, 32
        %v1224 = vpop.permute.xlu0 %1223
        %v1227 = vsel %vm591, %v1047, %v1059
        %v1230 = vsel %vm591, %v1048, %v1061
        %v1233 = vsel %vm591, %v1049, %v1063
        %v1236 = vsel %vm591, %v1050, %v1065
        %v1239 = vsel %vm591, %v1051, %v1067
        %v1242 = vsel %vm591, %v1052, %v1069
        %v1245 = vsel %vm591, %v1053, %v1071
        %v1248 = vsel %vm591, %v1054, %v1073
        %vm1249 = vcmask 64512
        %v1251 = vsel %vm1249, %v1227, %v1099
        %v1253 = vsel %vm1249, %v1230, %v1101
        %v1255 = vsel %vm1249, %v1233, %v1103
        %v1257 = vsel %vm1249, %v1236, %v1105
        %v1259 = vsel %vm1249, %v1239, %v1107
        %v1261 = vsel %vm1249, %v1242, %v1109
        %v1263 = vsel %vm1249, %v1245, %v1111
        %v1265 = vsel %vm1249, %v1248, %v1113
        %vm1266 = vcmask 97280
        %v1268 = vsel %vm1266, %v1251, %v1118
        %v1270 = vsel %vm1266, %v1253, %v1120
        %v1272 = vsel %vm1266, %v1255, %v1122
        %v1274 = vsel %vm1266, %v1257, %v1124
        %v1276 = vsel %vm1266, %v1259, %v1126
        %v1278 = vsel %vm1266, %v1261, %v1128
        %v1280 = vsel %vm1266, %v1263, %v1130
        %v1282 = vsel %vm1266, %v1265, %v1132
        %vm1283 = vcmask 130048
        %v1285 = vsel %vm1283, %v1268, %v1134
        %v1287 = vsel %vm1283, %v1270, %v1136
        %v1289 = vsel %vm1283, %v1272, %v1138
        %v1291 = vsel %vm1283, %v1274, %v1140
        %v1293 = vsel %vm1283, %v1276, %v1142
        %v1295 = vsel %vm1283, %v1278, %v1144
        %v1297 = vsel %vm1283, %v1280, %v1146
        %v1299 = vsel %vm1283, %v1282, %v1148
        %vm1300 = vcmask 162816
        %v1302 = vsel %vm1300, %v1285, %v1153
        %v1304 = vsel %vm1300, %v1287, %v1155
        %v1306 = vsel %vm1300, %v1289, %v1157
        %v1308 = vsel %vm1300, %v1291, %v1159
        %v1310 = vsel %vm1300, %v1293, %v1161
        %v1312 = vsel %vm1300, %v1295, %v1163
        %v1314 = vsel %vm1300, %v1297, %v1165
        %v1316 = vsel %vm1300, %v1299, %v1167
        %vm1317 = vcmask 195584
        %v1319 = vsel %vm1317, %v1302, %v1172
        %v1321 = vsel %vm1317, %v1304, %v1174
        %v1323 = vsel %vm1317, %v1306, %v1176
        %v1325 = vsel %vm1317, %v1308, %v1178
        %v1327 = vsel %vm1317, %v1310, %v1180
        %v1329 = vsel %vm1317, %v1312, %v1182
        %v1331 = vsel %vm1317, %v1314, %v1184
        %v1333 = vsel %vm1317, %v1316, %v1186
        %vm1334 = vcmask 228352
        %v1336 = vsel %vm1334, %v1319, %v1191
        %v1338 = vsel %vm1334, %v1321, %v1193
        %v1340 = vsel %vm1334, %v1323, %v1195
        %v1342 = vsel %vm1334, %v1325, %v1197
        %v1344 = vsel %vm1334, %v1327, %v1199
        %v1346 = vsel %vm1334, %v1329, %v1201
        %v1348 = vsel %vm1334, %v1331, %v1203
        %v1350 = vsel %vm1334, %v1333, %v1205
        %vm1351 = vcmask 261120
        %v1353 = vsel %vm1351, %v1336, %v1210
        %v1355 = vsel %vm1351, %v1338, %v1212
        %v1357 = vsel %vm1351, %v1340, %v1214
        %v1359 = vsel %vm1351, %v1342, %v1216
        %v1361 = vsel %vm1351, %v1344, %v1218
        %v1363 = vsel %vm1351, %v1346, %v1220
        %v1365 = vsel %vm1351, %v1348, %v1222
        %v1367 = vsel %vm1351, %v1350, %v1224
        %v1368 = vld [vmem:[%s2] sm:$0xff]
        %v1369 = vld [vmem:[%s2 + $0x8] sm:$0xff]
        %v1370 = vld [vmem:[%s2 + $0x10] sm:$0xff]
        %v1371 = vld [vmem:[%s2 + $0x18] sm:$0xff]
        %v1372 = vld [vmem:[%s2 + $0x20] sm:$0x33]
        %s1373 = scalar_lea.vmem %s3, 1
        %v1374 = vld [vmem:[%s1373] ss:$4 sm:$0x3]
        %v1376 = vperm.slane %v1374, 0
        %v1377 = vperm.slane %v1374, 1
        %v1385 = vunpack.c.l.b16 %v1368
        %v1386 = vunpack.c.h.b16 %v1368
        %v1387 = vunpack.c.l.b16 %v1369
        %v1388 = vunpack.c.h.b16 %v1369
        %v1389 = vunpack.c.l.b16 %v1370
        %v1390 = vunpack.c.h.b16 %v1370
        %v1391 = vunpack.c.l.b16 %v1371
        %v1392 = vunpack.c.h.b16 %v1371
        %v1393 = vunpack.c.l.b16 %v1372
        %v1394 = vunpack.c.h.b16 %v1372
        %v1395 = vpack.c.b16 %v1387, %v1385
        %v1396 = vpack.c.b16 %v1388, %v1386
        %v1397 = vpack.c.b16 %v1391, %v1389
        %v1398 = vpack.c.b16 %v1392, %v1390
        %v1399 = vpack.c.b16 %v1393, %v1393
        %v1400 = vpack.c.b16 %v1394, %v1394
        %vm1405 = vcmask 293888
        %v1406 = vsel %vm1405, %v1353, 0
        %v1408 = vsel %vm1405, %v1355, 0
        %v1410 = vsel %vm1405, %v1357, 0
        %v1412 = vsel %vm1405, %v1359, 0
        %v1414 = vsel %vm1405, %v1361, 0
        %v1416 = vsel %vm1405, %v1363, 0
        %v1418 = vsel %vm1405, %v1365, 0
        %v1420 = vsel %vm1405, %v1367, 0
        %v1423 = vsel %vm616, %v1399, 0
        %v1426 = vsel %vm616, %v1400, 0
        %1428 = vmatpush.bf16.msra.mxu0 0
        %1429 = vmatpush.bf16.msra.mxu0 0
        %1430 = vmatpush.bf16.msra.mxu0 0
        %1431 = vmatpush.bf16.msra.mxu0 0
        %1432 = vmatpush.bf16.msra.mxu0 0
        %1433 = vmatpush.bf16.msra.mxu0 %v1423
        %1434 = vmatpush.bf16.msra.mxu0 %v1397
        %1435 = vmatpush.bf16.msra.mxu0 %v1395
        %1436 = vmatmul.bf16.gmra.mxu0 %v1406
        %v1437 = vpop.f32.mrf.mxu0
        %v1438 = vadd.f32 %v1376, %v1437
        %v1439 = vpop.f32.mrf.mxu0
        %v1440 = vadd.f32 %v1376, %v1439
        %1441 = vmatmul.bf16.gmra.mxu0 %v1408
        %v1442 = vpop.f32.mrf.mxu0
        %v1443 = vadd.f32 %v1376, %v1442
        %v1444 = vpop.f32.mrf.mxu0
        %v1445 = vadd.f32 %v1376, %v1444
        %1446 = vmatmul.bf16.gmra.mxu0 %v1410
        %v1447 = vpop.f32.mrf.mxu0
        %v1448 = vadd.f32 %v1376, %v1447
        %v1449 = vpop.f32.mrf.mxu0
        %v1450 = vadd.f32 %v1376, %v1449
        %1451 = vmatmul.bf16.gmra.mxu0 %v1412
        %v1452 = vpop.f32.mrf.mxu0
        %v1453 = vadd.f32 %v1376, %v1452
        %v1454 = vpop.f32.mrf.mxu0
        %v1455 = vadd.f32 %v1376, %v1454
        %1456 = vmatmul.bf16.gmra.mxu0 %v1414
        %v1457 = vpop.f32.mrf.mxu0
        %v1458 = vadd.f32 %v1376, %v1457
        %v1459 = vpop.f32.mrf.mxu0
        %v1460 = vadd.f32 %v1376, %v1459
        %1461 = vmatmul.bf16.gmra.mxu0 %v1416
        %v1462 = vpop.f32.mrf.mxu0
        %v1463 = vadd.f32 %v1376, %v1462
        %v1464 = vpop.f32.mrf.mxu0
        %v1465 = vadd.f32 %v1376, %v1464
        %1466 = vmatmul.bf16.gmra.mxu0 %v1418
        %v1467 = vpop.f32.mrf.mxu0
        %v1468 = vadd.f32 %v1376, %v1467
        %v1469 = vpop.f32.mrf.mxu0
        %v1470 = vadd.f32 %v1376, %v1469
        %1471 = vmatmul.bf16.gmra.mxu0 %v1420
        %v1472 = vpop.f32.mrf.mxu0
        %v1473 = vadd.f32 %v1376, %v1472
        %v1474 = vpop.f32.mrf.mxu0
        %v1475 = vadd.f32 %v1376, %v1474
        %1476 = vdwg.mxu0
        %1477 = vmatpush.bf16.msra.mxu0 0
        %1478 = vmatpush.bf16.msra.mxu0 0
        %1479 = vmatpush.bf16.msra.mxu0 0
        %1480 = vmatpush.bf16.msra.mxu0 0
        %1481 = vmatpush.bf16.msra.mxu0 0
        %1482 = vmatpush.bf16.msra.mxu0 %v1426
        %1483 = vmatpush.bf16.msra.mxu0 %v1398
        %1484 = vmatpush.bf16.msra.mxu0 %v1396
        %1485 = vmatmul.bf16.gmra.mxu0 %v1406
        %v1486 = vpop.f32.mrf.mxu0
        %v1487 = vadd.f32 %v1377, %v1486
        %v1488 = vpop.f32.mrf.mxu0
        %v1489 = vadd.f32 %v1377, %v1488
        %1490 = vmatmul.bf16.gmra.mxu0 %v1408
        %v1491 = vpop.f32.mrf.mxu0
        %v1492 = vadd.f32 %v1377, %v1491
        %v1493 = vpop.f32.mrf.mxu0
        %v1494 = vadd.f32 %v1377, %v1493
        %1495 = vmatmul.bf16.gmra.mxu0 %v1410
        %v1496 = vpop.f32.mrf.mxu0
        %v1497 = vadd.f32 %v1377, %v1496
        %v1498 = vpop.f32.mrf.mxu0
        %v1499 = vadd.f32 %v1377, %v1498
        %1500 = vmatmul.bf16.gmra.mxu0 %v1412
        %v1501 = vpop.f32.mrf.mxu0
        %v1502 = vadd.f32 %v1377, %v1501
        %v1503 = vpop.f32.mrf.mxu0
        %v1504 = vadd.f32 %v1377, %v1503
        %1505 = vmatmul.bf16.gmra.mxu0 %v1414
        %v1506 = vpop.f32.mrf.mxu0
        %v1507 = vadd.f32 %v1377, %v1506
        %v1508 = vpop.f32.mrf.mxu0
        %v1509 = vadd.f32 %v1377, %v1508
        %1510 = vmatmul.bf16.gmra.mxu0 %v1416
        %v1511 = vpop.f32.mrf.mxu0
        %v1512 = vadd.f32 %v1377, %v1511
        %v1513 = vpop.f32.mrf.mxu0
        %v1514 = vadd.f32 %v1377, %v1513
        %1515 = vmatmul.bf16.gmra.mxu0 %v1418
        %v1516 = vpop.f32.mrf.mxu0
        %v1517 = vadd.f32 %v1377, %v1516
        %v1518 = vpop.f32.mrf.mxu0
        %v1519 = vadd.f32 %v1377, %v1518
        %1520 = vmatmul.bf16.gmra.mxu0 %v1420
        %v1521 = vpop.f32.mrf.mxu0
        %v1522 = vadd.f32 %v1377, %v1521
        %v1523 = vpop.f32.mrf.mxu0
        %v1524 = vadd.f32 %v1377, %v1523
        %1525 = vdwg.mxu0
        %v1526 = vmax.f32 %v1438, 0.0
        %v1527 = vmax.f32 %v1487, 0.0
        %v1528 = vmax.f32 %v1440, 0.0
        %v1529 = vmax.f32 %v1489, 0.0
        %v1530 = vmax.f32 %v1443, 0.0
        %v1531 = vmax.f32 %v1492, 0.0
        %v1532 = vmax.f32 %v1445, 0.0
        %v1533 = vmax.f32 %v1494, 0.0
        %v1534 = vmax.f32 %v1448, 0.0
        %v1535 = vmax.f32 %v1497, 0.0
        %v1536 = vmax.f32 %v1450, 0.0
        %v1537 = vmax.f32 %v1499, 0.0
        %v1538 = vmax.f32 %v1453, 0.0
        %v1539 = vmax.f32 %v1502, 0.0
        %v1540 = vmax.f32 %v1455, 0.0
        %v1541 = vmax.f32 %v1504, 0.0
        %v1542 = vmax.f32 %v1458, 0.0
        %v1543 = vmax.f32 %v1507, 0.0
        %v1544 = vmax.f32 %v1460, 0.0
        %v1545 = vmax.f32 %v1509, 0.0
        %v1546 = vmax.f32 %v1463, 0.0
        %v1547 = vmax.f32 %v1512, 0.0
        %v1548 = vmax.f32 %v1465, 0.0
        %v1549 = vmax.f32 %v1514, 0.0
        %v1550 = vmax.f32 %v1468, 0.0
        %v1551 = vmax.f32 %v1517, 0.0
        %v1552 = vmax.f32 %v1470, 0.0
        %v1553 = vmax.f32 %v1519, 0.0
        %v1554 = vmax.f32 %v1473, 0.0
        %v1555 = vmax.f32 %v1522, 0.0
        %v1556 = vmax.f32 %v1475, 0.0
        %v1557 = vmax.f32 %v1524, 0.0
        %v1558 = vpack.c.bf16 %v1528, %v1526
        %v1559 = vpack.c.bf16 %v1529, %v1527
        %v1560 = vpack.c.bf16 %v1532, %v1530
        %v1561 = vpack.c.bf16 %v1533, %v1531
        %v1562 = vpack.c.bf16 %v1536, %v1534
        %v1563 = vpack.c.bf16 %v1537, %v1535
        %v1564 = vpack.c.bf16 %v1540, %v1538
        %v1565 = vpack.c.bf16 %v1541, %v1539
        %v1566 = vpack.c.bf16 %v1544, %v1542
        %v1567 = vpack.c.bf16 %v1545, %v1543
        %v1568 = vpack.c.bf16 %v1548, %v1546
        %v1569 = vpack.c.bf16 %v1549, %v1547
        %v1570 = vpack.c.bf16 %v1552, %v1550
        %v1571 = vpack.c.bf16 %v1553, %v1551
        %v1572 = vpack.c.bf16 %v1556, %v1554
        %v1573 = vpack.c.bf16 %v1557, %v1555
        %s1574 = scalar_lea.vmem %s4, 256
        %v1575 = vld [vmem:[%s1574] sm:$0xff]
        %v1576 = vld [vmem:[%s1574 + $0x8] sm:$0xff]
        %v1577 = vld [vmem:[%s1574 + $0x10] sm:$0xff]
        %v1578 = vld [vmem:[%s1574 + $0x18] sm:$0xff]
        %v1579 = vld [vmem:[%s1574 + $0x20] sm:$0xff]
        %v1580 = vld [vmem:[%s1574 + $0x28] sm:$0xff]
        %v1581 = vld [vmem:[%s1574 + $0x30] sm:$0xff]
        %v1582 = vld [vmem:[%s1574 + $0x38] sm:$0xff]
        %v1583 = vld [vmem:[%s1574 + $0x40] sm:$0xff]
        %v1584 = vld [vmem:[%s1574 + $0x48] sm:$0xff]
        %v1585 = vld [vmem:[%s1574 + $0x50] sm:$0xff]
        %v1586 = vld [vmem:[%s1574 + $0x58] sm:$0xff]
        %v1587 = vld [vmem:[%s1574 + $0x60] sm:$0xff]
        %v1588 = vld [vmem:[%s1574 + $0x68] sm:$0xff]
        %v1589 = vld [vmem:[%s1574 + $0x70] sm:$0xff]
        %v1590 = vld [vmem:[%s1574 + $0x78] sm:$0xff]
        %v1591 = vld [vmem:[%s1574 + $0x80] sm:$0xff]
        %v1592 = vld [vmem:[%s1574 + $0x88] sm:$0xff]
        %v1593 = vld [vmem:[%s1574 + $0x90] sm:$0xff]
        %v1594 = vld [vmem:[%s1574 + $0x98] sm:$0xff]
        %v1595 = vld [vmem:[%s1574 + $0xa0] sm:$0xff]
        %v1596 = vld [vmem:[%s1574 + $0xa8] sm:$0xff]
        %v1597 = vld [vmem:[%s1574 + $0xb0] sm:$0xff]
        %v1598 = vld [vmem:[%s1574 + $0xb8] sm:$0xff]
        %v1599 = vld [vmem:[%s1574 + $0xc0] sm:$0xff]
        %v1600 = vld [vmem:[%s1574 + $0xc8] sm:$0xff]
        %v1601 = vld [vmem:[%s1574 + $0xd0] sm:$0xff]
        %v1602 = vld [vmem:[%s1574 + $0xd8] sm:$0xff]
        %v1603 = vld [vmem:[%s1574 + $0xe0] sm:$0xff]
        %v1604 = vld [vmem:[%s1574 + $0xe8] sm:$0xff]
        %v1605 = vld [vmem:[%s1574 + $0xf0] sm:$0xff]
        %v1606 = vld [vmem:[%s1574 + $0xf8] sm:$0xff]
        %v1639 = vunpack.c.l.b16 %v1575
        %v1640 = vunpack.c.h.b16 %v1575
        %v1641 = vunpack.c.l.b16 %v1576
        %v1642 = vunpack.c.h.b16 %v1576
        %v1643 = vunpack.c.l.b16 %v1577
        %v1644 = vunpack.c.h.b16 %v1577
        %v1645 = vunpack.c.l.b16 %v1578
        %v1646 = vunpack.c.h.b16 %v1578
        %v1647 = vunpack.c.l.b16 %v1579
        %v1648 = vunpack.c.h.b16 %v1579
        %v1649 = vunpack.c.l.b16 %v1580
        %v1650 = vunpack.c.h.b16 %v1580
        %v1651 = vunpack.c.l.b16 %v1581
        %v1652 = vunpack.c.h.b16 %v1581
        %v1653 = vunpack.c.l.b16 %v1582
        %v1654 = vunpack.c.h.b16 %v1582
        %v1655 = vunpack.c.l.b16 %v1583
        %v1656 = vunpack.c.h.b16 %v1583
        %v1657 = vunpack.c.l.b16 %v1584
        %v1658 = vunpack.c.h.b16 %v1584
        %v1659 = vunpack.c.l.b16 %v1585
        %v1660 = vunpack.c.h.b16 %v1585
        %v1661 = vunpack.c.l.b16 %v1586
        %v1662 = vunpack.c.h.b16 %v1586
        %v1663 = vunpack.c.l.b16 %v1587
        %v1664 = vunpack.c.h.b16 %v1587
        %v1665 = vunpack.c.l.b16 %v1588
        %v1666 = vunpack.c.h.b16 %v1588
        %v1667 = vunpack.c.l.b16 %v1589
        %v1668 = vunpack.c.h.b16 %v1589
        %v1669 = vunpack.c.l.b16 %v1590
        %v1670 = vunpack.c.h.b16 %v1590
        %v1671 = vunpack.c.l.b16 %v1591
        %v1672 = vunpack.c.h.b16 %v1591
        %v1673 = vunpack.c.l.b16 %v1592
        %v1674 = vunpack.c.h.b16 %v1592
        %v1675 = vunpack.c.l.b16 %v1593
        %v1676 = vunpack.c.h.b16 %v1593
        %v1677 = vunpack.c.l.b16 %v1594
        %v1678 = vunpack.c.h.b16 %v1594
        %v1679 = vunpack.c.l.b16 %v1595
        %v1680 = vunpack.c.h.b16 %v1595
        %v1681 = vunpack.c.l.b16 %v1596
        %v1682 = vunpack.c.h.b16 %v1596
        %v1683 = vunpack.c.l.b16 %v1597
        %v1684 = vunpack.c.h.b16 %v1597
        %v1685 = vunpack.c.l.b16 %v1598
        %v1686 = vunpack.c.h.b16 %v1598
        %v1687 = vunpack.c.l.b16 %v1599
        %v1688 = vunpack.c.h.b16 %v1599
        %v1689 = vunpack.c.l.b16 %v1600
        %v1690 = vunpack.c.h.b16 %v1600
        %v1691 = vunpack.c.l.b16 %v1601
        %v1692 = vunpack.c.h.b16 %v1601
        %v1693 = vunpack.c.l.b16 %v1602
        %v1694 = vunpack.c.h.b16 %v1602
        %v1695 = vunpack.c.l.b16 %v1603
        %v1696 = vunpack.c.h.b16 %v1603
        %v1697 = vunpack.c.l.b16 %v1604
        %v1698 = vunpack.c.h.b16 %v1604
        %v1699 = vunpack.c.l.b16 %v1605
        %v1700 = vunpack.c.h.b16 %v1605
        %v1701 = vunpack.c.l.b16 %v1606
        %v1702 = vunpack.c.h.b16 %v1606
        %v1703 = vpack.c.b16 %v1641, %v1639
        %v1704 = vpack.c.b16 %v1642, %v1640
        %v1705 = vpack.c.b16 %v1645, %v1643
        %v1706 = vpack.c.b16 %v1646, %v1644
        %v1707 = vpack.c.b16 %v1649, %v1647
        %v1708 = vpack.c.b16 %v1650, %v1648
        %v1709 = vpack.c.b16 %v1653, %v1651
        %v1710 = vpack.c.b16 %v1654, %v1652
        %v1711 = vpack.c.b16 %v1657, %v1655
        %v1712 = vpack.c.b16 %v1658, %v1656
        %v1713 = vpack.c.b16 %v1661, %v1659
        %v1714 = vpack.c.b16 %v1662, %v1660
        %v1715 = vpack.c.b16 %v1665, %v1663
        %v1716 = vpack.c.b16 %v1666, %v1664
        %v1717 = vpack.c.b16 %v1669, %v1667
        %v1718 = vpack.c.b16 %v1670, %v1668
        %v1719 = vpack.c.b16 %v1673, %v1671
        %v1720 = vpack.c.b16 %v1674, %v1672
        %v1721 = vpack.c.b16 %v1677, %v1675
        %v1722 = vpack.c.b16 %v1678, %v1676
        %v1723 = vpack.c.b16 %v1681, %v1679
        %v1724 = vpack.c.b16 %v1682, %v1680
        %v1725 = vpack.c.b16 %v1685, %v1683
        %v1726 = vpack.c.b16 %v1686, %v1684
        %v1727 = vpack.c.b16 %v1689, %v1687
        %v1728 = vpack.c.b16 %v1690, %v1688
        %v1729 = vpack.c.b16 %v1693, %v1691
        %v1730 = vpack.c.b16 %v1694, %v1692
        %v1731 = vpack.c.b16 %v1697, %v1695
        %v1732 = vpack.c.b16 %v1698, %v1696
        %v1733 = vpack.c.b16 %v1701, %v1699
        %v1734 = vpack.c.b16 %v1702, %v1700
        %1767 = vmatpush.bf16.msra.mxu0 %v1717
        %1768 = vmatpush.bf16.msra.mxu0 %v1715
        %1769 = vmatpush.bf16.msra.mxu0 %v1713
        %1770 = vmatpush.bf16.msra.mxu0 %v1711
        %1771 = vmatpush.bf16.msra.mxu0 %v1709
        %1772 = vmatpush.bf16.msra.mxu0 %v1707
        %1773 = vmatpush.bf16.msra.mxu0 %v1705
        %1774 = vmatpush.bf16.msra.mxu0 %v1703
        %1775 = vmatmul.bf16.gmra.mxu0 %v1558
        %v1776 = vpop.f32.mrf.mxu0
        %v1777 = vadd.f32 0.0, %v1776
        %v1778 = vpop.f32.mrf.mxu0
        %v1779 = vadd.f32 0.0, %v1778
        %1780 = vmatmul.bf16.gmra.mxu0 %v1560
        %v1781 = vpop.f32.mrf.mxu0
        %v1782 = vadd.f32 0.0, %v1781
        %v1783 = vpop.f32.mrf.mxu0
        %v1784 = vadd.f32 0.0, %v1783
        %1785 = vmatmul.bf16.gmra.mxu0 %v1562
        %v1786 = vpop.f32.mrf.mxu0
        %v1787 = vadd.f32 0.0, %v1786
        %v1788 = vpop.f32.mrf.mxu0
        %v1789 = vadd.f32 0.0, %v1788
        %1790 = vmatmul.bf16.gmra.mxu0 %v1564
        %v1791 = vpop.f32.mrf.mxu0
        %v1792 = vadd.f32 0.0, %v1791
        %v1793 = vpop.f32.mrf.mxu0
        %v1794 = vadd.f32 0.0, %v1793
        %1795 = vmatmul.bf16.gmra.mxu0 %v1566
        %v1796 = vpop.f32.mrf.mxu0
        %v1797 = vadd.f32 0.0, %v1796
        %v1798 = vpop.f32.mrf.mxu0
        %v1799 = vadd.f32 0.0, %v1798
        %1800 = vmatmul.bf16.gmra.mxu0 %v1568
        %v1801 = vpop.f32.mrf.mxu0
        %v1802 = vadd.f32 0.0, %v1801
        %v1803 = vpop.f32.mrf.mxu0
        %v1804 = vadd.f32 0.0, %v1803
        %1805 = vmatmul.bf16.gmra.mxu0 %v1570
        %v1806 = vpop.f32.mrf.mxu0
        %v1807 = vadd.f32 0.0, %v1806
        %v1808 = vpop.f32.mrf.mxu0
        %v1809 = vadd.f32 0.0, %v1808
        %1810 = vmatmul.bf16.gmra.mxu0 %v1572
        %v1811 = vpop.f32.mrf.mxu0
        %v1812 = vadd.f32 0.0, %v1811
        %v1813 = vpop.f32.mrf.mxu0
        %v1814 = vadd.f32 0.0, %v1813
        %1815 = vdwg.mxu0
        %1816 = vmatpush.bf16.msra.mxu0 %v1733
        %1817 = vmatpush.bf16.msra.mxu0 %v1731
        %1818 = vmatpush.bf16.msra.mxu0 %v1729
        %1819 = vmatpush.bf16.msra.mxu0 %v1727
        %1820 = vmatpush.bf16.msra.mxu0 %v1725
        %1821 = vmatpush.bf16.msra.mxu0 %v1723
        %1822 = vmatpush.bf16.msra.mxu0 %v1721
        %1823 = vmatpush.bf16.msra.mxu0 %v1719
        %1824 = vmatmul.bf16.gmra.mxu0 %v1559
        %v1825 = vpop.f32.mrf.mxu0
        %v1826 = vadd.f32 %v1777, %v1825
        %v1827 = vpop.f32.mrf.mxu0
        %v1828 = vadd.f32 %v1779, %v1827
        %1829 = vmatmul.bf16.gmra.mxu0 %v1561
        %v1830 = vpop.f32.mrf.mxu0
        %v1831 = vadd.f32 %v1782, %v1830
        %v1832 = vpop.f32.mrf.mxu0
        %v1833 = vadd.f32 %v1784, %v1832
        %1834 = vmatmul.bf16.gmra.mxu0 %v1563
        %v1835 = vpop.f32.mrf.mxu0
        %v1836 = vadd.f32 %v1787, %v1835
        %v1837 = vpop.f32.mrf.mxu0
        %v1838 = vadd.f32 %v1789, %v1837
        %1839 = vmatmul.bf16.gmra.mxu0 %v1565
        %v1840 = vpop.f32.mrf.mxu0
        %v1841 = vadd.f32 %v1792, %v1840
        %v1842 = vpop.f32.mrf.mxu0
        %v1843 = vadd.f32 %v1794, %v1842
        %1844 = vmatmul.bf16.gmra.mxu0 %v1567
        %v1845 = vpop.f32.mrf.mxu0
        %v1846 = vadd.f32 %v1797, %v1845
        %v1847 = vpop.f32.mrf.mxu0
        %v1848 = vadd.f32 %v1799, %v1847
        %1849 = vmatmul.bf16.gmra.mxu0 %v1569
        %v1850 = vpop.f32.mrf.mxu0
        %v1851 = vadd.f32 %v1802, %v1850
        %v1852 = vpop.f32.mrf.mxu0
        %v1853 = vadd.f32 %v1804, %v1852
        %1854 = vmatmul.bf16.gmra.mxu0 %v1571
        %v1855 = vpop.f32.mrf.mxu0
        %v1856 = vadd.f32 %v1807, %v1855
        %v1857 = vpop.f32.mrf.mxu0
        %v1858 = vadd.f32 %v1809, %v1857
        %1859 = vmatmul.bf16.gmra.mxu0 %v1573
        %v1860 = vpop.f32.mrf.mxu0
        %v1861 = vadd.f32 %v1812, %v1860
        %v1862 = vpop.f32.mrf.mxu0
        %v1863 = vadd.f32 %v1814, %v1862
        %1864 = vdwg.mxu0
        %1865 = vmatpush.bf16.msra.mxu0 %v1718
        %1866 = vmatpush.bf16.msra.mxu0 %v1716
        %1867 = vmatpush.bf16.msra.mxu0 %v1714
        %1868 = vmatpush.bf16.msra.mxu0 %v1712
        %1869 = vmatpush.bf16.msra.mxu0 %v1710
        %1870 = vmatpush.bf16.msra.mxu0 %v1708
        %1871 = vmatpush.bf16.msra.mxu0 %v1706
        %1872 = vmatpush.bf16.msra.mxu0 %v1704
        %1873 = vmatmul.bf16.gmra.mxu0 %v1558
        %v1874 = vpop.f32.mrf.mxu0
        %v1875 = vadd.f32 0.0, %v1874
        %v1876 = vpop.f32.mrf.mxu0
        %v1877 = vadd.f32 0.0, %v1876
        %1878 = vmatmul.bf16.gmra.mxu0 %v1560
        %v1879 = vpop.f32.mrf.mxu0
        %v1880 = vadd.f32 0.0, %v1879
        %v1881 = vpop.f32.mrf.mxu0
        %v1882 = vadd.f32 0.0, %v1881
        %1883 = vmatmul.bf16.gmra.mxu0 %v1562
        %v1884 = vpop.f32.mrf.mxu0
        %v1885 = vadd.f32 0.0, %v1884
        %v1886 = vpop.f32.mrf.mxu0
        %v1887 = vadd.f32 0.0, %v1886
        %1888 = vmatmul.bf16.gmra.mxu0 %v1564
        %v1889 = vpop.f32.mrf.mxu0
        %v1890 = vadd.f32 0.0, %v1889
        %v1891 = vpop.f32.mrf.mxu0
        %v1892 = vadd.f32 0.0, %v1891
        %1893 = vmatmul.bf16.gmra.mxu0 %v1566
        %v1894 = vpop.f32.mrf.mxu0
        %v1895 = vadd.f32 0.0, %v1894
        %v1896 = vpop.f32.mrf.mxu0
        %v1897 = vadd.f32 0.0, %v1896
        %1898 = vmatmul.bf16.gmra.mxu0 %v1568
        %v1899 = vpop.f32.mrf.mxu0
        %v1900 = vadd.f32 0.0, %v1899
        %v1901 = vpop.f32.mrf.mxu0
        %v1902 = vadd.f32 0.0, %v1901
        %1903 = vmatmul.bf16.gmra.mxu0 %v1570
        %v1904 = vpop.f32.mrf.mxu0
        %v1905 = vadd.f32 0.0, %v1904
        %v1906 = vpop.f32.mrf.mxu0
        %v1907 = vadd.f32 0.0, %v1906
        %1908 = vmatmul.bf16.gmra.mxu0 %v1572
        %v1909 = vpop.f32.mrf.mxu0
        %v1910 = vadd.f32 0.0, %v1909
        %v1911 = vpop.f32.mrf.mxu0
        %v1912 = vadd.f32 0.0, %v1911
        %1913 = vdwg.mxu0
        %1914 = vmatpush.bf16.msra.mxu0 %v1734
        %1915 = vmatpush.bf16.msra.mxu0 %v1732
        %1916 = vmatpush.bf16.msra.mxu0 %v1730
        %1917 = vmatpush.bf16.msra.mxu0 %v1728
        %1918 = vmatpush.bf16.msra.mxu0 %v1726
        %1919 = vmatpush.bf16.msra.mxu0 %v1724
        %1920 = vmatpush.bf16.msra.mxu0 %v1722
        %1921 = vmatpush.bf16.msra.mxu0 %v1720
        %1922 = vmatmul.bf16.gmra.mxu0 %v1559
        %v1923 = vpop.f32.mrf.mxu0
        %v1924 = vadd.f32 %v1875, %v1923
        %v1925 = vpop.f32.mrf.mxu0
        %v1926 = vadd.f32 %v1877, %v1925
        %1927 = vmatmul.bf16.gmra.mxu0 %v1561
        %v1928 = vpop.f32.mrf.mxu0
        %v1929 = vadd.f32 %v1880, %v1928
        %v1930 = vpop.f32.mrf.mxu0
        %v1931 = vadd.f32 %v1882, %v1930
        %1932 = vmatmul.bf16.gmra.mxu0 %v1563
        %v1933 = vpop.f32.mrf.mxu0
        %v1934 = vadd.f32 %v1885, %v1933
        %v1935 = vpop.f32.mrf.mxu0
        %v1936 = vadd.f32 %v1887, %v1935
        %1937 = vmatmul.bf16.gmra.mxu0 %v1565
        %v1938 = vpop.f32.mrf.mxu0
        %v1939 = vadd.f32 %v1890, %v1938
        %v1940 = vpop.f32.mrf.mxu0
        %v1941 = vadd.f32 %v1892, %v1940
        %1942 = vmatmul.bf16.gmra.mxu0 %v1567
        %v1943 = vpop.f32.mrf.mxu0
        %v1944 = vadd.f32 %v1895, %v1943
        %v1945 = vpop.f32.mrf.mxu0
        %v1946 = vadd.f32 %v1897, %v1945
        %1947 = vmatmul.bf16.gmra.mxu0 %v1569
        %v1948 = vpop.f32.mrf.mxu0
        %v1949 = vadd.f32 %v1900, %v1948
        %v1950 = vpop.f32.mrf.mxu0
        %v1951 = vadd.f32 %v1902, %v1950
        %1952 = vmatmul.bf16.gmra.mxu0 %v1571
        %v1953 = vpop.f32.mrf.mxu0
        %v1954 = vadd.f32 %v1905, %v1953
        %v1955 = vpop.f32.mrf.mxu0
        %v1956 = vadd.f32 %v1907, %v1955
        %1957 = vmatmul.bf16.gmra.mxu0 %v1573
        %v1958 = vpop.f32.mrf.mxu0
        %v1959 = vadd.f32 %v1910, %v1958
        %v1960 = vpop.f32.mrf.mxu0
        %v1961 = vadd.f32 %v1912, %v1960
        %1962 = vdwg.mxu0
        %v1995 = vunpack.c.l.b16 %v767
        %v1996 = vunpack.c.h.b16 %v767
        %v1997 = vunpack.c.l.b16 %v768
        %v1998 = vunpack.c.h.b16 %v768
        %v1999 = vunpack.c.l.b16 %v769
        %v2000 = vunpack.c.h.b16 %v769
        %v2001 = vunpack.c.l.b16 %v770
        %v2002 = vunpack.c.h.b16 %v770
        %v2003 = vunpack.c.l.b16 %v771
        %v2004 = vunpack.c.h.b16 %v771
        %v2005 = vunpack.c.l.b16 %v772
        %v2006 = vunpack.c.h.b16 %v772
        %v2007 = vunpack.c.l.b16 %v773
        %v2008 = vunpack.c.h.b16 %v773
        %v2009 = vunpack.c.l.b16 %v774
        %v2010 = vunpack.c.h.b16 %v774
        %v2011 = vunpack.c.l.b16 %v775
        %v2012 = vunpack.c.h.b16 %v775
        %v2013 = vunpack.c.l.b16 %v776
        %v2014 = vunpack.c.h.b16 %v776
        %v2015 = vunpack.c.l.b16 %v777
        %v2016 = vunpack.c.h.b16 %v777
        %v2017 = vunpack.c.l.b16 %v778
        %v2018 = vunpack.c.h.b16 %v778
        %v2019 = vunpack.c.l.b16 %v779
        %v2020 = vunpack.c.h.b16 %v779
        %v2021 = vunpack.c.l.b16 %v780
        %v2022 = vunpack.c.h.b16 %v780
        %v2023 = vunpack.c.l.b16 %v781
        %v2024 = vunpack.c.h.b16 %v781
        %v2025 = vunpack.c.l.b16 %v782
        %v2026 = vunpack.c.h.b16 %v782
        %v2027 = vunpack.c.l.b16 %v783
        %v2028 = vunpack.c.h.b16 %v783
        %v2029 = vunpack.c.l.b16 %v784
        %v2030 = vunpack.c.h.b16 %v784
        %v2031 = vunpack.c.l.b16 %v785
        %v2032 = vunpack.c.h.b16 %v785
        %v2033 = vunpack.c.l.b16 %v786
        %v2034 = vunpack.c.h.b16 %v786
        %v2035 = vunpack.c.l.b16 %v787
        %v2036 = vunpack.c.h.b16 %v787
        %v2037 = vunpack.c.l.b16 %v788
        %v2038 = vunpack.c.h.b16 %v788
        %v2039 = vunpack.c.l.b16 %v789
        %v2040 = vunpack.c.h.b16 %v789
        %v2041 = vunpack.c.l.b16 %v790
        %v2042 = vunpack.c.h.b16 %v790
        %v2043 = vunpack.c.l.b16 %v791
        %v2044 = vunpack.c.h.b16 %v791
        %v2045 = vunpack.c.l.b16 %v792
        %v2046 = vunpack.c.h.b16 %v792
        %v2047 = vunpack.c.l.b16 %v793
        %v2048 = vunpack.c.h.b16 %v793
        %v2049 = vunpack.c.l.b16 %v794
        %v2050 = vunpack.c.h.b16 %v794
        %v2051 = vunpack.c.l.b16 %v795
        %v2052 = vunpack.c.h.b16 %v795
        %v2053 = vunpack.c.l.b16 %v796
        %v2054 = vunpack.c.h.b16 %v796
        %v2055 = vunpack.c.l.b16 %v797
        %v2056 = vunpack.c.h.b16 %v797
        %v2057 = vunpack.c.l.b16 %v798
        %v2058 = vunpack.c.h.b16 %v798
        %v2059 = vpack.c.b16 %v1997, %v1995
        %v2060 = vpack.c.b16 %v1998, %v1996
        %v2061 = vpack.c.b16 %v2001, %v1999
        %v2062 = vpack.c.b16 %v2002, %v2000
        %v2063 = vpack.c.b16 %v2005, %v2003
        %v2064 = vpack.c.b16 %v2006, %v2004
        %v2065 = vpack.c.b16 %v2009, %v2007
        %v2066 = vpack.c.b16 %v2010, %v2008
        %v2067 = vpack.c.b16 %v2013, %v2011
        %v2068 = vpack.c.b16 %v2014, %v2012
        %v2069 = vpack.c.b16 %v2017, %v2015
        %v2070 = vpack.c.b16 %v2018, %v2016
        %v2071 = vpack.c.b16 %v2021, %v2019
        %v2072 = vpack.c.b16 %v2022, %v2020
        %v2073 = vpack.c.b16 %v2025, %v2023
        %v2074 = vpack.c.b16 %v2026, %v2024
        %v2075 = vpack.c.b16 %v2029, %v2027
        %v2076 = vpack.c.b16 %v2030, %v2028
        %v2077 = vpack.c.b16 %v2033, %v2031
        %v2078 = vpack.c.b16 %v2034, %v2032
        %v2079 = vpack.c.b16 %v2037, %v2035
        %v2080 = vpack.c.b16 %v2038, %v2036
        %v2081 = vpack.c.b16 %v2041, %v2039
        %v2082 = vpack.c.b16 %v2042, %v2040
        %v2083 = vpack.c.b16 %v2045, %v2043
        %v2084 = vpack.c.b16 %v2046, %v2044
        %v2085 = vpack.c.b16 %v2049, %v2047
        %v2086 = vpack.c.b16 %v2050, %v2048
        %v2087 = vpack.c.b16 %v2053, %v2051
        %v2088 = vpack.c.b16 %v2054, %v2052
        %v2089 = vpack.c.b16 %v2057, %v2055
        %v2090 = vpack.c.b16 %v2058, %v2056
        %2123 = vmatpush.bf16.msra.mxu0 %v2073
        %2124 = vmatpush.bf16.msra.mxu0 %v2071
        %2125 = vmatpush.bf16.msra.mxu0 %v2069
        %2126 = vmatpush.bf16.msra.mxu0 %v2067
        %2127 = vmatpush.bf16.msra.mxu0 %v2065
        %2128 = vmatpush.bf16.msra.mxu0 %v2063
        %2129 = vmatpush.bf16.msra.mxu0 %v2061
        %2130 = vmatpush.bf16.msra.mxu0 %v2059
        %2131 = vmatmul.bf16.gmra.mxu0 %v751
        %v2132 = vpop.f32.mrf.mxu0
        %v2133 = vadd.f32 %v1826, %v2132
        %v2134 = vpop.f32.mrf.mxu0
        %v2135 = vadd.f32 %v1828, %v2134
        %2136 = vmatmul.bf16.gmra.mxu0 %v753
        %v2137 = vpop.f32.mrf.mxu0
        %v2138 = vadd.f32 %v1831, %v2137
        %v2139 = vpop.f32.mrf.mxu0
        %v2140 = vadd.f32 %v1833, %v2139
        %2141 = vmatmul.bf16.gmra.mxu0 %v755
        %v2142 = vpop.f32.mrf.mxu0
        %v2143 = vadd.f32 %v1836, %v2142
        %v2144 = vpop.f32.mrf.mxu0
        %v2145 = vadd.f32 %v1838, %v2144
        %2146 = vmatmul.bf16.gmra.mxu0 %v757
        %v2147 = vpop.f32.mrf.mxu0
        %v2148 = vadd.f32 %v1841, %v2147
        %v2149 = vpop.f32.mrf.mxu0
        %v2150 = vadd.f32 %v1843, %v2149
        %2151 = vmatmul.bf16.gmra.mxu0 %v759
        %v2152 = vpop.f32.mrf.mxu0
        %v2153 = vadd.f32 %v1846, %v2152
        %v2154 = vpop.f32.mrf.mxu0
        %v2155 = vadd.f32 %v1848, %v2154
        %2156 = vmatmul.bf16.gmra.mxu0 %v761
        %v2157 = vpop.f32.mrf.mxu0
        %v2158 = vadd.f32 %v1851, %v2157
        %v2159 = vpop.f32.mrf.mxu0
        %v2160 = vadd.f32 %v1853, %v2159
        %2161 = vmatmul.bf16.gmra.mxu0 %v763
        %v2162 = vpop.f32.mrf.mxu0
        %v2163 = vadd.f32 %v1856, %v2162
        %v2164 = vpop.f32.mrf.mxu0
        %v2165 = vadd.f32 %v1858, %v2164
        %2166 = vmatmul.bf16.gmra.mxu0 %v765
        %v2167 = vpop.f32.mrf.mxu0
        %v2168 = vadd.f32 %v1861, %v2167
        %v2169 = vpop.f32.mrf.mxu0
        %v2170 = vadd.f32 %v1863, %v2169
        %2171 = vdwg.mxu0
        %2172 = vmatpush.bf16.msra.mxu0 %v2089
        %2173 = vmatpush.bf16.msra.mxu0 %v2087
        %2174 = vmatpush.bf16.msra.mxu0 %v2085
        %2175 = vmatpush.bf16.msra.mxu0 %v2083
        %2176 = vmatpush.bf16.msra.mxu0 %v2081
        %2177 = vmatpush.bf16.msra.mxu0 %v2079
        %2178 = vmatpush.bf16.msra.mxu0 %v2077
        %2179 = vmatpush.bf16.msra.mxu0 %v2075
        %2180 = vmatmul.bf16.gmra.mxu0 %v752
        %v2181 = vpop.f32.mrf.mxu0
        %v2182 = vadd.f32 %v2133, %v2181
        %v2183 = vpop.f32.mrf.mxu0
        %v2184 = vadd.f32 %v2135, %v2183
        %2185 = vmatmul.bf16.gmra.mxu0 %v754
        %v2186 = vpop.f32.mrf.mxu0
        %v2187 = vadd.f32 %v2138, %v2186
        %v2188 = vpop.f32.mrf.mxu0
        %v2189 = vadd.f32 %v2140, %v2188
        %2190 = vmatmul.bf16.gmra.mxu0 %v756
        %v2191 = vpop.f32.mrf.mxu0
        %v2192 = vadd.f32 %v2143, %v2191
        %v2193 = vpop.f32.mrf.mxu0
        %v2194 = vadd.f32 %v2145, %v2193
        %2195 = vmatmul.bf16.gmra.mxu0 %v758
        %v2196 = vpop.f32.mrf.mxu0
        %v2197 = vadd.f32 %v2148, %v2196
        %v2198 = vpop.f32.mrf.mxu0
        %v2199 = vadd.f32 %v2150, %v2198
        %2200 = vmatmul.bf16.gmra.mxu0 %v760
        %v2201 = vpop.f32.mrf.mxu0
        %v2202 = vadd.f32 %v2153, %v2201
        %v2203 = vpop.f32.mrf.mxu0
        %v2204 = vadd.f32 %v2155, %v2203
        %2205 = vmatmul.bf16.gmra.mxu0 %v762
        %v2206 = vpop.f32.mrf.mxu0
        %v2207 = vadd.f32 %v2158, %v2206
        %v2208 = vpop.f32.mrf.mxu0
        %v2209 = vadd.f32 %v2160, %v2208
        %2210 = vmatmul.bf16.gmra.mxu0 %v764
        %v2211 = vpop.f32.mrf.mxu0
        %v2212 = vadd.f32 %v2163, %v2211
        %v2213 = vpop.f32.mrf.mxu0
        %v2214 = vadd.f32 %v2165, %v2213
        %2215 = vmatmul.bf16.gmra.mxu0 %v766
        %v2216 = vpop.f32.mrf.mxu0
        %v2217 = vadd.f32 %v2168, %v2216
        %v2218 = vpop.f32.mrf.mxu0
        %v2219 = vadd.f32 %v2170, %v2218
        %2220 = vdwg.mxu0
        %2221 = vmatpush.bf16.msra.mxu0 %v2074
        %2222 = vmatpush.bf16.msra.mxu0 %v2072
        %2223 = vmatpush.bf16.msra.mxu0 %v2070
        %2224 = vmatpush.bf16.msra.mxu0 %v2068
        %2225 = vmatpush.bf16.msra.mxu0 %v2066
        %2226 = vmatpush.bf16.msra.mxu0 %v2064
        %2227 = vmatpush.bf16.msra.mxu0 %v2062
        %2228 = vmatpush.bf16.msra.mxu0 %v2060
        %2229 = vmatmul.bf16.gmra.mxu0 %v751
        %v2230 = vpop.f32.mrf.mxu0
        %v2231 = vadd.f32 %v1924, %v2230
        %v2232 = vpop.f32.mrf.mxu0
        %v2233 = vadd.f32 %v1926, %v2232
        %2234 = vmatmul.bf16.gmra.mxu0 %v753
        %v2235 = vpop.f32.mrf.mxu0
        %v2236 = vadd.f32 %v1929, %v2235
        %v2237 = vpop.f32.mrf.mxu0
        %v2238 = vadd.f32 %v1931, %v2237
        %2239 = vmatmul.bf16.gmra.mxu0 %v755
        %v2240 = vpop.f32.mrf.mxu0
        %v2241 = vadd.f32 %v1934, %v2240
        %v2242 = vpop.f32.mrf.mxu0
        %v2243 = vadd.f32 %v1936, %v2242
        %2244 = vmatmul.bf16.gmra.mxu0 %v757
        %v2245 = vpop.f32.mrf.mxu0
        %v2246 = vadd.f32 %v1939, %v2245
        %v2247 = vpop.f32.mrf.mxu0
        %v2248 = vadd.f32 %v1941, %v2247
        %2249 = vmatmul.bf16.gmra.mxu0 %v759
        %v2250 = vpop.f32.mrf.mxu0
        %v2251 = vadd.f32 %v1944, %v2250
        %v2252 = vpop.f32.mrf.mxu0
        %v2253 = vadd.f32 %v1946, %v2252
        %2254 = vmatmul.bf16.gmra.mxu0 %v761
        %v2255 = vpop.f32.mrf.mxu0
        %v2256 = vadd.f32 %v1949, %v2255
        %v2257 = vpop.f32.mrf.mxu0
        %v2258 = vadd.f32 %v1951, %v2257
        %2259 = vmatmul.bf16.gmra.mxu0 %v763
        %v2260 = vpop.f32.mrf.mxu0
        %v2261 = vadd.f32 %v1954, %v2260
        %v2262 = vpop.f32.mrf.mxu0
        %v2263 = vadd.f32 %v1956, %v2262
        %2264 = vmatmul.bf16.gmra.mxu0 %v765
        %v2265 = vpop.f32.mrf.mxu0
        %v2266 = vadd.f32 %v1959, %v2265
        %v2267 = vpop.f32.mrf.mxu0
        %v2268 = vadd.f32 %v1961, %v2267
        %2269 = vdwg.mxu0
        %2270 = vmatpush.bf16.msra.mxu0 %v2090
        %2271 = vmatpush.bf16.msra.mxu0 %v2088
        %2272 = vmatpush.bf16.msra.mxu0 %v2086
        %2273 = vmatpush.bf16.msra.mxu0 %v2084
        %2274 = vmatpush.bf16.msra.mxu0 %v2082
        %2275 = vmatpush.bf16.msra.mxu0 %v2080
        %2276 = vmatpush.bf16.msra.mxu0 %v2078
        %2277 = vmatpush.bf16.msra.mxu0 %v2076
        %2278 = vmatmul.bf16.gmra.mxu0 %v752
        %v2279 = vpop.f32.mrf.mxu0
        %v2280 = vadd.f32 %v2231, %v2279
        %v2281 = vpop.f32.mrf.mxu0
        %v2282 = vadd.f32 %v2233, %v2281
        %2283 = vmatmul.bf16.gmra.mxu0 %v754
        %v2284 = vpop.f32.mrf.mxu0
        %v2285 = vadd.f32 %v2236, %v2284
        %v2286 = vpop.f32.mrf.mxu0
        %v2287 = vadd.f32 %v2238, %v2286
        %2288 = vmatmul.bf16.gmra.mxu0 %v756
        %v2289 = vpop.f32.mrf.mxu0
        %v2290 = vadd.f32 %v2241, %v2289
        %v2291 = vpop.f32.mrf.mxu0
        %v2292 = vadd.f32 %v2243, %v2291
        %2293 = vmatmul.bf16.gmra.mxu0 %v758
        %v2294 = vpop.f32.mrf.mxu0
        %v2295 = vadd.f32 %v2246, %v2294
        %v2296 = vpop.f32.mrf.mxu0
        %v2297 = vadd.f32 %v2248, %v2296
        %2298 = vmatmul.bf16.gmra.mxu0 %v760
        %v2299 = vpop.f32.mrf.mxu0
        %v2300 = vadd.f32 %v2251, %v2299
        %v2301 = vpop.f32.mrf.mxu0
        %v2302 = vadd.f32 %v2253, %v2301
        %2303 = vmatmul.bf16.gmra.mxu0 %v762
        %v2304 = vpop.f32.mrf.mxu0
        %v2305 = vadd.f32 %v2256, %v2304
        %v2306 = vpop.f32.mrf.mxu0
        %v2307 = vadd.f32 %v2258, %v2306
        %2308 = vmatmul.bf16.gmra.mxu0 %v764
        %v2309 = vpop.f32.mrf.mxu0
        %v2310 = vadd.f32 %v2261, %v2309
        %v2311 = vpop.f32.mrf.mxu0
        %v2312 = vadd.f32 %v2263, %v2311
        %2313 = vmatmul.bf16.gmra.mxu0 %v766
        %v2314 = vpop.f32.mrf.mxu0
        %v2315 = vadd.f32 %v2266, %v2314
        %v2316 = vpop.f32.mrf.mxu0
        %v2317 = vadd.f32 %v2268, %v2316
        %2318 = vdwg.mxu0
        %vm2319 = vsmask.f32 3328
        %vm2320 = vsmask.f32 7440
        %vm2321 = vmor %vm2319, %vm2320
        %v2323 = vshrl.u32 %v290, 16
        %v2325 = vrot.slane %v2323, 4
        %v2326 = vshll.u32 %v290, 16
        %v2328 = vrot.slane %v2326, 5
        %v2329 = vor.u32 %v2325, %v2328
        %v2330 = vrot.slane %v2329, 4
        %v2332 = vshll.u32 %v291, 16
        %v2334 = vrot.slane %v2332, 5
        %v2335 = vsel %vm2321, %v2330, %v2334
        %v2336 = vshrl.u32 %v291, 16
        %v2338 = vrot.slane %v2336, 4
        %v2339 = vor.u32 %v2338, %v2334
        %v2340 = vrot.slane %v2339, 4
        %v2342 = vshll.u32 %v292, 16
        %v2344 = vrot.slane %v2342, 5
        %v2345 = vsel %vm2321, %v2340, %v2344
        %v2346 = vrot.slane %v883, 4
        %v2347 = vrot.slane %v886, 5
        %v2348 = vor.u32 %v2346, %v2347
        %v2349 = vrot.slane %v2348, 4
        %v2350 = vrot.slane %v895, 5
        %v2351 = vsel %vm2321, %v2349, %v2350
        %v2352 = vrot.slane %v892, 4
        %v2353 = vor.u32 %v2352, %v2350
        %v2354 = vrot.slane %v2353, 4
        %v2355 = vrot.slane %v905, 5
        %v2356 = vsel %vm2321, %v2354, %v2355
        %v2357 = vrot.slane %v333, 4
        %v2358 = vrot.slane %v336, 5
        %v2359 = vor.u32 %v2357, %v2358
        %v2360 = vrot.slane %v2359, 4
        %v2361 = vrot.slane %v345, 5
        %v2362 = vsel %vm2321, %v2360, %v2361
        %v2363 = vrot.slane %v342, 4
        %v2364 = vor.u32 %v2363, %v2361
        %v2365 = vrot.slane %v2364, 4
        %v2366 = vrot.slane %v355, 5
        %v2367 = vsel %vm2321, %v2365, %v2366
        %v2368 = vrot.slane %v361, 4
        %v2369 = vrot.slane %v364, 5
        %v2370 = vor.u32 %v2368, %v2369
        %v2371 = vrot.slane %v2370, 4
        %v2372 = vrot.slane %v373, 5
        %v2373 = vsel %vm2321, %v2371, %v2372
        %v2374 = vrot.slane %v370, 4
        %v2375 = vor.u32 %v2374, %v2372
        %v2376 = vrot.slane %v2375, 4
        %v2377 = vrot.slane %v383, 5
        %v2378 = vsel %vm2321, %v2376, %v2377
        %v2379 = vrot.slane %v389, 4
        %v2380 = vrot.slane %v392, 5
        %v2381 = vor.u32 %v2379, %v2380
        %v2382 = vrot.slane %v2381, 4
        %v2383 = vrot.slane %v401, 5
        %v2384 = vsel %vm2321, %v2382, %v2383
        %v2385 = vrot.slane %v398, 4
        %v2386 = vor.u32 %v2385, %v2383
        %v2387 = vrot.slane %v2386, 4
        %v2388 = vrot.slane %v411, 5
        %v2389 = vsel %vm2321, %v2387, %v2388
        %v2390 = vrot.slane %v417, 4
        %v2391 = vrot.slane %v420, 5
        %v2392 = vor.u32 %v2390, %v2391
        %v2393 = vrot.slane %v2392, 4
        %v2394 = vrot.slane %v429, 5
        %v2395 = vsel %vm2321, %v2393, %v2394
        %v2396 = vrot.slane %v426, 4
        %v2397 = vor.u32 %v2396, %v2394
        %v2398 = vrot.slane %v2397, 4
        %v2399 = vrot.slane %v439, 5
        %v2400 = vsel %vm2321, %v2398, %v2399
        %v2401 = vrot.slane %v445, 4
        %v2402 = vrot.slane %v448, 5
        %v2403 = vor.u32 %v2401, %v2402
        %v2404 = vrot.slane %v2403, 4
        %v2405 = vrot.slane %v457, 5
        %v2406 = vsel %vm2321, %v2404, %v2405
        %v2407 = vrot.slane %v454, 4
        %v2408 = vor.u32 %v2407, %v2405
        %v2409 = vrot.slane %v2408, 4
        %v2410 = vrot.slane %v467, 5
        %v2411 = vsel %vm2321, %v2409, %v2410
        %v2412 = vrot.slane %v473, 4
        %v2413 = vrot.slane %v476, 5
        %v2414 = vor.u32 %v2412, %v2413
        %v2415 = vrot.slane %v2414, 4
        %v2416 = vrot.slane %v485, 5
        %v2417 = vsel %vm2321, %v2415, %v2416
        %v2418 = vrot.slane %v482, 4
        %v2419 = vor.u32 %v2418, %v2416
        %v2420 = vrot.slane %v2419, 4
        %v2421 = vrot.slane %v495, 5
        %v2422 = vsel %vm2321, %v2420, %v2421
        %v2423 = vrot.slane %v2323, 5
        %v2424 = vrot.slane %v2326, 6
        %v2425 = vor.u32 %v2423, %v2424
        %v2426 = vrot.slane %v2425, 4
        %v2427 = vrot.slane %v2336, 5
        %v2428 = vrot.slane %v2332, 6
        %v2429 = vor.u32 %v2427, %v2428
        %v2430 = vsel %vm331, %v2426, %v2429
        %v2431 = vrot.slane %v2429, 4
        %v2432 = vshrl.u32 %v292, 16
        %v2434 = vrot.slane %v2432, 5
        %v2435 = vrot.slane %v2342, 6
        %v2436 = vor.u32 %v2434, %v2435
        %v2437 = vsel %vm331, %v2431, %v2436
        %vm2438 = vsmask.f32 1280
        %vm2439 = vsmask.f32 5392
        %vm2440 = vmor %vm2438, %vm2439
        %v2441 = vrot.slane %v2323, 6
        %v2442 = vrot.slane %v2326, 7
        %v2443 = vor.u32 %v2441, %v2442
        %v2444 = vrot.slane %v2443, 4
        %v2445 = vrot.slane %v2336, 6
        %v2446 = vrot.slane %v2332, 7
        %v2447 = vor.u32 %v2445, %v2446
        %v2448 = vsel %vm2440, %v2444, %v2447
        %v2449 = vrot.slane %v2447, 4
        %v2450 = vrot.slane %v2432, 6
        %v2451 = vrot.slane %v2342, 7
        %v2452 = vor.u32 %v2450, %v2451
        %v2453 = vsel %vm2440, %v2449, %v2452
        %v2454 = vrot.slane %v883, 6
        %v2455 = vrot.slane %v886, 7
        %v2456 = vor.u32 %v2454, %v2455
        %v2457 = vrot.slane %v2456, 4
        %v2458 = vrot.slane %v892, 6
        %v2459 = vrot.slane %v895, 7
        %v2460 = vor.u32 %v2458, %v2459
        %v2461 = vsel %vm2440, %v2457, %v2460
        %v2462 = vrot.slane %v2460, 4
        %v2463 = vrot.slane %v902, 6
        %v2464 = vrot.slane %v905, 7
        %v2465 = vor.u32 %v2463, %v2464
        %v2466 = vsel %vm2440, %v2462, %v2465
        %v2467 = vrot.slane %v333, 6
        %v2468 = vrot.slane %v336, 7
        %v2469 = vor.u32 %v2467, %v2468
        %v2470 = vrot.slane %v2469, 4
        %v2471 = vrot.slane %v342, 6
        %v2472 = vrot.slane %v345, 7
        %v2473 = vor.u32 %v2471, %v2472
        %v2474 = vsel %vm2440, %v2470, %v2473
        %v2475 = vrot.slane %v2473, 4
        %v2476 = vrot.slane %v352, 6
        %v2477 = vrot.slane %v355, 7
        %v2478 = vor.u32 %v2476, %v2477
        %v2479 = vsel %vm2440, %v2475, %v2478
        %v2480 = vrot.slane %v361, 6
        %v2481 = vrot.slane %v364, 7
        %v2482 = vor.u32 %v2480, %v2481
        %v2483 = vrot.slane %v2482, 4
        %v2484 = vrot.slane %v370, 6
        %v2485 = vrot.slane %v373, 7
        %v2486 = vor.u32 %v2484, %v2485
        %v2487 = vsel %vm2440, %v2483, %v2486
        %v2488 = vrot.slane %v2486, 4
        %v2489 = vrot.slane %v380, 6
        %v2490 = vrot.slane %v383, 7
        %v2491 = vor.u32 %v2489, %v2490
        %v2492 = vsel %vm2440, %v2488, %v2491
        %v2493 = vrot.slane %v389, 6
        %v2494 = vrot.slane %v392, 7
        %v2495 = vor.u32 %v2493, %v2494
        %v2496 = vrot.slane %v2495, 4
        %v2497 = vrot.slane %v398, 6
        %v2498 = vrot.slane %v401, 7
        %v2499 = vor.u32 %v2497, %v2498
        %v2500 = vsel %vm2440, %v2496, %v2499
        %v2501 = vrot.slane %v2499, 4
        %v2502 = vrot.slane %v408, 6
        %v2503 = vrot.slane %v411, 7
        %v2504 = vor.u32 %v2502, %v2503
        %v2505 = vsel %vm2440, %v2501, %v2504
        %v2506 = vrot.slane %v417, 6
        %v2507 = vrot.slane %v420, 7
        %v2508 = vor.u32 %v2506, %v2507
        %v2509 = vrot.slane %v2508, 4
        %v2510 = vrot.slane %v426, 6
        %v2511 = vrot.slane %v429, 7
        %v2512 = vor.u32 %v2510, %v2511
        %v2513 = vsel %vm2440, %v2509, %v2512
        %v2514 = vrot.slane %v2512, 4
        %v2515 = vrot.slane %v436, 6
        %v2516 = vrot.slane %v439, 7
        %v2517 = vor.u32 %v2515, %v2516
        %v2518 = vsel %vm2440, %v2514, %v2517
        %v2519 = vrot.slane %v445, 6
        %v2520 = vrot.slane %v448, 7
        %v2521 = vor.u32 %v2519, %v2520
        %v2522 = vrot.slane %v2521, 4
        %v2523 = vrot.slane %v454, 6
        %v2524 = vrot.slane %v457, 7
        %v2525 = vor.u32 %v2523, %v2524
        %v2526 = vsel %vm2440, %v2522, %v2525
        %v2527 = vrot.slane %v2525, 4
        %v2528 = vrot.slane %v464, 6
        %v2529 = vrot.slane %v467, 7
        %v2530 = vor.u32 %v2528, %v2529
        %v2531 = vsel %vm2440, %v2527, %v2530
        %v2532 = vrot.slane %v473, 6
        %v2533 = vrot.slane %v476, 7
        %v2534 = vor.u32 %v2532, %v2533
        %v2535 = vrot.slane %v2534, 4
        %v2536 = vrot.slane %v482, 6
        %v2537 = vrot.slane %v485, 7
        %v2538 = vor.u32 %v2536, %v2537
        %v2539 = vsel %vm2440, %v2535, %v2538
        %v2540 = vrot.slane %v2538, 4
        %v2541 = vrot.slane %v492, 6
        %v2542 = vrot.slane %v495, 7
        %v2543 = vor.u32 %v2541, %v2542
        %v2544 = vsel %vm2440, %v2540, %v2543
        %v2545 = vrot.slane %v501, 4
        %v2546 = vrot.slane %v504, 5
        %v2547 = vor.u32 %v2545, %v2546
        %v2548 = vrot.slane %v2547, 4
        %v2549 = vrot.slane %v513, 5
        %v2550 = vsel %vm2321, %v2548, %v2549
        %v2551 = vrot.slane %v510, 4
        %v2552 = vor.u32 %v2551, %v2549
        %v2553 = vrot.slane %v2552, 4
        %v2554 = vrot.slane %v523, 5
        %v2555 = vsel %vm2321, %v2553, %v2554
        %v2556 = vrot.slane %v529, 4
        %v2557 = vrot.slane %v532, 5
        %v2558 = vor.u32 %v2556, %v2557
        %v2559 = vrot.slane %v2558, 4
        %v2560 = vrot.slane %v541, 5
        %v2561 = vsel %vm2321, %v2559, %v2560
        %v2562 = vrot.slane %v538, 4
        %v2563 = vor.u32 %v2562, %v2560
        %v2564 = vrot.slane %v2563, 4
        %v2565 = vrot.slane %v551, 5
        %v2566 = vsel %vm2321, %v2564, %v2565
        %v2567 = vrot.slane %v501, 6
        %v2568 = vrot.slane %v504, 7
        %v2569 = vor.u32 %v2567, %v2568
        %v2570 = vrot.slane %v2569, 4
        %v2571 = vrot.slane %v510, 6
        %v2572 = vrot.slane %v513, 7
        %v2573 = vor.u32 %v2571, %v2572
        %v2574 = vsel %vm2440, %v2570, %v2573
        %v2575 = vrot.slane %v2573, 4
        %v2576 = vrot.slane %v520, 6
        %v2577 = vrot.slane %v523, 7
        %v2578 = vor.u32 %v2576, %v2577
        %v2579 = vsel %vm2440, %v2575, %v2578
        %v2580 = vrot.slane %v529, 6
        %v2581 = vrot.slane %v532, 7
        %v2582 = vor.u32 %v2580, %v2581
        %v2583 = vrot.slane %v2582, 4
        %v2584 = vrot.slane %v538, 6
        %v2585 = vrot.slane %v541, 7
        %v2586 = vor.u32 %v2584, %v2585
        %v2587 = vsel %vm2440, %v2583, %v2586
        %v2588 = vrot.slane %v2586, 4
        %v2589 = vrot.slane %v548, 6
        %v2590 = vrot.slane %v551, 7
        %v2591 = vor.u32 %v2589, %v2590
        %v2592 = vsel %vm2440, %v2588, %v2591
        %v2593 = vrot.slane %v997, 4
        %v2594 = vrot.slane %v1000, 5
        %v2595 = vor.u32 %v2593, %v2594
        %v2596 = vrot.slane %v2595, 4
        %v2597 = vrot.slane %v1009, 5
        %v2598 = vsel %vm2321, %v2596, %v2597
        %v2599 = vrot.slane %v1006, 4
        %v2600 = vor.u32 %v2599, %v2597
        %v2601 = vrot.slane %v2600, 4
        %v2602 = vrot.slane %v1019, 5
        %v2603 = vsel %vm2321, %v2601, %v2602
        %v2605 = vshrl.u32 %v323, 16
        %v2607 = vrot.slane %v2605, 4
        %v2608 = vshll.u32 %v323, 16
        %v2610 = vrot.slane %v2608, 5
        %v2611 = vor.u32 %v2607, %v2610
        %v2612 = vrot.slane %v2611, 4
        %v2614 = vshll.u32 %v324, 16
        %v2616 = vrot.slane %v2614, 5
        %v2617 = vsel %vm2321, %v2612, %v2616
        %v2618 = vshrl.u32 %v324, 16
        %v2620 = vrot.slane %v2618, 4
        %v2621 = vor.u32 %v2620, %v2616
        %v2622 = vrot.slane %v2621, 4
        %v2624 = vshll.u32 %v325, 16
        %v2626 = vrot.slane %v2624, 5
        %v2627 = vsel %vm2321, %v2622, %v2626
        %v2628 = vrot.slane %v2605, 5
        %v2629 = vrot.slane %v2608, 6
        %v2630 = vor.u32 %v2628, %v2629
        %v2631 = vrot.slane %v2630, 4
        %v2632 = vrot.slane %v2618, 5
        %v2633 = vrot.slane %v2614, 6
        %v2634 = vor.u32 %v2632, %v2633
        %v2635 = vsel %vm331, %v2631, %v2634
        %v2636 = vrot.slane %v2634, 4
        %v2637 = vshrl.u32 %v325, 16
        %v2639 = vrot.slane %v2637, 5
        %v2640 = vrot.slane %v2624, 6
        %v2641 = vor.u32 %v2639, %v2640
        %v2642 = vsel %vm331, %v2636, %v2641
        %v2643 = vrot.slane %v997, 6
        %v2644 = vrot.slane %v1000, 7
        %v2645 = vor.u32 %v2643, %v2644
        %v2646 = vrot.slane %v2645, 4
        %v2647 = vrot.slane %v1006, 6
        %v2648 = vrot.slane %v1009, 7
        %v2649 = vor.u32 %v2647, %v2648
        %v2650 = vsel %vm2440, %v2646, %v2649
        %v2651 = vrot.slane %v2649, 4
        %v2652 = vrot.slane %v1016, 6
        %v2653 = vrot.slane %v1019, 7
        %v2654 = vor.u32 %v2652, %v2653
        %v2655 = vsel %vm2440, %v2651, %v2654
        %v2656 = vrot.slane %v2605, 6
        %v2657 = vrot.slane %v2608, 7
        %v2658 = vor.u32 %v2656, %v2657
        %v2659 = vrot.slane %v2658, 4
        %v2660 = vrot.slane %v2618, 6
        %v2661 = vrot.slane %v2614, 7
        %v2662 = vor.u32 %v2660, %v2661
        %v2663 = vsel %vm2440, %v2659, %v2662
        %v2664 = vrot.slane %v2662, 4
        %v2665 = vrot.slane %v2637, 6
        %v2666 = vrot.slane %v2624, 7
        %v2667 = vor.u32 %v2665, %v2666
        %v2668 = vsel %vm2440, %v2664, %v2667
        %v2669 = vunpack.c.l.b16 %v2335
        %v2670 = vunpack.c.l.b16 %v2345
        %v2671 = vunpack.c.l.b16 %v2351
        %v2672 = vunpack.c.l.b16 %v2356
        %v2673 = vunpack.c.l.b16 %v2362
        %v2674 = vunpack.c.l.b16 %v2367
        %v2675 = vunpack.c.l.b16 %v2373
        %v2676 = vunpack.c.l.b16 %v2378
        %v2677 = vunpack.c.l.b16 %v2384
        %v2678 = vunpack.c.l.b16 %v2389
        %v2679 = vunpack.c.l.b16 %v2395
        %v2680 = vunpack.c.l.b16 %v2400
        %v2681 = vunpack.c.l.b16 %v2406
        %v2682 = vunpack.c.l.b16 %v2411
        %v2683 = vunpack.c.l.b16 %v2417
        %v2684 = vunpack.c.l.b16 %v2422
        %v2685 = vpack.c.b16 %v2670, %v2669
        %v2686 = vpack.c.b16 %v2672, %v2671
        %v2687 = vpack.c.b16 %v2674, %v2673
        %v2688 = vpack.c.b16 %v2676, %v2675
        %v2689 = vpack.c.b16 %v2678, %v2677
        %v2690 = vpack.c.b16 %v2680, %v2679
        %v2691 = vpack.c.b16 %v2682, %v2681
        %v2692 = vpack.c.b16 %v2684, %v2683
        %v2693 = vunpack.c.l.b16 %v2430
        %v2694 = vunpack.c.l.b16 %v2437
        %v2695 = vpack.c.b16 %v2694, %v2693
        %2696 = vrot.lane.b32.xlu0 %v2695, 4
        %v2697 = vpop.permute.xlu0 %2696
        %v2698 = vunpack.c.l.b16 %v2448
        %v2699 = vunpack.c.l.b16 %v2453
        %v2700 = vunpack.c.l.b16 %v2461
        %v2701 = vunpack.c.l.b16 %v2466
        %v2702 = vunpack.c.l.b16 %v2474
        %v2703 = vunpack.c.l.b16 %v2479
        %v2704 = vunpack.c.l.b16 %v2487
        %v2705 = vunpack.c.l.b16 %v2492
        %v2706 = vunpack.c.l.b16 %v2500
        %v2707 = vunpack.c.l.b16 %v2505
        %v2708 = vunpack.c.l.b16 %v2513
        %v2709 = vunpack.c.l.b16 %v2518
        %v2710 = vunpack.c.l.b16 %v2526
        %v2711 = vunpack.c.l.b16 %v2531
        %v2712 = vunpack.c.l.b16 %v2539
        %v2713 = vunpack.c.l.b16 %v2544
        %v2714 = vpack.c.b16 %v2699, %v2698
        %v2715 = vpack.c.b16 %v2701, %v2700
        %v2716 = vpack.c.b16 %v2703, %v2702
        %v2717 = vpack.c.b16 %v2705, %v2704
        %v2718 = vpack.c.b16 %v2707, %v2706
        %v2719 = vpack.c.b16 %v2709, %v2708
        %v2720 = vpack.c.b16 %v2711, %v2710
        %v2721 = vpack.c.b16 %v2713, %v2712
        %2722 = vrot.lane.b32.xlu0 %v2714, 8
        %v2723 = vpop.permute.xlu0 %2722
        %2724 = vrot.lane.b32.xlu0 %v2715, 8
        %v2725 = vpop.permute.xlu0 %2724
        %2726 = vrot.lane.b32.xlu0 %v2716, 8
        %v2727 = vpop.permute.xlu0 %2726
        %2728 = vrot.lane.b32.xlu0 %v2717, 8
        %v2729 = vpop.permute.xlu0 %2728
        %2730 = vrot.lane.b32.xlu0 %v2718, 8
        %v2731 = vpop.permute.xlu0 %2730
        %2732 = vrot.lane.b32.xlu0 %v2719, 8
        %v2733 = vpop.permute.xlu0 %2732
        %2734 = vrot.lane.b32.xlu0 %v2720, 8
        %v2735 = vpop.permute.xlu0 %2734
        %2736 = vrot.lane.b32.xlu0 %v2721, 8
        %v2737 = vpop.permute.xlu0 %2736
        %v2738 = vunpack.c.l.b16 %v2550
        %v2739 = vunpack.c.l.b16 %v2555
        %v2740 = vunpack.c.l.b16 %v2561
        %v2741 = vunpack.c.l.b16 %v2566
        %v2742 = vpack.c.b16 %v2739, %v2738
        %v2743 = vpack.c.b16 %v2741, %v2740
        %2744 = vrot.lane.b32.xlu0 %v2687, 12
        %v2745 = vpop.permute.xlu0 %2744
        %2746 = vrot.lane.b32.xlu0 %v2688, 12
        %v2747 = vpop.permute.xlu0 %2746
        %2748 = vrot.lane.b32.xlu0 %v2689, 12
        %v2749 = vpop.permute.xlu0 %2748
        %2750 = vrot.lane.b32.xlu0 %v2690, 12
        %v2751 = vpop.permute.xlu0 %2750
        %2752 = vrot.lane.b32.xlu0 %v2691, 12
        %v2753 = vpop.permute.xlu0 %2752
        %2754 = vrot.lane.b32.xlu0 %v2692, 12
        %v2755 = vpop.permute.xlu0 %2754
        %2756 = vrot.lane.b32.xlu0 %v2742, 12
        %v2757 = vpop.permute.xlu0 %2756
        %2758 = vrot.lane.b32.xlu0 %v2743, 12
        %v2759 = vpop.permute.xlu0 %2758
        %v2760 = vunpack.c.l.b16 %v2574
        %v2761 = vunpack.c.l.b16 %v2579
        %v2762 = vunpack.c.l.b16 %v2587
        %v2763 = vunpack.c.l.b16 %v2592
        %v2764 = vpack.c.b16 %v2761, %v2760
        %v2765 = vpack.c.b16 %v2763, %v2762
        %2766 = vrot.lane.b32.xlu0 %v2716, 20
        %v2767 = vpop.permute.xlu0 %2766
        %2768 = vrot.lane.b32.xlu0 %v2717, 20
        %v2769 = vpop.permute.xlu0 %2768
        %2770 = vrot.lane.b32.xlu0 %v2718, 20
        %v2771 = vpop.permute.xlu0 %2770
        %2772 = vrot.lane.b32.xlu0 %v2719, 20
        %v2773 = vpop.permute.xlu0 %2772
        %2774 = vrot.lane.b32.xlu0 %v2720, 20
        %v2775 = vpop.permute.xlu0 %2774
        %2776 = vrot.lane.b32.xlu0 %v2721, 20
        %v2777 = vpop.permute.xlu0 %2776
        %2778 = vrot.lane.b32.xlu0 %v2764, 20
        %v2779 = vpop.permute.xlu0 %2778
        %2780 = vrot.lane.b32.xlu0 %v2765, 20
        %v2781 = vpop.permute.xlu0 %2780
        %v2782 = vunpack.c.l.b16 %v2598
        %v2783 = vunpack.c.l.b16 %v2603
        %v2784 = vunpack.c.l.b16 %v2617
        %v2785 = vunpack.c.l.b16 %v2627
        %v2786 = vpack.c.b16 %v2783, %v2782
        %v2787 = vpack.c.b16 %v2785, %v2784
        %2788 = vrot.lane.b32.xlu0 %v2689, 24
        %v2789 = vpop.permute.xlu0 %2788
        %2790 = vrot.lane.b32.xlu0 %v2690, 24
        %v2791 = vpop.permute.xlu0 %2790
        %2792 = vrot.lane.b32.xlu0 %v2691, 24
        %v2793 = vpop.permute.xlu0 %2792
        %2794 = vrot.lane.b32.xlu0 %v2692, 24
        %v2795 = vpop.permute.xlu0 %2794
        %2796 = vrot.lane.b32.xlu0 %v2742, 24
        %v2797 = vpop.permute.xlu0 %2796
        %2798 = vrot.lane.b32.xlu0 %v2743, 24
        %v2799 = vpop.permute.xlu0 %2798
        %2800 = vrot.lane.b32.xlu0 %v2786, 24
        %v2801 = vpop.permute.xlu0 %2800
        %2802 = vrot.lane.b32.xlu0 %v2787, 24
        %v2803 = vpop.permute.xlu0 %2802
        %v2804 = vunpack.c.l.b16 %v2635
        %v2805 = vunpack.c.l.b16 %v2642
        %v2806 = vpack.c.b16 %v2805, %v2804
        %2807 = vrot.lane.b32.xlu0 %v2806, 28
        %v2808 = vpop.permute.xlu0 %2807
        %v2809 = vunpack.c.l.b16 %v2650
        %v2810 = vunpack.c.l.b16 %v2655
        %v2811 = vunpack.c.l.b16 %v2663
        %v2812 = vunpack.c.l.b16 %v2668
        %v2813 = vpack.c.b16 %v2810, %v2809
        %v2814 = vpack.c.b16 %v2812, %v2811
        %2815 = vrot.lane.b32.xlu0 %v2718, 32
        %v2816 = vpop.permute.xlu0 %2815
        %2817 = vrot.lane.b32.xlu0 %v2719, 32
        %v2818 = vpop.permute.xlu0 %2817
        %2819 = vrot.lane.b32.xlu0 %v2720, 32
        %v2820 = vpop.permute.xlu0 %2819
        %2821 = vrot.lane.b32.xlu0 %v2721, 32
        %v2822 = vpop.permute.xlu0 %2821
        %2823 = vrot.lane.b32.xlu0 %v2764, 32
        %v2824 = vpop.permute.xlu0 %2823
        %2825 = vrot.lane.b32.xlu0 %v2765, 32
        %v2826 = vpop.permute.xlu0 %2825
        %2827 = vrot.lane.b32.xlu0 %v2813, 32
        %v2828 = vpop.permute.xlu0 %2827
        %2829 = vrot.lane.b32.xlu0 %v2814, 32
        %v2830 = vpop.permute.xlu0 %2829
        %v2833 = vsel %vm591, %v2685, %v2697
        %v2835 = vsel %vm591, %v2686, %v1059
        %v2837 = vsel %vm591, %v2687, %v1061
        %v2839 = vsel %vm591, %v2688, %v1063
        %v2841 = vsel %vm591, %v2689, %v1065
        %v2843 = vsel %vm591, %v2690, %v1067
        %v2845 = vsel %vm591, %v2691, %v1069
        %v2847 = vsel %vm591, %v2692, %v1071
        %v2849 = vsel %vm1249, %v2833, %v2723
        %v2851 = vsel %vm1249, %v2835, %v2725
        %v2853 = vsel %vm1249, %v2837, %v2727
        %v2855 = vsel %vm1249, %v2839, %v2729
        %v2857 = vsel %vm1249, %v2841, %v2731
        %v2859 = vsel %vm1249, %v2843, %v2733
        %v2861 = vsel %vm1249, %v2845, %v2735
        %v2863 = vsel %vm1249, %v2847, %v2737
        %v2865 = vsel %vm1266, %v2849, %v2745
        %v2867 = vsel %vm1266, %v2851, %v2747
        %v2869 = vsel %vm1266, %v2853, %v2749
        %v2871 = vsel %vm1266, %v2855, %v2751
        %v2873 = vsel %vm1266, %v2857, %v2753
        %v2875 = vsel %vm1266, %v2859, %v2755
        %v2877 = vsel %vm1266, %v2861, %v2757
        %v2879 = vsel %vm1266, %v2863, %v2759
        %v2880 = vsel %vm1283, %v2865, %v1134
        %v2881 = vsel %vm1283, %v2867, %v1136
        %v2882 = vsel %vm1283, %v2869, %v1138
        %v2883 = vsel %vm1283, %v2871, %v1140
        %v2884 = vsel %vm1283, %v2873, %v1142
        %v2885 = vsel %vm1283, %v2875, %v1144
        %v2886 = vsel %vm1283, %v2877, %v1146
        %v2887 = vsel %vm1283, %v2879, %v1148
        %v2889 = vsel %vm1300, %v2880, %v2767
        %v2891 = vsel %vm1300, %v2881, %v2769
        %v2893 = vsel %vm1300, %v2882, %v2771
        %v2895 = vsel %vm1300, %v2883, %v2773
        %v2897 = vsel %vm1300, %v2884, %v2775
        %v2899 = vsel %vm1300, %v2885, %v2777
        %v2901 = vsel %vm1300, %v2886, %v2779
        %v2903 = vsel %vm1300, %v2887, %v2781
        %v2905 = vsel %vm1317, %v2889, %v2789
        %v2907 = vsel %vm1317, %v2891, %v2791
        %v2909 = vsel %vm1317, %v2893, %v2793
        %v2911 = vsel %vm1317, %v2895, %v2795
        %v2913 = vsel %vm1317, %v2897, %v2797
        %v2915 = vsel %vm1317, %v2899, %v2799
        %v2917 = vsel %vm1317, %v2901, %v2801
        %v2919 = vsel %vm1317, %v2903, %v2803
        %v2920 = vsel %vm1334, %v2905, %v1193
        %v2921 = vsel %vm1334, %v2907, %v1195
        %v2922 = vsel %vm1334, %v2909, %v1197
        %v2923 = vsel %vm1334, %v2911, %v1199
        %v2924 = vsel %vm1334, %v2913, %v1201
        %v2925 = vsel %vm1334, %v2915, %v1203
        %v2926 = vsel %vm1334, %v2917, %v1205
        %v2928 = vsel %vm1334, %v2919, %v2808
        %v2930 = vsel %vm1351, %v2920, %v2816
        %v2932 = vsel %vm1351, %v2921, %v2818
        %v2934 = vsel %vm1351, %v2922, %v2820
        %v2936 = vsel %vm1351, %v2923, %v2822
        %v2938 = vsel %vm1351, %v2924, %v2824
        %v2940 = vsel %vm1351, %v2925, %v2826
        %v2942 = vsel %vm1351, %v2926, %v2828
        %v2944 = vsel %vm1351, %v2928, %v2830
        %s2945 = scalar_lea.vmem %s2, 40
        %v2946 = vld [vmem:[%s2945] sm:$0xff]
        %v2947 = vld [vmem:[%s2945 + $0x8] sm:$0xff]
        %v2948 = vld [vmem:[%s2945 + $0x10] sm:$0xff]
        %v2949 = vld [vmem:[%s2945 + $0x18] sm:$0xff]
        %v2950 = vld [vmem:[%s2945 + $0x20] sm:$0x33]
        %s2951 = scalar_lea.vmem %s3, 2
        %v2952 = vld [vmem:[%s2951] ss:$4 sm:$0x3]
        %v2954 = vperm.slane %v2952, 0
        %v2955 = vperm.slane %v2952, 1
        %v2963 = vunpack.c.l.b16 %v2946
        %v2964 = vunpack.c.h.b16 %v2946
        %v2965 = vunpack.c.l.b16 %v2947
        %v2966 = vunpack.c.h.b16 %v2947
        %v2967 = vunpack.c.l.b16 %v2948
        %v2968 = vunpack.c.h.b16 %v2948
        %v2969 = vunpack.c.l.b16 %v2949
        %v2970 = vunpack.c.h.b16 %v2949
        %v2971 = vunpack.c.l.b16 %v2950
        %v2972 = vunpack.c.h.b16 %v2950
        %v2973 = vpack.c.b16 %v2965, %v2963
        %v2974 = vpack.c.b16 %v2966, %v2964
        %v2975 = vpack.c.b16 %v2969, %v2967
        %v2976 = vpack.c.b16 %v2970, %v2968
        %v2977 = vpack.c.b16 %v2971, %v2971
        %v2978 = vpack.c.b16 %v2972, %v2972
        %v2983 = vsel %vm1405, %v2930, 0
        %v2985 = vsel %vm1405, %v2932, 0
        %v2987 = vsel %vm1405, %v2934, 0
        %v2989 = vsel %vm1405, %v2936, 0
        %v2991 = vsel %vm1405, %v2938, 0
        %v2993 = vsel %vm1405, %v2940, 0
        %v2995 = vsel %vm1405, %v2942, 0
        %v2997 = vsel %vm1405, %v2944, 0
        %v3000 = vsel %vm616, %v2977, 0
        %v3003 = vsel %vm616, %v2978, 0
        %3005 = vmatpush.bf16.msra.mxu0 0
        %3006 = vmatpush.bf16.msra.mxu0 0
        %3007 = vmatpush.bf16.msra.mxu0 0
        %3008 = vmatpush.bf16.msra.mxu0 0
        %3009 = vmatpush.bf16.msra.mxu0 0
        %3010 = vmatpush.bf16.msra.mxu0 %v3000
        %3011 = vmatpush.bf16.msra.mxu0 %v2975
        %3012 = vmatpush.bf16.msra.mxu0 %v2973
        %3013 = vmatmul.bf16.gmra.mxu0 %v2983
        %v3014 = vpop.f32.mrf.mxu0
        %v3015 = vadd.f32 %v2954, %v3014
        %v3016 = vpop.f32.mrf.mxu0
        %v3017 = vadd.f32 %v2954, %v3016
        %3018 = vmatmul.bf16.gmra.mxu0 %v2985
        %v3019 = vpop.f32.mrf.mxu0
        %v3020 = vadd.f32 %v2954, %v3019
        %v3021 = vpop.f32.mrf.mxu0
        %v3022 = vadd.f32 %v2954, %v3021
        %3023 = vmatmul.bf16.gmra.mxu0 %v2987
        %v3024 = vpop.f32.mrf.mxu0
        %v3025 = vadd.f32 %v2954, %v3024
        %v3026 = vpop.f32.mrf.mxu0
        %v3027 = vadd.f32 %v2954, %v3026
        %3028 = vmatmul.bf16.gmra.mxu0 %v2989
        %v3029 = vpop.f32.mrf.mxu0
        %v3030 = vadd.f32 %v2954, %v3029
        %v3031 = vpop.f32.mrf.mxu0
        %v3032 = vadd.f32 %v2954, %v3031
        %3033 = vmatmul.bf16.gmra.mxu0 %v2991
        %v3034 = vpop.f32.mrf.mxu0
        %v3035 = vadd.f32 %v2954, %v3034
        %v3036 = vpop.f32.mrf.mxu0
        %v3037 = vadd.f32 %v2954, %v3036
        %3038 = vmatmul.bf16.gmra.mxu0 %v2993
        %v3039 = vpop.f32.mrf.mxu0
        %v3040 = vadd.f32 %v2954, %v3039
        %v3041 = vpop.f32.mrf.mxu0
        %v3042 = vadd.f32 %v2954, %v3041
        %3043 = vmatmul.bf16.gmra.mxu0 %v2995
        %v3044 = vpop.f32.mrf.mxu0
        %v3045 = vadd.f32 %v2954, %v3044
        %v3046 = vpop.f32.mrf.mxu0
        %v3047 = vadd.f32 %v2954, %v3046
        %3048 = vmatmul.bf16.gmra.mxu0 %v2997
        %v3049 = vpop.f32.mrf.mxu0
        %v3050 = vadd.f32 %v2954, %v3049
        %v3051 = vpop.f32.mrf.mxu0
        %v3052 = vadd.f32 %v2954, %v3051
        %3053 = vdwg.mxu0
        %3054 = vmatpush.bf16.msra.mxu0 0
        %3055 = vmatpush.bf16.msra.mxu0 0
        %3056 = vmatpush.bf16.msra.mxu0 0
        %3057 = vmatpush.bf16.msra.mxu0 0
        %3058 = vmatpush.bf16.msra.mxu0 0
        %3059 = vmatpush.bf16.msra.mxu0 %v3003
        %3060 = vmatpush.bf16.msra.mxu0 %v2976
        %3061 = vmatpush.bf16.msra.mxu0 %v2974
        %3062 = vmatmul.bf16.gmra.mxu0 %v2983
        %v3063 = vpop.f32.mrf.mxu0
        %v3064 = vadd.f32 %v2955, %v3063
        %v3065 = vpop.f32.mrf.mxu0
        %v3066 = vadd.f32 %v2955, %v3065
        %3067 = vmatmul.bf16.gmra.mxu0 %v2985
        %v3068 = vpop.f32.mrf.mxu0
        %v3069 = vadd.f32 %v2955, %v3068
        %v3070 = vpop.f32.mrf.mxu0
        %v3071 = vadd.f32 %v2955, %v3070
        %3072 = vmatmul.bf16.gmra.mxu0 %v2987
        %v3073 = vpop.f32.mrf.mxu0
        %v3074 = vadd.f32 %v2955, %v3073
        %v3075 = vpop.f32.mrf.mxu0
        %v3076 = vadd.f32 %v2955, %v3075
        %3077 = vmatmul.bf16.gmra.mxu0 %v2989
        %v3078 = vpop.f32.mrf.mxu0
        %v3079 = vadd.f32 %v2955, %v3078
        %v3080 = vpop.f32.mrf.mxu0
        %v3081 = vadd.f32 %v2955, %v3080
        %3082 = vmatmul.bf16.gmra.mxu0 %v2991
        %v3083 = vpop.f32.mrf.mxu0
        %v3084 = vadd.f32 %v2955, %v3083
        %v3085 = vpop.f32.mrf.mxu0
        %v3086 = vadd.f32 %v2955, %v3085
        %3087 = vmatmul.bf16.gmra.mxu0 %v2993
        %v3088 = vpop.f32.mrf.mxu0
        %v3089 = vadd.f32 %v2955, %v3088
        %v3090 = vpop.f32.mrf.mxu0
        %v3091 = vadd.f32 %v2955, %v3090
        %3092 = vmatmul.bf16.gmra.mxu0 %v2995
        %v3093 = vpop.f32.mrf.mxu0
        %v3094 = vadd.f32 %v2955, %v3093
        %v3095 = vpop.f32.mrf.mxu0
        %v3096 = vadd.f32 %v2955, %v3095
        %3097 = vmatmul.bf16.gmra.mxu0 %v2997
        %v3098 = vpop.f32.mrf.mxu0
        %v3099 = vadd.f32 %v2955, %v3098
        %v3100 = vpop.f32.mrf.mxu0
        %v3101 = vadd.f32 %v2955, %v3100
        %3102 = vdwg.mxu0
        %v3103 = vmax.f32 %v3015, 0.0
        %v3104 = vmax.f32 %v3064, 0.0
        %v3105 = vmax.f32 %v3017, 0.0
        %v3106 = vmax.f32 %v3066, 0.0
        %v3107 = vmax.f32 %v3020, 0.0
        %v3108 = vmax.f32 %v3069, 0.0
        %v3109 = vmax.f32 %v3022, 0.0
        %v3110 = vmax.f32 %v3071, 0.0
        %v3111 = vmax.f32 %v3025, 0.0
        %v3112 = vmax.f32 %v3074, 0.0
        %v3113 = vmax.f32 %v3027, 0.0
        %v3114 = vmax.f32 %v3076, 0.0
        %v3115 = vmax.f32 %v3030, 0.0
        %v3116 = vmax.f32 %v3079, 0.0
        %v3117 = vmax.f32 %v3032, 0.0
        %v3118 = vmax.f32 %v3081, 0.0
        %v3119 = vmax.f32 %v3035, 0.0
        %v3120 = vmax.f32 %v3084, 0.0
        %v3121 = vmax.f32 %v3037, 0.0
        %v3122 = vmax.f32 %v3086, 0.0
        %v3123 = vmax.f32 %v3040, 0.0
        %v3124 = vmax.f32 %v3089, 0.0
        %v3125 = vmax.f32 %v3042, 0.0
        %v3126 = vmax.f32 %v3091, 0.0
        %v3127 = vmax.f32 %v3045, 0.0
        %v3128 = vmax.f32 %v3094, 0.0
        %v3129 = vmax.f32 %v3047, 0.0
        %v3130 = vmax.f32 %v3096, 0.0
        %v3131 = vmax.f32 %v3050, 0.0
        %v3132 = vmax.f32 %v3099, 0.0
        %v3133 = vmax.f32 %v3052, 0.0
        %v3134 = vmax.f32 %v3101, 0.0
        %v3135 = vpack.c.bf16 %v3105, %v3103
        %v3136 = vpack.c.bf16 %v3106, %v3104
        %v3137 = vpack.c.bf16 %v3109, %v3107
        %v3138 = vpack.c.bf16 %v3110, %v3108
        %v3139 = vpack.c.bf16 %v3113, %v3111
        %v3140 = vpack.c.bf16 %v3114, %v3112
        %v3141 = vpack.c.bf16 %v3117, %v3115
        %v3142 = vpack.c.bf16 %v3118, %v3116
        %v3143 = vpack.c.bf16 %v3121, %v3119
        %v3144 = vpack.c.bf16 %v3122, %v3120
        %v3145 = vpack.c.bf16 %v3125, %v3123
        %v3146 = vpack.c.bf16 %v3126, %v3124
        %v3147 = vpack.c.bf16 %v3129, %v3127
        %v3148 = vpack.c.bf16 %v3130, %v3128
        %v3149 = vpack.c.bf16 %v3133, %v3131
        %v3150 = vpack.c.bf16 %v3134, %v3132
        %s3151 = scalar_lea.vmem %s4, 512
        %v3152 = vld [vmem:[%s3151] sm:$0xff]
        %v3153 = vld [vmem:[%s3151 + $0x8] sm:$0xff]
        %v3154 = vld [vmem:[%s3151 + $0x10] sm:$0xff]
        %v3155 = vld [vmem:[%s3151 + $0x18] sm:$0xff]
        %v3156 = vld [vmem:[%s3151 + $0x20] sm:$0xff]
        %v3157 = vld [vmem:[%s3151 + $0x28] sm:$0xff]
        %v3158 = vld [vmem:[%s3151 + $0x30] sm:$0xff]
        %v3159 = vld [vmem:[%s3151 + $0x38] sm:$0xff]
        %v3160 = vld [vmem:[%s3151 + $0x40] sm:$0xff]
        %v3161 = vld [vmem:[%s3151 + $0x48] sm:$0xff]
        %v3162 = vld [vmem:[%s3151 + $0x50] sm:$0xff]
        %v3163 = vld [vmem:[%s3151 + $0x58] sm:$0xff]
        %v3164 = vld [vmem:[%s3151 + $0x60] sm:$0xff]
        %v3165 = vld [vmem:[%s3151 + $0x68] sm:$0xff]
        %v3166 = vld [vmem:[%s3151 + $0x70] sm:$0xff]
        %v3167 = vld [vmem:[%s3151 + $0x78] sm:$0xff]
        %v3168 = vld [vmem:[%s3151 + $0x80] sm:$0xff]
        %v3169 = vld [vmem:[%s3151 + $0x88] sm:$0xff]
        %v3170 = vld [vmem:[%s3151 + $0x90] sm:$0xff]
        %v3171 = vld [vmem:[%s3151 + $0x98] sm:$0xff]
        %v3172 = vld [vmem:[%s3151 + $0xa0] sm:$0xff]
        %v3173 = vld [vmem:[%s3151 + $0xa8] sm:$0xff]
        %v3174 = vld [vmem:[%s3151 + $0xb0] sm:$0xff]
        %v3175 = vld [vmem:[%s3151 + $0xb8] sm:$0xff]
        %v3176 = vld [vmem:[%s3151 + $0xc0] sm:$0xff]
        %v3177 = vld [vmem:[%s3151 + $0xc8] sm:$0xff]
        %v3178 = vld [vmem:[%s3151 + $0xd0] sm:$0xff]
        %v3179 = vld [vmem:[%s3151 + $0xd8] sm:$0xff]
        %v3180 = vld [vmem:[%s3151 + $0xe0] sm:$0xff]
        %v3181 = vld [vmem:[%s3151 + $0xe8] sm:$0xff]
        %v3182 = vld [vmem:[%s3151 + $0xf0] sm:$0xff]
        %v3183 = vld [vmem:[%s3151 + $0xf8] sm:$0xff]
        %v3216 = vunpack.c.l.b16 %v3152
        %v3217 = vunpack.c.h.b16 %v3152
        %v3218 = vunpack.c.l.b16 %v3153
        %v3219 = vunpack.c.h.b16 %v3153
        %v3220 = vunpack.c.l.b16 %v3154
        %v3221 = vunpack.c.h.b16 %v3154
        %v3222 = vunpack.c.l.b16 %v3155
        %v3223 = vunpack.c.h.b16 %v3155
        %v3224 = vunpack.c.l.b16 %v3156
        %v3225 = vunpack.c.h.b16 %v3156
        %v3226 = vunpack.c.l.b16 %v3157
        %v3227 = vunpack.c.h.b16 %v3157
        %v3228 = vunpack.c.l.b16 %v3158
        %v3229 = vunpack.c.h.b16 %v3158
        %v3230 = vunpack.c.l.b16 %v3159
        %v3231 = vunpack.c.h.b16 %v3159
        %v3232 = vunpack.c.l.b16 %v3160
        %v3233 = vunpack.c.h.b16 %v3160
        %v3234 = vunpack.c.l.b16 %v3161
        %v3235 = vunpack.c.h.b16 %v3161
        %v3236 = vunpack.c.l.b16 %v3162
        %v3237 = vunpack.c.h.b16 %v3162
        %v3238 = vunpack.c.l.b16 %v3163
        %v3239 = vunpack.c.h.b16 %v3163
        %v3240 = vunpack.c.l.b16 %v3164
        %v3241 = vunpack.c.h.b16 %v3164
        %v3242 = vunpack.c.l.b16 %v3165
        %v3243 = vunpack.c.h.b16 %v3165
        %v3244 = vunpack.c.l.b16 %v3166
        %v3245 = vunpack.c.h.b16 %v3166
        %v3246 = vunpack.c.l.b16 %v3167
        %v3247 = vunpack.c.h.b16 %v3167
        %v3248 = vunpack.c.l.b16 %v3168
        %v3249 = vunpack.c.h.b16 %v3168
        %v3250 = vunpack.c.l.b16 %v3169
        %v3251 = vunpack.c.h.b16 %v3169
        %v3252 = vunpack.c.l.b16 %v3170
        %v3253 = vunpack.c.h.b16 %v3170
        %v3254 = vunpack.c.l.b16 %v3171
        %v3255 = vunpack.c.h.b16 %v3171
        %v3256 = vunpack.c.l.b16 %v3172
        %v3257 = vunpack.c.h.b16 %v3172
        %v3258 = vunpack.c.l.b16 %v3173
        %v3259 = vunpack.c.h.b16 %v3173
        %v3260 = vunpack.c.l.b16 %v3174
        %v3261 = vunpack.c.h.b16 %v3174
        %v3262 = vunpack.c.l.b16 %v3175
        %v3263 = vunpack.c.h.b16 %v3175
        %v3264 = vunpack.c.l.b16 %v3176
        %v3265 = vunpack.c.h.b16 %v3176
        %v3266 = vunpack.c.l.b16 %v3177
        %v3267 = vunpack.c.h.b16 %v3177
        %v3268 = vunpack.c.l.b16 %v3178
        %v3269 = vunpack.c.h.b16 %v3178
        %v3270 = vunpack.c.l.b16 %v3179
        %v3271 = vunpack.c.h.b16 %v3179
        %v3272 = vunpack.c.l.b16 %v3180
        %v3273 = vunpack.c.h.b16 %v3180
        %v3274 = vunpack.c.l.b16 %v3181
        %v3275 = vunpack.c.h.b16 %v3181
        %v3276 = vunpack.c.l.b16 %v3182
        %v3277 = vunpack.c.h.b16 %v3182
        %v3278 = vunpack.c.l.b16 %v3183
        %v3279 = vunpack.c.h.b16 %v3183
        %v3280 = vpack.c.b16 %v3218, %v3216
        %v3281 = vpack.c.b16 %v3219, %v3217
        %v3282 = vpack.c.b16 %v3222, %v3220
        %v3283 = vpack.c.b16 %v3223, %v3221
        %v3284 = vpack.c.b16 %v3226, %v3224
        %v3285 = vpack.c.b16 %v3227, %v3225
        %v3286 = vpack.c.b16 %v3230, %v3228
        %v3287 = vpack.c.b16 %v3231, %v3229
        %v3288 = vpack.c.b16 %v3234, %v3232
        %v3289 = vpack.c.b16 %v3235, %v3233
        %v3290 = vpack.c.b16 %v3238, %v3236
        %v3291 = vpack.c.b16 %v3239, %v3237
        %v3292 = vpack.c.b16 %v3242, %v3240
        %v3293 = vpack.c.b16 %v3243, %v3241
        %v3294 = vpack.c.b16 %v3246, %v3244
        %v3295 = vpack.c.b16 %v3247, %v3245
        %v3296 = vpack.c.b16 %v3250, %v3248
        %v3297 = vpack.c.b16 %v3251, %v3249
        %v3298 = vpack.c.b16 %v3254, %v3252
        %v3299 = vpack.c.b16 %v3255, %v3253
        %v3300 = vpack.c.b16 %v3258, %v3256
        %v3301 = vpack.c.b16 %v3259, %v3257
        %v3302 = vpack.c.b16 %v3262, %v3260
        %v3303 = vpack.c.b16 %v3263, %v3261
        %v3304 = vpack.c.b16 %v3266, %v3264
        %v3305 = vpack.c.b16 %v3267, %v3265
        %v3306 = vpack.c.b16 %v3270, %v3268
        %v3307 = vpack.c.b16 %v3271, %v3269
        %v3308 = vpack.c.b16 %v3274, %v3272
        %v3309 = vpack.c.b16 %v3275, %v3273
        %v3310 = vpack.c.b16 %v3278, %v3276
        %v3311 = vpack.c.b16 %v3279, %v3277
        %3344 = vmatpush.bf16.msra.mxu0 %v3294
        %3345 = vmatpush.bf16.msra.mxu0 %v3292
        %3346 = vmatpush.bf16.msra.mxu0 %v3290
        %3347 = vmatpush.bf16.msra.mxu0 %v3288
        %3348 = vmatpush.bf16.msra.mxu0 %v3286
        %3349 = vmatpush.bf16.msra.mxu0 %v3284
        %3350 = vmatpush.bf16.msra.mxu0 %v3282
        %3351 = vmatpush.bf16.msra.mxu0 %v3280
        %3352 = vmatmul.bf16.gmra.mxu0 %v3135
        %v3353 = vpop.f32.mrf.mxu0
        %v3354 = vadd.f32 0.0, %v3353
        %v3355 = vpop.f32.mrf.mxu0
        %v3356 = vadd.f32 0.0, %v3355
        %3357 = vmatmul.bf16.gmra.mxu0 %v3137
        %v3358 = vpop.f32.mrf.mxu0
        %v3359 = vadd.f32 0.0, %v3358
        %v3360 = vpop.f32.mrf.mxu0
        %v3361 = vadd.f32 0.0, %v3360
        %3362 = vmatmul.bf16.gmra.mxu0 %v3139
        %v3363 = vpop.f32.mrf.mxu0
        %v3364 = vadd.f32 0.0, %v3363
        %v3365 = vpop.f32.mrf.mxu0
        %v3366 = vadd.f32 0.0, %v3365
        %3367 = vmatmul.bf16.gmra.mxu0 %v3141
        %v3368 = vpop.f32.mrf.mxu0
        %v3369 = vadd.f32 0.0, %v3368
        %v3370 = vpop.f32.mrf.mxu0
        %v3371 = vadd.f32 0.0, %v3370
        %3372 = vmatmul.bf16.gmra.mxu0 %v3143
        %v3373 = vpop.f32.mrf.mxu0
        %v3374 = vadd.f32 0.0, %v3373
        %v3375 = vpop.f32.mrf.mxu0
        %v3376 = vadd.f32 0.0, %v3375
        %3377 = vmatmul.bf16.gmra.mxu0 %v3145
        %v3378 = vpop.f32.mrf.mxu0
        %v3379 = vadd.f32 0.0, %v3378
        %v3380 = vpop.f32.mrf.mxu0
        %v3381 = vadd.f32 0.0, %v3380
        %3382 = vmatmul.bf16.gmra.mxu0 %v3147
        %v3383 = vpop.f32.mrf.mxu0
        %v3384 = vadd.f32 0.0, %v3383
        %v3385 = vpop.f32.mrf.mxu0
        %v3386 = vadd.f32 0.0, %v3385
        %3387 = vmatmul.bf16.gmra.mxu0 %v3149
        %v3388 = vpop.f32.mrf.mxu0
        %v3389 = vadd.f32 0.0, %v3388
        %v3390 = vpop.f32.mrf.mxu0
        %v3391 = vadd.f32 0.0, %v3390
        %3392 = vdwg.mxu0
        %3393 = vmatpush.bf16.msra.mxu0 %v3310
        %3394 = vmatpush.bf16.msra.mxu0 %v3308
        %3395 = vmatpush.bf16.msra.mxu0 %v3306
        %3396 = vmatpush.bf16.msra.mxu0 %v3304
        %3397 = vmatpush.bf16.msra.mxu0 %v3302
        %3398 = vmatpush.bf16.msra.mxu0 %v3300
        %3399 = vmatpush.bf16.msra.mxu0 %v3298
        %3400 = vmatpush.bf16.msra.mxu0 %v3296
        %3401 = vmatmul.bf16.gmra.mxu0 %v3136
        %v3402 = vpop.f32.mrf.mxu0
        %v3403 = vadd.f32 %v3354, %v3402
        %v3404 = vpop.f32.mrf.mxu0
        %v3405 = vadd.f32 %v3356, %v3404
        %3406 = vmatmul.bf16.gmra.mxu0 %v3138
        %v3407 = vpop.f32.mrf.mxu0
        %v3408 = vadd.f32 %v3359, %v3407
        %v3409 = vpop.f32.mrf.mxu0
        %v3410 = vadd.f32 %v3361, %v3409
        %3411 = vmatmul.bf16.gmra.mxu0 %v3140
        %v3412 = vpop.f32.mrf.mxu0
        %v3413 = vadd.f32 %v3364, %v3412
        %v3414 = vpop.f32.mrf.mxu0
        %v3415 = vadd.f32 %v3366, %v3414
        %3416 = vmatmul.bf16.gmra.mxu0 %v3142
        %v3417 = vpop.f32.mrf.mxu0
        %v3418 = vadd.f32 %v3369, %v3417
        %v3419 = vpop.f32.mrf.mxu0
        %v3420 = vadd.f32 %v3371, %v3419
        %3421 = vmatmul.bf16.gmra.mxu0 %v3144
        %v3422 = vpop.f32.mrf.mxu0
        %v3423 = vadd.f32 %v3374, %v3422
        %v3424 = vpop.f32.mrf.mxu0
        %v3425 = vadd.f32 %v3376, %v3424
        %3426 = vmatmul.bf16.gmra.mxu0 %v3146
        %v3427 = vpop.f32.mrf.mxu0
        %v3428 = vadd.f32 %v3379, %v3427
        %v3429 = vpop.f32.mrf.mxu0
        %v3430 = vadd.f32 %v3381, %v3429
        %3431 = vmatmul.bf16.gmra.mxu0 %v3148
        %v3432 = vpop.f32.mrf.mxu0
        %v3433 = vadd.f32 %v3384, %v3432
        %v3434 = vpop.f32.mrf.mxu0
        %v3435 = vadd.f32 %v3386, %v3434
        %3436 = vmatmul.bf16.gmra.mxu0 %v3150
        %v3437 = vpop.f32.mrf.mxu0
        %v3438 = vadd.f32 %v3389, %v3437
        %v3439 = vpop.f32.mrf.mxu0
        %v3440 = vadd.f32 %v3391, %v3439
        %3441 = vdwg.mxu0
        %3442 = vmatpush.bf16.msra.mxu0 %v3295
        %3443 = vmatpush.bf16.msra.mxu0 %v3293
        %3444 = vmatpush.bf16.msra.mxu0 %v3291
        %3445 = vmatpush.bf16.msra.mxu0 %v3289
        %3446 = vmatpush.bf16.msra.mxu0 %v3287
        %3447 = vmatpush.bf16.msra.mxu0 %v3285
        %3448 = vmatpush.bf16.msra.mxu0 %v3283
        %3449 = vmatpush.bf16.msra.mxu0 %v3281
        %3450 = vmatmul.bf16.gmra.mxu0 %v3135
        %v3451 = vpop.f32.mrf.mxu0
        %v3452 = vadd.f32 0.0, %v3451
        %v3453 = vpop.f32.mrf.mxu0
        %v3454 = vadd.f32 0.0, %v3453
        %3455 = vmatmul.bf16.gmra.mxu0 %v3137
        %v3456 = vpop.f32.mrf.mxu0
        %v3457 = vadd.f32 0.0, %v3456
        %v3458 = vpop.f32.mrf.mxu0
        %v3459 = vadd.f32 0.0, %v3458
        %3460 = vmatmul.bf16.gmra.mxu0 %v3139
        %v3461 = vpop.f32.mrf.mxu0
        %v3462 = vadd.f32 0.0, %v3461
        %v3463 = vpop.f32.mrf.mxu0
        %v3464 = vadd.f32 0.0, %v3463
        %3465 = vmatmul.bf16.gmra.mxu0 %v3141
        %v3466 = vpop.f32.mrf.mxu0
        %v3467 = vadd.f32 0.0, %v3466
        %v3468 = vpop.f32.mrf.mxu0
        %v3469 = vadd.f32 0.0, %v3468
        %3470 = vmatmul.bf16.gmra.mxu0 %v3143
        %v3471 = vpop.f32.mrf.mxu0
        %v3472 = vadd.f32 0.0, %v3471
        %v3473 = vpop.f32.mrf.mxu0
        %v3474 = vadd.f32 0.0, %v3473
        %3475 = vmatmul.bf16.gmra.mxu0 %v3145
        %v3476 = vpop.f32.mrf.mxu0
        %v3477 = vadd.f32 0.0, %v3476
        %v3478 = vpop.f32.mrf.mxu0
        %v3479 = vadd.f32 0.0, %v3478
        %3480 = vmatmul.bf16.gmra.mxu0 %v3147
        %v3481 = vpop.f32.mrf.mxu0
        %v3482 = vadd.f32 0.0, %v3481
        %v3483 = vpop.f32.mrf.mxu0
        %v3484 = vadd.f32 0.0, %v3483
        %3485 = vmatmul.bf16.gmra.mxu0 %v3149
        %v3486 = vpop.f32.mrf.mxu0
        %v3487 = vadd.f32 0.0, %v3486
        %v3488 = vpop.f32.mrf.mxu0
        %v3489 = vadd.f32 0.0, %v3488
        %3490 = vdwg.mxu0
        %3491 = vmatpush.bf16.msra.mxu0 %v3311
        %3492 = vmatpush.bf16.msra.mxu0 %v3309
        %3493 = vmatpush.bf16.msra.mxu0 %v3307
        %3494 = vmatpush.bf16.msra.mxu0 %v3305
        %3495 = vmatpush.bf16.msra.mxu0 %v3303
        %3496 = vmatpush.bf16.msra.mxu0 %v3301
        %3497 = vmatpush.bf16.msra.mxu0 %v3299
        %3498 = vmatpush.bf16.msra.mxu0 %v3297
        %3499 = vmatmul.bf16.gmra.mxu0 %v3136
        %v3500 = vpop.f32.mrf.mxu0
        %v3501 = vadd.f32 %v3452, %v3500
        %v3502 = vpop.f32.mrf.mxu0
        %v3503 = vadd.f32 %v3454, %v3502
        %3504 = vmatmul.bf16.gmra.mxu0 %v3138
        %v3505 = vpop.f32.mrf.mxu0
        %v3506 = vadd.f32 %v3457, %v3505
        %v3507 = vpop.f32.mrf.mxu0
        %v3508 = vadd.f32 %v3459, %v3507
        %3509 = vmatmul.bf16.gmra.mxu0 %v3140
        %v3510 = vpop.f32.mrf.mxu0
        %v3511 = vadd.f32 %v3462, %v3510
        %v3512 = vpop.f32.mrf.mxu0
        %v3513 = vadd.f32 %v3464, %v3512
        %3514 = vmatmul.bf16.gmra.mxu0 %v3142
        %v3515 = vpop.f32.mrf.mxu0
        %v3516 = vadd.f32 %v3467, %v3515
        %v3517 = vpop.f32.mrf.mxu0
        %v3518 = vadd.f32 %v3469, %v3517
        %3519 = vmatmul.bf16.gmra.mxu0 %v3144
        %v3520 = vpop.f32.mrf.mxu0
        %v3521 = vadd.f32 %v3472, %v3520
        %v3522 = vpop.f32.mrf.mxu0
        %v3523 = vadd.f32 %v3474, %v3522
        %3524 = vmatmul.bf16.gmra.mxu0 %v3146
        %v3525 = vpop.f32.mrf.mxu0
        %v3526 = vadd.f32 %v3477, %v3525
        %v3527 = vpop.f32.mrf.mxu0
        %v3528 = vadd.f32 %v3479, %v3527
        %3529 = vmatmul.bf16.gmra.mxu0 %v3148
        %v3530 = vpop.f32.mrf.mxu0
        %v3531 = vadd.f32 %v3482, %v3530
        %v3532 = vpop.f32.mrf.mxu0
        %v3533 = vadd.f32 %v3484, %v3532
        %3534 = vmatmul.bf16.gmra.mxu0 %v3150
        %v3535 = vpop.f32.mrf.mxu0
        %v3536 = vadd.f32 %v3487, %v3535
        %v3537 = vpop.f32.mrf.mxu0
        %v3538 = vadd.f32 %v3489, %v3537
        %3539 = vdwg.mxu0
        %v3540 = vadd.f32 %v2182, %v3403
        %v3541 = vadd.f32 %v2280, %v3501
        %v3542 = vadd.f32 %v2184, %v3405
        %v3543 = vadd.f32 %v2282, %v3503
        %v3544 = vadd.f32 %v2187, %v3408
        %v3545 = vadd.f32 %v2285, %v3506
        %v3546 = vadd.f32 %v2189, %v3410
        %v3547 = vadd.f32 %v2287, %v3508
        %v3548 = vadd.f32 %v2192, %v3413
        %v3549 = vadd.f32 %v2290, %v3511
        %v3550 = vadd.f32 %v2194, %v3415
        %v3551 = vadd.f32 %v2292, %v3513
        %v3552 = vadd.f32 %v2197, %v3418
        %v3553 = vadd.f32 %v2295, %v3516
        %v3554 = vadd.f32 %v2199, %v3420
        %v3555 = vadd.f32 %v2297, %v3518
        %v3556 = vadd.f32 %v2202, %v3423
        %v3557 = vadd.f32 %v2300, %v3521
        %v3558 = vadd.f32 %v2204, %v3425
        %v3559 = vadd.f32 %v2302, %v3523
        %v3560 = vadd.f32 %v2207, %v3428
        %v3561 = vadd.f32 %v2305, %v3526
        %v3562 = vadd.f32 %v2209, %v3430
        %v3563 = vadd.f32 %v2307, %v3528
        %v3564 = vadd.f32 %v2212, %v3433
        %v3565 = vadd.f32 %v2310, %v3531
        %v3566 = vadd.f32 %v2214, %v3435
        %v3567 = vadd.f32 %v2312, %v3533
        %v3568 = vadd.f32 %v2217, %v3438
        %v3569 = vadd.f32 %v2315, %v3536
        %v3570 = vadd.f32 %v2219, %v3440
        %v3571 = vadd.f32 %v2317, %v3538
        %v3573 = vshrl.u32 %v287, 16
        %v3575 = vrot.slane %v3573, 5
        %v3576 = vshll.u32 %v287, 16
        %v3578 = vrot.slane %v3576, 6
        %v3579 = vor.u32 %v3575, %v3578
        %v3580 = vrot.slane %v3579, 4
        %v3582 = vshrl.u32 %v288, 16
        %v3584 = vrot.slane %v3582, 5
        %v3585 = vshll.u32 %v288, 16
        %v3587 = vrot.slane %v3585, 6
        %v3588 = vor.u32 %v3584, %v3587
        %v3589 = vsel %vm331, %v3580, %v3588
        %v3590 = vrot.slane %v3588, 4
        %v3592 = vshrl.u32 %v289, 16
        %v3594 = vrot.slane %v3592, 5
        %v3595 = vshll.u32 %v289, 16
        %v3597 = vrot.slane %v3595, 6
        %v3598 = vor.u32 %v3594, %v3597
        %v3599 = vsel %vm331, %v3590, %v3598
        %vm3606 = vcmask 1040384
        %vm3607 = vcmask 1044484
        %vm3608 = vmor %vm3606, %vm3607
        %v3609 = vrot.slane %v287, 7
        %v3610 = vrot.slane %v3609, 4
        %v3611 = vrot.slane %v288, 7
        %v3612 = vsel %vm3608, %v3610, %v3611
        %v3613 = vrot.slane %v3611, 4
        %v3614 = vrot.slane %v289, 7
        %v3615 = vsel %vm3608, %v3613, %v3614
        %v3616 = vrot.slane %v290, 7
        %v3617 = vrot.slane %v3616, 4
        %v3618 = vrot.slane %v291, 7
        %v3619 = vsel %vm3608, %v3617, %v3618
        %v3620 = vrot.slane %v3618, 4
        %v3621 = vrot.slane %v292, 7
        %v3622 = vsel %vm3608, %v3620, %v3621
        %v3623 = vrot.slane %v293, 7
        %v3624 = vrot.slane %v3623, 4
        %v3625 = vrot.slane %v294, 7
        %v3626 = vsel %vm3608, %v3624, %v3625
        %v3627 = vrot.slane %v3625, 4
        %v3628 = vrot.slane %v295, 7
        %v3629 = vsel %vm3608, %v3627, %v3628
        %v3630 = vrot.slane %v296, 7
        %v3631 = vrot.slane %v3630, 4
        %v3632 = vrot.slane %v297, 7
        %v3633 = vsel %vm3608, %v3631, %v3632
        %v3634 = vrot.slane %v3632, 4
        %v3635 = vrot.slane %v298, 7
        %v3636 = vsel %vm3608, %v3634, %v3635
        %v3637 = vrot.slane %v299, 7
        %v3638 = vrot.slane %v3637, 4
        %v3639 = vrot.slane %v300, 7
        %v3640 = vsel %vm3608, %v3638, %v3639
        %v3641 = vrot.slane %v3639, 4
        %v3642 = vrot.slane %v301, 7
        %v3643 = vsel %vm3608, %v3641, %v3642
        %v3644 = vrot.slane %v302, 7
        %v3645 = vrot.slane %v3644, 4
        %v3646 = vrot.slane %v303, 7
        %v3647 = vsel %vm3608, %v3645, %v3646
        %v3648 = vrot.slane %v3646, 4
        %v3649 = vrot.slane %v304, 7
        %v3650 = vsel %vm3608, %v3648, %v3649
        %v3651 = vrot.slane %v305, 7
        %v3652 = vrot.slane %v3651, 4
        %v3653 = vrot.slane %v306, 7
        %v3654 = vsel %vm3608, %v3652, %v3653
        %v3655 = vrot.slane %v3653, 4
        %v3656 = vrot.slane %v307, 7
        %v3657 = vsel %vm3608, %v3655, %v3656
        %v3658 = vrot.slane %v308, 7
        %v3659 = vrot.slane %v3658, 4
        %v3660 = vrot.slane %v309, 7
        %v3661 = vsel %vm3608, %v3659, %v3660
        %v3662 = vrot.slane %v3660, 4
        %v3663 = vrot.slane %v310, 7
        %v3664 = vsel %vm3608, %v3662, %v3663
        %v3665 = vrot.slane %v311, 7
        %v3666 = vrot.slane %v3665, 4
        %v3667 = vrot.slane %v312, 7
        %v3668 = vsel %vm3608, %v3666, %v3667
        %v3669 = vrot.slane %v3667, 4
        %v3670 = vrot.slane %v313, 7
        %v3671 = vsel %vm3608, %v3669, %v3670
        %v3672 = vrot.slane %v314, 7
        %v3673 = vrot.slane %v3672, 4
        %v3674 = vrot.slane %v315, 7
        %v3675 = vsel %vm3608, %v3673, %v3674
        %v3676 = vrot.slane %v3674, 4
        %v3677 = vrot.slane %v316, 7
        %v3678 = vsel %vm3608, %v3676, %v3677
        %v3679 = vrot.slane %v317, 7
        %v3680 = vrot.slane %v3679, 4
        %v3681 = vrot.slane %v318, 7
        %v3682 = vsel %vm3608, %v3680, %v3681
        %v3683 = vrot.slane %v3681, 4
        %v3684 = vrot.slane %v319, 7
        %v3685 = vsel %vm3608, %v3683, %v3684
        %v3687 = vshrl.u32 %v326, 16
        %v3689 = vrot.slane %v3687, 5
        %v3690 = vshll.u32 %v326, 16
        %v3692 = vrot.slane %v3690, 6
        %v3693 = vor.u32 %v3689, %v3692
        %v3694 = vrot.slane %v3693, 4
        %v3696 = vshrl.u32 %v327, 16
        %v3698 = vrot.slane %v3696, 5
        %v3699 = vshll.u32 %v327, 16
        %v3701 = vrot.slane %v3699, 6
        %v3702 = vor.u32 %v3698, %v3701
        %v3703 = vsel %vm331, %v3694, %v3702
        %v3704 = vrot.slane %v3702, 4
        %v3706 = vshrl.u32 %v328, 16
        %v3708 = vrot.slane %v3706, 5
        %v3709 = vshll.u32 %v328, 16
        %v3711 = vrot.slane %v3709, 6
        %v3712 = vor.u32 %v3708, %v3711
        %v3713 = vsel %vm331, %v3704, %v3712
        %v3720 = vrot.slane %v320, 7
        %v3721 = vrot.slane %v3720, 4
        %v3722 = vrot.slane %v321, 7
        %v3723 = vsel %vm3608, %v3721, %v3722
        %v3724 = vrot.slane %v3722, 4
        %v3725 = vrot.slane %v322, 7
        %v3726 = vsel %vm3608, %v3724, %v3725
        %v3727 = vrot.slane %v323, 7
        %v3728 = vrot.slane %v3727, 4
        %v3729 = vrot.slane %v324, 7
        %v3730 = vsel %vm3608, %v3728, %v3729
        %v3731 = vrot.slane %v3729, 4
        %v3732 = vrot.slane %v325, 7
        %v3733 = vsel %vm3608, %v3731, %v3732
        %v3734 = vrot.slane %v326, 7
        %v3735 = vrot.slane %v3734, 4
        %v3736 = vrot.slane %v327, 7
        %v3737 = vsel %vm3608, %v3735, %v3736
        %v3738 = vrot.slane %v3736, 4
        %v3739 = vrot.slane %v328, 7
        %v3740 = vsel %vm3608, %v3738, %v3739
        %v3741 = vunpack.c.l.b16 %v287
        %v3742 = vunpack.c.l.b16 %v288
        %v3743 = vunpack.c.l.b16 %v290
        %v3744 = vunpack.c.l.b16 %v291
        %v3745 = vunpack.c.l.b16 %v293
        %v3746 = vunpack.c.l.b16 %v294
        %v3747 = vunpack.c.l.b16 %v296
        %v3748 = vunpack.c.l.b16 %v297
        %v3749 = vunpack.c.l.b16 %v299
        %v3750 = vunpack.c.l.b16 %v300
        %v3751 = vunpack.c.l.b16 %v302
        %v3752 = vunpack.c.l.b16 %v303
        %v3753 = vunpack.c.l.b16 %v305
        %v3754 = vunpack.c.l.b16 %v306
        %v3755 = vunpack.c.l.b16 %v308
        %v3756 = vunpack.c.l.b16 %v309
        %v3757 = vpack.c.b16 %v3742, %v3741
        %v3758 = vpack.c.b16 %v3744, %v3743
        %v3759 = vpack.c.b16 %v3746, %v3745
        %v3760 = vpack.c.b16 %v3748, %v3747
        %v3761 = vpack.c.b16 %v3750, %v3749
        %v3762 = vpack.c.b16 %v3752, %v3751
        %v3763 = vpack.c.b16 %v3754, %v3753
        %v3764 = vpack.c.b16 %v3756, %v3755
        %v3765 = vunpack.c.l.b16 %v3589
        %v3766 = vunpack.c.l.b16 %v3599
        %v3767 = vpack.c.b16 %v3766, %v3765
        %3768 = vrot.lane.b32.xlu0 %v3767, 4
        %v3769 = vpop.permute.xlu0 %3768
        %v3770 = vunpack.c.l.b16 %v3612
        %v3771 = vunpack.c.l.b16 %v3615
        %v3772 = vunpack.c.l.b16 %v3619
        %v3773 = vunpack.c.l.b16 %v3622
        %v3774 = vunpack.c.l.b16 %v3626
        %v3775 = vunpack.c.l.b16 %v3629
        %v3776 = vunpack.c.l.b16 %v3633
        %v3777 = vunpack.c.l.b16 %v3636
        %v3778 = vunpack.c.l.b16 %v3640
        %v3779 = vunpack.c.l.b16 %v3643
        %v3780 = vunpack.c.l.b16 %v3647
        %v3781 = vunpack.c.l.b16 %v3650
        %v3782 = vunpack.c.l.b16 %v3654
        %v3783 = vunpack.c.l.b16 %v3657
        %v3784 = vunpack.c.l.b16 %v3661
        %v3785 = vunpack.c.l.b16 %v3664
        %v3786 = vpack.c.b16 %v3771, %v3770
        %v3787 = vpack.c.b16 %v3773, %v3772
        %v3788 = vpack.c.b16 %v3775, %v3774
        %v3789 = vpack.c.b16 %v3777, %v3776
        %v3790 = vpack.c.b16 %v3779, %v3778
        %v3791 = vpack.c.b16 %v3781, %v3780
        %v3792 = vpack.c.b16 %v3783, %v3782
        %v3793 = vpack.c.b16 %v3785, %v3784
        %3794 = vrot.lane.b32.xlu0 %v3786, 8
        %v3795 = vpop.permute.xlu0 %3794
        %3796 = vrot.lane.b32.xlu0 %v3787, 8
        %v3797 = vpop.permute.xlu0 %3796
        %3798 = vrot.lane.b32.xlu0 %v3788, 8
        %v3799 = vpop.permute.xlu0 %3798
        %3800 = vrot.lane.b32.xlu0 %v3789, 8
        %v3801 = vpop.permute.xlu0 %3800
        %3802 = vrot.lane.b32.xlu0 %v3790, 8
        %v3803 = vpop.permute.xlu0 %3802
        %3804 = vrot.lane.b32.xlu0 %v3791, 8
        %v3805 = vpop.permute.xlu0 %3804
        %3806 = vrot.lane.b32.xlu0 %v3792, 8
        %v3807 = vpop.permute.xlu0 %3806
        %3808 = vrot.lane.b32.xlu0 %v3793, 8
        %v3809 = vpop.permute.xlu0 %3808
        %v3810 = vunpack.c.l.b16 %v311
        %v3811 = vunpack.c.l.b16 %v312
        %v3812 = vunpack.c.l.b16 %v314
        %v3813 = vunpack.c.l.b16 %v315
        %v3814 = vunpack.c.l.b16 %v317
        %v3815 = vunpack.c.l.b16 %v318
        %v3816 = vpack.c.b16 %v3811, %v3810
        %v3817 = vpack.c.b16 %v3813, %v3812
        %v3818 = vpack.c.b16 %v3815, %v3814
        %3819 = vrot.lane.b32.xlu0 %v3760, 12
        %v3820 = vpop.permute.xlu0 %3819
        %3821 = vrot.lane.b32.xlu0 %v3761, 12
        %v3822 = vpop.permute.xlu0 %3821
        %3823 = vrot.lane.b32.xlu0 %v3762, 12
        %v3824 = vpop.permute.xlu0 %3823
        %3825 = vrot.lane.b32.xlu0 %v3763, 12
        %v3826 = vpop.permute.xlu0 %3825
        %3827 = vrot.lane.b32.xlu0 %v3764, 12
        %v3828 = vpop.permute.xlu0 %3827
        %3829 = vrot.lane.b32.xlu0 %v3816, 12
        %v3830 = vpop.permute.xlu0 %3829
        %3831 = vrot.lane.b32.xlu0 %v3817, 12
        %v3832 = vpop.permute.xlu0 %3831
        %3833 = vrot.lane.b32.xlu0 %v3818, 12
        %v3834 = vpop.permute.xlu0 %3833
        %v3835 = vunpack.c.l.b16 %v3668
        %v3836 = vunpack.c.l.b16 %v3671
        %v3837 = vunpack.c.l.b16 %v3675
        %v3838 = vunpack.c.l.b16 %v3678
        %v3839 = vunpack.c.l.b16 %v3682
        %v3840 = vunpack.c.l.b16 %v3685
        %v3841 = vpack.c.b16 %v3836, %v3835
        %v3842 = vpack.c.b16 %v3838, %v3837
        %v3843 = vpack.c.b16 %v3840, %v3839
        %3844 = vrot.lane.b32.xlu0 %v3789, 20
        %v3845 = vpop.permute.xlu0 %3844
        %3846 = vrot.lane.b32.xlu0 %v3790, 20
        %v3847 = vpop.permute.xlu0 %3846
        %3848 = vrot.lane.b32.xlu0 %v3791, 20
        %v3849 = vpop.permute.xlu0 %3848
        %3850 = vrot.lane.b32.xlu0 %v3792, 20
        %v3851 = vpop.permute.xlu0 %3850
        %3852 = vrot.lane.b32.xlu0 %v3793, 20
        %v3853 = vpop.permute.xlu0 %3852
        %3854 = vrot.lane.b32.xlu0 %v3841, 20
        %v3855 = vpop.permute.xlu0 %3854
        %3856 = vrot.lane.b32.xlu0 %v3842, 20
        %v3857 = vpop.permute.xlu0 %3856
        %3858 = vrot.lane.b32.xlu0 %v3843, 20
        %v3859 = vpop.permute.xlu0 %3858
        %v3860 = vunpack.c.l.b16 %v320
        %v3861 = vunpack.c.l.b16 %v321
        %v3862 = vunpack.c.l.b16 %v323
        %v3863 = vunpack.c.l.b16 %v324
        %v3864 = vunpack.c.l.b16 %v326
        %v3865 = vunpack.c.l.b16 %v327
        %v3866 = vpack.c.b16 %v3861, %v3860
        %v3867 = vpack.c.b16 %v3863, %v3862
        %v3868 = vpack.c.b16 %v3865, %v3864
        %3869 = vrot.lane.b32.xlu0 %v3763, 24
        %v3870 = vpop.permute.xlu0 %3869
        %3871 = vrot.lane.b32.xlu0 %v3764, 24
        %v3872 = vpop.permute.xlu0 %3871
        %3873 = vrot.lane.b32.xlu0 %v3816, 24
        %v3874 = vpop.permute.xlu0 %3873
        %3875 = vrot.lane.b32.xlu0 %v3817, 24
        %v3876 = vpop.permute.xlu0 %3875
        %3877 = vrot.lane.b32.xlu0 %v3818, 24
        %v3878 = vpop.permute.xlu0 %3877
        %3879 = vrot.lane.b32.xlu0 %v3866, 24
        %v3880 = vpop.permute.xlu0 %3879
        %3881 = vrot.lane.b32.xlu0 %v3867, 24
        %v3882 = vpop.permute.xlu0 %3881
        %3883 = vrot.lane.b32.xlu0 %v3868, 24
        %v3884 = vpop.permute.xlu0 %3883
        %v3885 = vunpack.c.l.b16 %v3703
        %v3886 = vunpack.c.l.b16 %v3713
        %v3887 = vpack.c.b16 %v3886, %v3885
        %3888 = vrot.lane.b32.xlu0 %v3887, 28
        %v3889 = vpop.permute.xlu0 %3888
        %v3890 = vunpack.c.l.b16 %v3723
        %v3891 = vunpack.c.l.b16 %v3726
        %v3892 = vunpack.c.l.b16 %v3730
        %v3893 = vunpack.c.l.b16 %v3733
        %v3894 = vunpack.c.l.b16 %v3737
        %v3895 = vunpack.c.l.b16 %v3740
        %v3896 = vpack.c.b16 %v3891, %v3890
        %v3897 = vpack.c.b16 %v3893, %v3892
        %v3898 = vpack.c.b16 %v3895, %v3894
        %3899 = vrot.lane.b32.xlu0 %v3792, 32
        %v3900 = vpop.permute.xlu0 %3899
        %3901 = vrot.lane.b32.xlu0 %v3793, 32
        %v3902 = vpop.permute.xlu0 %3901
        %3903 = vrot.lane.b32.xlu0 %v3841, 32
        %v3904 = vpop.permute.xlu0 %3903
        %3905 = vrot.lane.b32.xlu0 %v3842, 32
        %v3906 = vpop.permute.xlu0 %3905
        %3907 = vrot.lane.b32.xlu0 %v3843, 32
        %v3908 = vpop.permute.xlu0 %3907
        %3909 = vrot.lane.b32.xlu0 %v3896, 32
        %v3910 = vpop.permute.xlu0 %3909
        %3911 = vrot.lane.b32.xlu0 %v3897, 32
        %v3912 = vpop.permute.xlu0 %3911
        %3913 = vrot.lane.b32.xlu0 %v3898, 32
        %v3914 = vpop.permute.xlu0 %3913
        %v3917 = vsel %vm591, %v3757, %v3769
        %v3919 = vsel %vm591, %v3758, %v2697
        %v3921 = vsel %vm591, %v3759, %v1059
        %v3923 = vsel %vm591, %v3760, %v1061
        %v3925 = vsel %vm591, %v3761, %v1063
        %v3927 = vsel %vm591, %v3762, %v1065
        %v3929 = vsel %vm591, %v3763, %v1067
        %v3931 = vsel %vm591, %v3764, %v1069
        %v3933 = vsel %vm1249, %v3917, %v3795
        %v3935 = vsel %vm1249, %v3919, %v3797
        %v3937 = vsel %vm1249, %v3921, %v3799
        %v3939 = vsel %vm1249, %v3923, %v3801
        %v3941 = vsel %vm1249, %v3925, %v3803
        %v3943 = vsel %vm1249, %v3927, %v3805
        %v3945 = vsel %vm1249, %v3929, %v3807
        %v3947 = vsel %vm1249, %v3931, %v3809
        %v3949 = vsel %vm1266, %v3933, %v3820
        %v3951 = vsel %vm1266, %v3935, %v3822
        %v3953 = vsel %vm1266, %v3937, %v3824
        %v3955 = vsel %vm1266, %v3939, %v3826
        %v3957 = vsel %vm1266, %v3941, %v3828
        %v3959 = vsel %vm1266, %v3943, %v3830
        %v3961 = vsel %vm1266, %v3945, %v3832
        %v3963 = vsel %vm1266, %v3947, %v3834
        %v3964 = vsel %vm1283, %v3949, %v1134
        %v3965 = vsel %vm1283, %v3951, %v1136
        %v3966 = vsel %vm1283, %v3953, %v1138
        %v3967 = vsel %vm1283, %v3955, %v1140
        %v3968 = vsel %vm1283, %v3957, %v1142
        %v3969 = vsel %vm1283, %v3959, %v1144
        %v3970 = vsel %vm1283, %v3961, %v1146
        %v3971 = vsel %vm1283, %v3963, %v1148
        %v3973 = vsel %vm1300, %v3964, %v3845
        %v3975 = vsel %vm1300, %v3965, %v3847
        %v3977 = vsel %vm1300, %v3966, %v3849
        %v3979 = vsel %vm1300, %v3967, %v3851
        %v3981 = vsel %vm1300, %v3968, %v3853
        %v3983 = vsel %vm1300, %v3969, %v3855
        %v3985 = vsel %vm1300, %v3970, %v3857
        %v3987 = vsel %vm1300, %v3971, %v3859
        %v3989 = vsel %vm1317, %v3973, %v3870
        %v3991 = vsel %vm1317, %v3975, %v3872
        %v3993 = vsel %vm1317, %v3977, %v3874
        %v3995 = vsel %vm1317, %v3979, %v3876
        %v3997 = vsel %vm1317, %v3981, %v3878
        %v3999 = vsel %vm1317, %v3983, %v3880
        %v4001 = vsel %vm1317, %v3985, %v3882
        %v4003 = vsel %vm1317, %v3987, %v3884
        %v4004 = vsel %vm1334, %v3989, %v1195
        %v4005 = vsel %vm1334, %v3991, %v1197
        %v4006 = vsel %vm1334, %v3993, %v1199
        %v4007 = vsel %vm1334, %v3995, %v1201
        %v4008 = vsel %vm1334, %v3997, %v1203
        %v4009 = vsel %vm1334, %v3999, %v1205
        %v4010 = vsel %vm1334, %v4001, %v2808
        %v4012 = vsel %vm1334, %v4003, %v3889
        %v4014 = vsel %vm1351, %v4004, %v3900
        %v4016 = vsel %vm1351, %v4005, %v3902
        %v4018 = vsel %vm1351, %v4006, %v3904
        %v4020 = vsel %vm1351, %v4007, %v3906
        %v4022 = vsel %vm1351, %v4008, %v3908
        %v4024 = vsel %vm1351, %v4009, %v3910
        %v4026 = vsel %vm1351, %v4010, %v3912
        %v4028 = vsel %vm1351, %v4012, %v3914
        %s4029 = scalar_lea.vmem %s2, 80
        %v4030 = vld [vmem:[%s4029] sm:$0xff]
        %v4031 = vld [vmem:[%s4029 + $0x8] sm:$0xff]
        %v4032 = vld [vmem:[%s4029 + $0x10] sm:$0xff]
        %v4033 = vld [vmem:[%s4029 + $0x18] sm:$0xff]
        %v4034 = vld [vmem:[%s4029 + $0x20] sm:$0x33]
        %s4035 = scalar_lea.vmem %s3, 3
        %v4036 = vld [vmem:[%s4035] ss:$4 sm:$0x3]
        %v4038 = vperm.slane %v4036, 0
        %v4039 = vperm.slane %v4036, 1
        %v4047 = vunpack.c.l.b16 %v4030
        %v4048 = vunpack.c.h.b16 %v4030
        %v4049 = vunpack.c.l.b16 %v4031
        %v4050 = vunpack.c.h.b16 %v4031
        %v4051 = vunpack.c.l.b16 %v4032
        %v4052 = vunpack.c.h.b16 %v4032
        %v4053 = vunpack.c.l.b16 %v4033
        %v4054 = vunpack.c.h.b16 %v4033
        %v4055 = vunpack.c.l.b16 %v4034
        %v4056 = vunpack.c.h.b16 %v4034
        %v4057 = vpack.c.b16 %v4049, %v4047
        %v4058 = vpack.c.b16 %v4050, %v4048
        %v4059 = vpack.c.b16 %v4053, %v4051
        %v4060 = vpack.c.b16 %v4054, %v4052
        %v4061 = vpack.c.b16 %v4055, %v4055
        %v4062 = vpack.c.b16 %v4056, %v4056
        %v4067 = vsel %vm1405, %v4014, 0
        %v4069 = vsel %vm1405, %v4016, 0
        %v4071 = vsel %vm1405, %v4018, 0
        %v4073 = vsel %vm1405, %v4020, 0
        %v4075 = vsel %vm1405, %v4022, 0
        %v4077 = vsel %vm1405, %v4024, 0
        %v4079 = vsel %vm1405, %v4026, 0
        %v4081 = vsel %vm1405, %v4028, 0
        %v4084 = vsel %vm616, %v4061, 0
        %v4087 = vsel %vm616, %v4062, 0
        %4089 = vmatpush.bf16.msra.mxu0 0
        %4090 = vmatpush.bf16.msra.mxu0 0
        %4091 = vmatpush.bf16.msra.mxu0 0
        %4092 = vmatpush.bf16.msra.mxu0 0
        %4093 = vmatpush.bf16.msra.mxu0 0
        %4094 = vmatpush.bf16.msra.mxu0 %v4084
        %4095 = vmatpush.bf16.msra.mxu0 %v4059
        %4096 = vmatpush.bf16.msra.mxu0 %v4057
        %4097 = vmatmul.bf16.gmra.mxu0 %v4067
        %v4098 = vpop.f32.mrf.mxu0
        %v4099 = vadd.f32 %v4038, %v4098
        %v4100 = vpop.f32.mrf.mxu0
        %v4101 = vadd.f32 %v4038, %v4100
        %4102 = vmatmul.bf16.gmra.mxu0 %v4069
        %v4103 = vpop.f32.mrf.mxu0
        %v4104 = vadd.f32 %v4038, %v4103
        %v4105 = vpop.f32.mrf.mxu0
        %v4106 = vadd.f32 %v4038, %v4105
        %4107 = vmatmul.bf16.gmra.mxu0 %v4071
        %v4108 = vpop.f32.mrf.mxu0
        %v4109 = vadd.f32 %v4038, %v4108
        %v4110 = vpop.f32.mrf.mxu0
        %v4111 = vadd.f32 %v4038, %v4110
        %4112 = vmatmul.bf16.gmra.mxu0 %v4073
        %v4113 = vpop.f32.mrf.mxu0
        %v4114 = vadd.f32 %v4038, %v4113
        %v4115 = vpop.f32.mrf.mxu0
        %v4116 = vadd.f32 %v4038, %v4115
        %4117 = vmatmul.bf16.gmra.mxu0 %v4075
        %v4118 = vpop.f32.mrf.mxu0
        %v4119 = vadd.f32 %v4038, %v4118
        %v4120 = vpop.f32.mrf.mxu0
        %v4121 = vadd.f32 %v4038, %v4120
        %4122 = vmatmul.bf16.gmra.mxu0 %v4077
        %v4123 = vpop.f32.mrf.mxu0
        %v4124 = vadd.f32 %v4038, %v4123
        %v4125 = vpop.f32.mrf.mxu0
        %v4126 = vadd.f32 %v4038, %v4125
        %4127 = vmatmul.bf16.gmra.mxu0 %v4079
        %v4128 = vpop.f32.mrf.mxu0
        %v4129 = vadd.f32 %v4038, %v4128
        %v4130 = vpop.f32.mrf.mxu0
        %v4131 = vadd.f32 %v4038, %v4130
        %4132 = vmatmul.bf16.gmra.mxu0 %v4081
        %v4133 = vpop.f32.mrf.mxu0
        %v4134 = vadd.f32 %v4038, %v4133
        %v4135 = vpop.f32.mrf.mxu0
        %v4136 = vadd.f32 %v4038, %v4135
        %4137 = vdwg.mxu0
        %4138 = vmatpush.bf16.msra.mxu0 0
        %4139 = vmatpush.bf16.msra.mxu0 0
        %4140 = vmatpush.bf16.msra.mxu0 0
        %4141 = vmatpush.bf16.msra.mxu0 0
        %4142 = vmatpush.bf16.msra.mxu0 0
        %4143 = vmatpush.bf16.msra.mxu0 %v4087
        %4144 = vmatpush.bf16.msra.mxu0 %v4060
        %4145 = vmatpush.bf16.msra.mxu0 %v4058
        %4146 = vmatmul.bf16.gmra.mxu0 %v4067
        %v4147 = vpop.f32.mrf.mxu0
        %v4148 = vadd.f32 %v4039, %v4147
        %v4149 = vpop.f32.mrf.mxu0
        %v4150 = vadd.f32 %v4039, %v4149
        %4151 = vmatmul.bf16.gmra.mxu0 %v4069
        %v4152 = vpop.f32.mrf.mxu0
        %v4153 = vadd.f32 %v4039, %v4152
        %v4154 = vpop.f32.mrf.mxu0
        %v4155 = vadd.f32 %v4039, %v4154
        %4156 = vmatmul.bf16.gmra.mxu0 %v4071
        %v4157 = vpop.f32.mrf.mxu0
        %v4158 = vadd.f32 %v4039, %v4157
        %v4159 = vpop.f32.mrf.mxu0
        %v4160 = vadd.f32 %v4039, %v4159
        %4161 = vmatmul.bf16.gmra.mxu0 %v4073
        %v4162 = vpop.f32.mrf.mxu0
        %v4163 = vadd.f32 %v4039, %v4162
        %v4164 = vpop.f32.mrf.mxu0
        %v4165 = vadd.f32 %v4039, %v4164
        %4166 = vmatmul.bf16.gmra.mxu0 %v4075
        %v4167 = vpop.f32.mrf.mxu0
        %v4168 = vadd.f32 %v4039, %v4167
        %v4169 = vpop.f32.mrf.mxu0
        %v4170 = vadd.f32 %v4039, %v4169
        %4171 = vmatmul.bf16.gmra.mxu0 %v4077
        %v4172 = vpop.f32.mrf.mxu0
        %v4173 = vadd.f32 %v4039, %v4172
        %v4174 = vpop.f32.mrf.mxu0
        %v4175 = vadd.f32 %v4039, %v4174
        %4176 = vmatmul.bf16.gmra.mxu0 %v4079
        %v4177 = vpop.f32.mrf.mxu0
        %v4178 = vadd.f32 %v4039, %v4177
        %v4179 = vpop.f32.mrf.mxu0
        %v4180 = vadd.f32 %v4039, %v4179
        %4181 = vmatmul.bf16.gmra.mxu0 %v4081
        %v4182 = vpop.f32.mrf.mxu0
        %v4183 = vadd.f32 %v4039, %v4182
        %v4184 = vpop.f32.mrf.mxu0
        %v4185 = vadd.f32 %v4039, %v4184
        %4186 = vdwg.mxu0
        %v4187 = vmax.f32 %v4099, 0.0
        %v4188 = vmax.f32 %v4148, 0.0
        %v4189 = vmax.f32 %v4101, 0.0
        %v4190 = vmax.f32 %v4150, 0.0
        %v4191 = vmax.f32 %v4104, 0.0
        %v4192 = vmax.f32 %v4153, 0.0
        %v4193 = vmax.f32 %v4106, 0.0
        %v4194 = vmax.f32 %v4155, 0.0
        %v4195 = vmax.f32 %v4109, 0.0
        %v4196 = vmax.f32 %v4158, 0.0
        %v4197 = vmax.f32 %v4111, 0.0
        %v4198 = vmax.f32 %v4160, 0.0
        %v4199 = vmax.f32 %v4114, 0.0
        %v4200 = vmax.f32 %v4163, 0.0
        %v4201 = vmax.f32 %v4116, 0.0
        %v4202 = vmax.f32 %v4165, 0.0
        %v4203 = vmax.f32 %v4119, 0.0
        %v4204 = vmax.f32 %v4168, 0.0
        %v4205 = vmax.f32 %v4121, 0.0
        %v4206 = vmax.f32 %v4170, 0.0
        %v4207 = vmax.f32 %v4124, 0.0
        %v4208 = vmax.f32 %v4173, 0.0
        %v4209 = vmax.f32 %v4126, 0.0
        %v4210 = vmax.f32 %v4175, 0.0
        %v4211 = vmax.f32 %v4129, 0.0
        %v4212 = vmax.f32 %v4178, 0.0
        %v4213 = vmax.f32 %v4131, 0.0
        %v4214 = vmax.f32 %v4180, 0.0
        %v4215 = vmax.f32 %v4134, 0.0
        %v4216 = vmax.f32 %v4183, 0.0
        %v4217 = vmax.f32 %v4136, 0.0
        %v4218 = vmax.f32 %v4185, 0.0
        %v4219 = vpack.c.bf16 %v4189, %v4187
        %v4220 = vpack.c.bf16 %v4190, %v4188
        %v4221 = vpack.c.bf16 %v4193, %v4191
        %v4222 = vpack.c.bf16 %v4194, %v4192
        %v4223 = vpack.c.bf16 %v4197, %v4195
        %v4224 = vpack.c.bf16 %v4198, %v4196
        %v4225 = vpack.c.bf16 %v4201, %v4199
        %v4226 = vpack.c.bf16 %v4202, %v4200
        %v4227 = vpack.c.bf16 %v4205, %v4203
        %v4228 = vpack.c.bf16 %v4206, %v4204
        %v4229 = vpack.c.bf16 %v4209, %v4207
        %v4230 = vpack.c.bf16 %v4210, %v4208
        %v4231 = vpack.c.bf16 %v4213, %v4211
        %v4232 = vpack.c.bf16 %v4214, %v4212
        %v4233 = vpack.c.bf16 %v4217, %v4215
        %v4234 = vpack.c.bf16 %v4218, %v4216
        %s4235 = scalar_lea.vmem %s4, 768
        %v4236 = vld [vmem:[%s4235] sm:$0xff]
        %v4237 = vld [vmem:[%s4235 + $0x8] sm:$0xff]
        %v4238 = vld [vmem:[%s4235 + $0x10] sm:$0xff]
        %v4239 = vld [vmem:[%s4235 + $0x18] sm:$0xff]
        %v4240 = vld [vmem:[%s4235 + $0x20] sm:$0xff]
        %v4241 = vld [vmem:[%s4235 + $0x28] sm:$0xff]
        %v4242 = vld [vmem:[%s4235 + $0x30] sm:$0xff]
        %v4243 = vld [vmem:[%s4235 + $0x38] sm:$0xff]
        %v4244 = vld [vmem:[%s4235 + $0x40] sm:$0xff]
        %v4245 = vld [vmem:[%s4235 + $0x48] sm:$0xff]
        %v4246 = vld [vmem:[%s4235 + $0x50] sm:$0xff]
        %v4247 = vld [vmem:[%s4235 + $0x58] sm:$0xff]
        %v4248 = vld [vmem:[%s4235 + $0x60] sm:$0xff]
        %v4249 = vld [vmem:[%s4235 + $0x68] sm:$0xff]
        %v4250 = vld [vmem:[%s4235 + $0x70] sm:$0xff]
        %v4251 = vld [vmem:[%s4235 + $0x78] sm:$0xff]
        %v4252 = vld [vmem:[%s4235 + $0x80] sm:$0xff]
        %v4253 = vld [vmem:[%s4235 + $0x88] sm:$0xff]
        %v4254 = vld [vmem:[%s4235 + $0x90] sm:$0xff]
        %v4255 = vld [vmem:[%s4235 + $0x98] sm:$0xff]
        %v4256 = vld [vmem:[%s4235 + $0xa0] sm:$0xff]
        %v4257 = vld [vmem:[%s4235 + $0xa8] sm:$0xff]
        %v4258 = vld [vmem:[%s4235 + $0xb0] sm:$0xff]
        %v4259 = vld [vmem:[%s4235 + $0xb8] sm:$0xff]
        %v4260 = vld [vmem:[%s4235 + $0xc0] sm:$0xff]
        %v4261 = vld [vmem:[%s4235 + $0xc8] sm:$0xff]
        %v4262 = vld [vmem:[%s4235 + $0xd0] sm:$0xff]
        %v4263 = vld [vmem:[%s4235 + $0xd8] sm:$0xff]
        %v4264 = vld [vmem:[%s4235 + $0xe0] sm:$0xff]
        %v4265 = vld [vmem:[%s4235 + $0xe8] sm:$0xff]
        %v4266 = vld [vmem:[%s4235 + $0xf0] sm:$0xff]
        %v4267 = vld [vmem:[%s4235 + $0xf8] sm:$0xff]
        %v4300 = vunpack.c.l.b16 %v4236
        %v4301 = vunpack.c.h.b16 %v4236
        %v4302 = vunpack.c.l.b16 %v4237
        %v4303 = vunpack.c.h.b16 %v4237
        %v4304 = vunpack.c.l.b16 %v4238
        %v4305 = vunpack.c.h.b16 %v4238
        %v4306 = vunpack.c.l.b16 %v4239
        %v4307 = vunpack.c.h.b16 %v4239
        %v4308 = vunpack.c.l.b16 %v4240
        %v4309 = vunpack.c.h.b16 %v4240
        %v4310 = vunpack.c.l.b16 %v4241
        %v4311 = vunpack.c.h.b16 %v4241
        %v4312 = vunpack.c.l.b16 %v4242
        %v4313 = vunpack.c.h.b16 %v4242
        %v4314 = vunpack.c.l.b16 %v4243
        %v4315 = vunpack.c.h.b16 %v4243
        %v4316 = vunpack.c.l.b16 %v4244
        %v4317 = vunpack.c.h.b16 %v4244
        %v4318 = vunpack.c.l.b16 %v4245
        %v4319 = vunpack.c.h.b16 %v4245
        %v4320 = vunpack.c.l.b16 %v4246
        %v4321 = vunpack.c.h.b16 %v4246
        %v4322 = vunpack.c.l.b16 %v4247
        %v4323 = vunpack.c.h.b16 %v4247
        %v4324 = vunpack.c.l.b16 %v4248
        %v4325 = vunpack.c.h.b16 %v4248
        %v4326 = vunpack.c.l.b16 %v4249
        %v4327 = vunpack.c.h.b16 %v4249
        %v4328 = vunpack.c.l.b16 %v4250
        %v4329 = vunpack.c.h.b16 %v4250
        %v4330 = vunpack.c.l.b16 %v4251
        %v4331 = vunpack.c.h.b16 %v4251
        %v4332 = vunpack.c.l.b16 %v4252
        %v4333 = vunpack.c.h.b16 %v4252
        %v4334 = vunpack.c.l.b16 %v4253
        %v4335 = vunpack.c.h.b16 %v4253
        %v4336 = vunpack.c.l.b16 %v4254
        %v4337 = vunpack.c.h.b16 %v4254
        %v4338 = vunpack.c.l.b16 %v4255
        %v4339 = vunpack.c.h.b16 %v4255
        %v4340 = vunpack.c.l.b16 %v4256
        %v4341 = vunpack.c.h.b16 %v4256
        %v4342 = vunpack.c.l.b16 %v4257
        %v4343 = vunpack.c.h.b16 %v4257
        %v4344 = vunpack.c.l.b16 %v4258
        %v4345 = vunpack.c.h.b16 %v4258
        %v4346 = vunpack.c.l.b16 %v4259
        %v4347 = vunpack.c.h.b16 %v4259
        %v4348 = vunpack.c.l.b16 %v4260
        %v4349 = vunpack.c.h.b16 %v4260
        %v4350 = vunpack.c.l.b16 %v4261
        %v4351 = vunpack.c.h.b16 %v4261
        %v4352 = vunpack.c.l.b16 %v4262
        %v4353 = vunpack.c.h.b16 %v4262
        %v4354 = vunpack.c.l.b16 %v4263
        %v4355 = vunpack.c.h.b16 %v4263
        %v4356 = vunpack.c.l.b16 %v4264
        %v4357 = vunpack.c.h.b16 %v4264
        %v4358 = vunpack.c.l.b16 %v4265
        %v4359 = vunpack.c.h.b16 %v4265
        %v4360 = vunpack.c.l.b16 %v4266
        %v4361 = vunpack.c.h.b16 %v4266
        %v4362 = vunpack.c.l.b16 %v4267
        %v4363 = vunpack.c.h.b16 %v4267
        %v4364 = vpack.c.b16 %v4302, %v4300
        %v4365 = vpack.c.b16 %v4303, %v4301
        %v4366 = vpack.c.b16 %v4306, %v4304
        %v4367 = vpack.c.b16 %v4307, %v4305
        %v4368 = vpack.c.b16 %v4310, %v4308
        %v4369 = vpack.c.b16 %v4311, %v4309
        %v4370 = vpack.c.b16 %v4314, %v4312
        %v4371 = vpack.c.b16 %v4315, %v4313
        %v4372 = vpack.c.b16 %v4318, %v4316
        %v4373 = vpack.c.b16 %v4319, %v4317
        %v4374 = vpack.c.b16 %v4322, %v4320
        %v4375 = vpack.c.b16 %v4323, %v4321
        %v4376 = vpack.c.b16 %v4326, %v4324
        %v4377 = vpack.c.b16 %v4327, %v4325
        %v4378 = vpack.c.b16 %v4330, %v4328
        %v4379 = vpack.c.b16 %v4331, %v4329
        %v4380 = vpack.c.b16 %v4334, %v4332
        %v4381 = vpack.c.b16 %v4335, %v4333
        %v4382 = vpack.c.b16 %v4338, %v4336
        %v4383 = vpack.c.b16 %v4339, %v4337
        %v4384 = vpack.c.b16 %v4342, %v4340
        %v4385 = vpack.c.b16 %v4343, %v4341
        %v4386 = vpack.c.b16 %v4346, %v4344
        %v4387 = vpack.c.b16 %v4347, %v4345
        %v4388 = vpack.c.b16 %v4350, %v4348
        %v4389 = vpack.c.b16 %v4351, %v4349
        %v4390 = vpack.c.b16 %v4354, %v4352
        %v4391 = vpack.c.b16 %v4355, %v4353
        %v4392 = vpack.c.b16 %v4358, %v4356
        %v4393 = vpack.c.b16 %v4359, %v4357
        %v4394 = vpack.c.b16 %v4362, %v4360
        %v4395 = vpack.c.b16 %v4363, %v4361
        %4428 = vmatpush.bf16.msra.mxu0 %v4378
        %4429 = vmatpush.bf16.msra.mxu0 %v4376
        %4430 = vmatpush.bf16.msra.mxu0 %v4374
        %4431 = vmatpush.bf16.msra.mxu0 %v4372
        %4432 = vmatpush.bf16.msra.mxu0 %v4370
        %4433 = vmatpush.bf16.msra.mxu0 %v4368
        %4434 = vmatpush.bf16.msra.mxu0 %v4366
        %4435 = vmatpush.bf16.msra.mxu0 %v4364
        %4436 = vmatmul.bf16.gmra.mxu0 %v4219
        %v4437 = vpop.f32.mrf.mxu0
        %v4438 = vadd.f32 0.0, %v4437
        %v4439 = vpop.f32.mrf.mxu0
        %v4440 = vadd.f32 0.0, %v4439
        %4441 = vmatmul.bf16.gmra.mxu0 %v4221
        %v4442 = vpop.f32.mrf.mxu0
        %v4443 = vadd.f32 0.0, %v4442
        %v4444 = vpop.f32.mrf.mxu0
        %v4445 = vadd.f32 0.0, %v4444
        %4446 = vmatmul.bf16.gmra.mxu0 %v4223
        %v4447 = vpop.f32.mrf.mxu0
        %v4448 = vadd.f32 0.0, %v4447
        %v4449 = vpop.f32.mrf.mxu0
        %v4450 = vadd.f32 0.0, %v4449
        %4451 = vmatmul.bf16.gmra.mxu0 %v4225
        %v4452 = vpop.f32.mrf.mxu0
        %v4453 = vadd.f32 0.0, %v4452
        %v4454 = vpop.f32.mrf.mxu0
        %v4455 = vadd.f32 0.0, %v4454
        %4456 = vmatmul.bf16.gmra.mxu0 %v4227
        %v4457 = vpop.f32.mrf.mxu0
        %v4458 = vadd.f32 0.0, %v4457
        %v4459 = vpop.f32.mrf.mxu0
        %v4460 = vadd.f32 0.0, %v4459
        %4461 = vmatmul.bf16.gmra.mxu0 %v4229
        %v4462 = vpop.f32.mrf.mxu0
        %v4463 = vadd.f32 0.0, %v4462
        %v4464 = vpop.f32.mrf.mxu0
        %v4465 = vadd.f32 0.0, %v4464
        %4466 = vmatmul.bf16.gmra.mxu0 %v4231
        %v4467 = vpop.f32.mrf.mxu0
        %v4468 = vadd.f32 0.0, %v4467
        %v4469 = vpop.f32.mrf.mxu0
        %v4470 = vadd.f32 0.0, %v4469
        %4471 = vmatmul.bf16.gmra.mxu0 %v4233
        %v4472 = vpop.f32.mrf.mxu0
        %v4473 = vadd.f32 0.0, %v4472
        %v4474 = vpop.f32.mrf.mxu0
        %v4475 = vadd.f32 0.0, %v4474
        %4476 = vdwg.mxu0
        %4477 = vmatpush.bf16.msra.mxu0 %v4394
        %4478 = vmatpush.bf16.msra.mxu0 %v4392
        %4479 = vmatpush.bf16.msra.mxu0 %v4390
        %4480 = vmatpush.bf16.msra.mxu0 %v4388
        %4481 = vmatpush.bf16.msra.mxu0 %v4386
        %4482 = vmatpush.bf16.msra.mxu0 %v4384
        %4483 = vmatpush.bf16.msra.mxu0 %v4382
        %4484 = vmatpush.bf16.msra.mxu0 %v4380
        %4485 = vmatmul.bf16.gmra.mxu0 %v4220
        %v4486 = vpop.f32.mrf.mxu0
        %v4487 = vadd.f32 %v4438, %v4486
        %v4488 = vpop.f32.mrf.mxu0
        %v4489 = vadd.f32 %v4440, %v4488
        %4490 = vmatmul.bf16.gmra.mxu0 %v4222
        %v4491 = vpop.f32.mrf.mxu0
        %v4492 = vadd.f32 %v4443, %v4491
        %v4493 = vpop.f32.mrf.mxu0
        %v4494 = vadd.f32 %v4445, %v4493
        %4495 = vmatmul.bf16.gmra.mxu0 %v4224
        %v4496 = vpop.f32.mrf.mxu0
        %v4497 = vadd.f32 %v4448, %v4496
        %v4498 = vpop.f32.mrf.mxu0
        %v4499 = vadd.f32 %v4450, %v4498
        %4500 = vmatmul.bf16.gmra.mxu0 %v4226
        %v4501 = vpop.f32.mrf.mxu0
        %v4502 = vadd.f32 %v4453, %v4501
        %v4503 = vpop.f32.mrf.mxu0
        %v4504 = vadd.f32 %v4455, %v4503
        %4505 = vmatmul.bf16.gmra.mxu0 %v4228
        %v4506 = vpop.f32.mrf.mxu0
        %v4507 = vadd.f32 %v4458, %v4506
        %v4508 = vpop.f32.mrf.mxu0
        %v4509 = vadd.f32 %v4460, %v4508
        %4510 = vmatmul.bf16.gmra.mxu0 %v4230
        %v4511 = vpop.f32.mrf.mxu0
        %v4512 = vadd.f32 %v4463, %v4511
        %v4513 = vpop.f32.mrf.mxu0
        %v4514 = vadd.f32 %v4465, %v4513
        %4515 = vmatmul.bf16.gmra.mxu0 %v4232
        %v4516 = vpop.f32.mrf.mxu0
        %v4517 = vadd.f32 %v4468, %v4516
        %v4518 = vpop.f32.mrf.mxu0
        %v4519 = vadd.f32 %v4470, %v4518
        %4520 = vmatmul.bf16.gmra.mxu0 %v4234
        %v4521 = vpop.f32.mrf.mxu0
        %v4522 = vadd.f32 %v4473, %v4521
        %v4523 = vpop.f32.mrf.mxu0
        %v4524 = vadd.f32 %v4475, %v4523
        %4525 = vdwg.mxu0
        %4526 = vmatpush.bf16.msra.mxu0 %v4379
        %4527 = vmatpush.bf16.msra.mxu0 %v4377
        %4528 = vmatpush.bf16.msra.mxu0 %v4375
        %4529 = vmatpush.bf16.msra.mxu0 %v4373
        %4530 = vmatpush.bf16.msra.mxu0 %v4371
        %4531 = vmatpush.bf16.msra.mxu0 %v4369
        %4532 = vmatpush.bf16.msra.mxu0 %v4367
        %4533 = vmatpush.bf16.msra.mxu0 %v4365
        %4534 = vmatmul.bf16.gmra.mxu0 %v4219
        %v4535 = vpop.f32.mrf.mxu0
        %v4536 = vadd.f32 0.0, %v4535
        %v4537 = vpop.f32.mrf.mxu0
        %v4538 = vadd.f32 0.0, %v4537
        %4539 = vmatmul.bf16.gmra.mxu0 %v4221
        %v4540 = vpop.f32.mrf.mxu0
        %v4541 = vadd.f32 0.0, %v4540
        %v4542 = vpop.f32.mrf.mxu0
        %v4543 = vadd.f32 0.0, %v4542
        %4544 = vmatmul.bf16.gmra.mxu0 %v4223
        %v4545 = vpop.f32.mrf.mxu0
        %v4546 = vadd.f32 0.0, %v4545
        %v4547 = vpop.f32.mrf.mxu0
        %v4548 = vadd.f32 0.0, %v4547
        %4549 = vmatmul.bf16.gmra.mxu0 %v4225
        %v4550 = vpop.f32.mrf.mxu0
        %v4551 = vadd.f32 0.0, %v4550
        %v4552 = vpop.f32.mrf.mxu0
        %v4553 = vadd.f32 0.0, %v4552
        %4554 = vmatmul.bf16.gmra.mxu0 %v4227
        %v4555 = vpop.f32.mrf.mxu0
        %v4556 = vadd.f32 0.0, %v4555
        %v4557 = vpop.f32.mrf.mxu0
        %v4558 = vadd.f32 0.0, %v4557
        %4559 = vmatmul.bf16.gmra.mxu0 %v4229
        %v4560 = vpop.f32.mrf.mxu0
        %v4561 = vadd.f32 0.0, %v4560
        %v4562 = vpop.f32.mrf.mxu0
        %v4563 = vadd.f32 0.0, %v4562
        %4564 = vmatmul.bf16.gmra.mxu0 %v4231
        %v4565 = vpop.f32.mrf.mxu0
        %v4566 = vadd.f32 0.0, %v4565
        %v4567 = vpop.f32.mrf.mxu0
        %v4568 = vadd.f32 0.0, %v4567
        %4569 = vmatmul.bf16.gmra.mxu0 %v4233
        %v4570 = vpop.f32.mrf.mxu0
        %v4571 = vadd.f32 0.0, %v4570
        %v4572 = vpop.f32.mrf.mxu0
        %v4573 = vadd.f32 0.0, %v4572
        %4574 = vdwg.mxu0
        %4575 = vmatpush.bf16.msra.mxu0 %v4395
        %4576 = vmatpush.bf16.msra.mxu0 %v4393
        %4577 = vmatpush.bf16.msra.mxu0 %v4391
        %4578 = vmatpush.bf16.msra.mxu0 %v4389
        %4579 = vmatpush.bf16.msra.mxu0 %v4387
        %4580 = vmatpush.bf16.msra.mxu0 %v4385
        %4581 = vmatpush.bf16.msra.mxu0 %v4383
        %4582 = vmatpush.bf16.msra.mxu0 %v4381
        %4583 = vmatmul.bf16.gmra.mxu0 %v4220
        %v4584 = vpop.f32.mrf.mxu0
        %v4585 = vadd.f32 %v4536, %v4584
        %v4586 = vpop.f32.mrf.mxu0
        %v4587 = vadd.f32 %v4538, %v4586
        %4588 = vmatmul.bf16.gmra.mxu0 %v4222
        %v4589 = vpop.f32.mrf.mxu0
        %v4590 = vadd.f32 %v4541, %v4589
        %v4591 = vpop.f32.mrf.mxu0
        %v4592 = vadd.f32 %v4543, %v4591
        %4593 = vmatmul.bf16.gmra.mxu0 %v4224
        %v4594 = vpop.f32.mrf.mxu0
        %v4595 = vadd.f32 %v4546, %v4594
        %v4596 = vpop.f32.mrf.mxu0
        %v4597 = vadd.f32 %v4548, %v4596
        %4598 = vmatmul.bf16.gmra.mxu0 %v4226
        %v4599 = vpop.f32.mrf.mxu0
        %v4600 = vadd.f32 %v4551, %v4599
        %v4601 = vpop.f32.mrf.mxu0
        %v4602 = vadd.f32 %v4553, %v4601
        %4603 = vmatmul.bf16.gmra.mxu0 %v4228
        %v4604 = vpop.f32.mrf.mxu0
        %v4605 = vadd.f32 %v4556, %v4604
        %v4606 = vpop.f32.mrf.mxu0
        %v4607 = vadd.f32 %v4558, %v4606
        %4608 = vmatmul.bf16.gmra.mxu0 %v4230
        %v4609 = vpop.f32.mrf.mxu0
        %v4610 = vadd.f32 %v4561, %v4609
        %v4611 = vpop.f32.mrf.mxu0
        %v4612 = vadd.f32 %v4563, %v4611
        %4613 = vmatmul.bf16.gmra.mxu0 %v4232
        %v4614 = vpop.f32.mrf.mxu0
        %v4615 = vadd.f32 %v4566, %v4614
        %v4616 = vpop.f32.mrf.mxu0
        %v4617 = vadd.f32 %v4568, %v4616
        %4618 = vmatmul.bf16.gmra.mxu0 %v4234
        %v4619 = vpop.f32.mrf.mxu0
        %v4620 = vadd.f32 %v4571, %v4619
        %v4621 = vpop.f32.mrf.mxu0
        %v4622 = vadd.f32 %v4573, %v4621
        %4623 = vdwg.mxu0
        %v4624 = vadd.f32 %v3540, %v4487
        %v4625 = vadd.f32 %v3541, %v4585
        %v4626 = vadd.f32 %v3542, %v4489
        %v4627 = vadd.f32 %v3543, %v4587
        %v4628 = vadd.f32 %v3544, %v4492
        %v4629 = vadd.f32 %v3545, %v4590
        %v4630 = vadd.f32 %v3546, %v4494
        %v4631 = vadd.f32 %v3547, %v4592
        %v4632 = vadd.f32 %v3548, %v4497
        %v4633 = vadd.f32 %v3549, %v4595
        %v4634 = vadd.f32 %v3550, %v4499
        %v4635 = vadd.f32 %v3551, %v4597
        %v4636 = vadd.f32 %v3552, %v4502
        %v4637 = vadd.f32 %v3553, %v4600
        %v4638 = vadd.f32 %v3554, %v4504
        %v4639 = vadd.f32 %v3555, %v4602
        %v4640 = vadd.f32 %v3556, %v4507
        %v4641 = vadd.f32 %v3557, %v4605
        %v4642 = vadd.f32 %v3558, %v4509
        %v4643 = vadd.f32 %v3559, %v4607
        %v4644 = vadd.f32 %v3560, %v4512
        %v4645 = vadd.f32 %v3561, %v4610
        %v4646 = vadd.f32 %v3562, %v4514
        %v4647 = vadd.f32 %v3563, %v4612
        %v4648 = vadd.f32 %v3564, %v4517
        %v4649 = vadd.f32 %v3565, %v4615
        %v4650 = vadd.f32 %v3566, %v4519
        %v4651 = vadd.f32 %v3567, %v4617
        %v4652 = vadd.f32 %v3568, %v4522
        %v4653 = vadd.f32 %v3569, %v4620
        %v4654 = vadd.f32 %v3570, %v4524
        %v4655 = vadd.f32 %v3571, %v4622
        %v4656 = vld [vmem:[%s280] sm:$0x3]
        %v4658 = vperm.slane %v4656, 0
        %v4659 = vperm.slane %v4656, 1
        %v4662 = vadd.f32 %v4624, %v4658
        %v4663 = vadd.f32 %v4625, %v4659
        %v4664 = vadd.f32 %v4626, %v4658
        %v4665 = vadd.f32 %v4627, %v4659
        %v4666 = vadd.f32 %v4628, %v4658
        %v4667 = vadd.f32 %v4629, %v4659
        %v4668 = vadd.f32 %v4630, %v4658
        %v4669 = vadd.f32 %v4631, %v4659
        %v4670 = vadd.f32 %v4632, %v4658
        %v4671 = vadd.f32 %v4633, %v4659
        %v4672 = vadd.f32 %v4634, %v4658
        %v4673 = vadd.f32 %v4635, %v4659
        %v4674 = vadd.f32 %v4636, %v4658
        %v4675 = vadd.f32 %v4637, %v4659
        %v4676 = vadd.f32 %v4638, %v4658
        %v4677 = vadd.f32 %v4639, %v4659
        %v4678 = vadd.f32 %v4640, %v4658
        %v4679 = vadd.f32 %v4641, %v4659
        %v4680 = vadd.f32 %v4642, %v4658
        %v4681 = vadd.f32 %v4643, %v4659
        %v4682 = vadd.f32 %v4644, %v4658
        %v4683 = vadd.f32 %v4645, %v4659
        %v4684 = vadd.f32 %v4646, %v4658
        %v4685 = vadd.f32 %v4647, %v4659
        %v4686 = vadd.f32 %v4648, %v4658
        %v4687 = vadd.f32 %v4649, %v4659
        %v4688 = vadd.f32 %v4650, %v4658
        %v4689 = vadd.f32 %v4651, %v4659
        %v4690 = vadd.f32 %v4652, %v4658
        %v4691 = vadd.f32 %v4653, %v4659
        %v4692 = vadd.f32 %v4654, %v4658
        %v4693 = vadd.f32 %v4655, %v4659
        %v4694 = vmax.f32 %v4662, 0.0
        %v4695 = vmax.f32 %v4663, 0.0
        %v4696 = vmax.f32 %v4664, 0.0
        %v4697 = vmax.f32 %v4665, 0.0
        %v4698 = vmax.f32 %v4666, 0.0
        %v4699 = vmax.f32 %v4667, 0.0
        %v4700 = vmax.f32 %v4668, 0.0
        %v4701 = vmax.f32 %v4669, 0.0
        %v4702 = vmax.f32 %v4670, 0.0
        %v4703 = vmax.f32 %v4671, 0.0
        %v4704 = vmax.f32 %v4672, 0.0
        %v4705 = vmax.f32 %v4673, 0.0
        %v4706 = vmax.f32 %v4674, 0.0
        %v4707 = vmax.f32 %v4675, 0.0
        %v4708 = vmax.f32 %v4676, 0.0
        %v4709 = vmax.f32 %v4677, 0.0
        %v4710 = vmax.f32 %v4678, 0.0
        %v4711 = vmax.f32 %v4679, 0.0
        %v4712 = vmax.f32 %v4680, 0.0
        %v4713 = vmax.f32 %v4681, 0.0
        %v4714 = vmax.f32 %v4682, 0.0
        %v4715 = vmax.f32 %v4683, 0.0
        %v4716 = vmax.f32 %v4684, 0.0
        %v4717 = vmax.f32 %v4685, 0.0
        %v4718 = vmax.f32 %v4686, 0.0
        %v4719 = vmax.f32 %v4687, 0.0
        %v4720 = vmax.f32 %v4688, 0.0
        %v4721 = vmax.f32 %v4689, 0.0
        %v4722 = vmax.f32 %v4690, 0.0
        %v4723 = vmax.f32 %v4691, 0.0
        %v4724 = vmax.f32 %v4692, 0.0
        %v4725 = vmax.f32 %v4693, 0.0
        %4726 = vst [vmem:[%s271] sm:$0xff] %v4694
        %4727 = vst [vmem:[%s271 + $0x8] sm:$0xff] %v4695
        %4728 = vst [vmem:[%s271 + $0x10] sm:$0xff] %v4696
        %4729 = vst [vmem:[%s271 + $0x18] sm:$0xff] %v4697
        %4730 = vst [vmem:[%s271 + $0x20] sm:$0xff] %v4698
        %4731 = vst [vmem:[%s271 + $0x28] sm:$0xff] %v4699
        %4732 = vst [vmem:[%s271 + $0x30] sm:$0xff] %v4700
        %4733 = vst [vmem:[%s271 + $0x38] sm:$0xff] %v4701
        %4734 = vst [vmem:[%s271 + $0x40] sm:$0xff] %v4702
        %4735 = vst [vmem:[%s271 + $0x48] sm:$0xff] %v4703
        %4736 = vst [vmem:[%s271 + $0x50] sm:$0xff] %v4704
        %4737 = vst [vmem:[%s271 + $0x58] sm:$0xff] %v4705
        %4738 = vst [vmem:[%s271 + $0x60] sm:$0xff] %v4706
        %4739 = vst [vmem:[%s271 + $0x68] sm:$0xff] %v4707
        %4740 = vst [vmem:[%s271 + $0x70] sm:$0xff] %v4708
        %4741 = vst [vmem:[%s271 + $0x78] sm:$0xff] %v4709
        %4742 = vst [vmem:[%s271 + $0x80] sm:$0xff] %v4710
        %4743 = vst [vmem:[%s271 + $0x88] sm:$0xff] %v4711
        %4744 = vst [vmem:[%s271 + $0x90] sm:$0xff] %v4712
        %4745 = vst [vmem:[%s271 + $0x98] sm:$0xff] %v4713
        %4746 = vst [vmem:[%s271 + $0xa0] sm:$0xff] %v4714
        %4747 = vst [vmem:[%s271 + $0xa8] sm:$0xff] %v4715
        %4748 = vst [vmem:[%s271 + $0xb0] sm:$0xff] %v4716
        %4749 = vst [vmem:[%s271 + $0xb8] sm:$0xff] %v4717
        %4750 = vst [vmem:[%s271 + $0xc0] sm:$0xff] %v4718
        %4751 = vst [vmem:[%s271 + $0xc8] sm:$0xff] %v4719
        %4752 = vst [vmem:[%s271 + $0xd0] sm:$0xff] %v4720
        %4753 = vst [vmem:[%s271 + $0xd8] sm:$0xff] %v4721
        %4754 = vst [vmem:[%s271 + $0xe0] sm:$0xff] %v4722
        %4755 = vst [vmem:[%s271 + $0xe8] sm:$0xff] %v4723
        %4756 = vst [vmem:[%s271 + $0xf0] sm:$0xff] %v4724
        %4757 = vst [vmem:[%s271 + $0xf8] sm:$0xff] %v4725
        %s4758 = sand.u32 %s178, 1
        %s4759 = scalar_lea.sflag [#allocation3], %s4758
        %s4760 = sand.u32 %s178, 1
        %s4761 = smul.addr %s4760, 256
        %s4762 = scalar_lea.vmem [#allocation2], %s4761
        // Predicated region
        $region45: #{aspp_forward.1} parent=43 // pred_check
          %p4763 = pneg %p188
        $region46: #{aspp_forward.1} parent=43 // pred_check_branch
          %4765 = sbr.rel (%p4763) target = $region48
        $region47: #{aspp_forward.1} parent=43 // pred_region
          %s4766 = smul.u32 16, %s25
          %4768 = vsyncadd %s4759, 0
          %s4769 = smul.addr %s4766, 2
          %s4770 = smul.addr %s24, 64
          %s4771 = sadd.s32 %s4769, %s4770
          %s4772 = smul.addr %s4771, 8
          %s4773 = scalar_lea.hbm %s6, %s4772
          %s4774 = sshll.u32 %s4762, 4
          %s4775 = int_to_ptr.vmem [resolvable:$true] %s4774
          %s4776 = sshll.u32 %s4773, 4
          %s4777 = int_to_ptr.hbm [resolvable:$true] %s4776
          %4782 = dma.vmem_to_hbm [thread:$0]  %s4775, 4096, %s4777, %s4759, 256, 256, 16
        $region48: #{aspp_forward.1} parent=43 // pred_fallthru
          _
      $region44: #{aspp_forward.1} parent=5 // pred_fallthru
        _
      %p4783 = scmp.le.s32.totalorder 2, %s15
      // Predicated region
      $region49: #{aspp_forward.1} parent=5 // pred_check
        %p4784 = pneg %p4783
      $region50: #{aspp_forward.1} parent=5 // pred_check_branch
        %4786 = sbr.rel (%p4784) target = $region52
      $region51: #{aspp_forward.1} parent=5 // pred_region
        %s4787 = ssub.s32 %s15, 2
        // Predicated region
        $region53: #{aspp_forward.1} parent=51 // pred_check
          %p4788 = pneg %p194
        $region54: #{aspp_forward.1} parent=51 // pred_check_branch
          %4790 = sbr.rel (%p4788) target = $region56
        $region55: #{aspp_forward.1} parent=51 // pred_region
          %s4791 = sand.u32 %s179, 1
          %s4792 = scalar_lea.sflag [#allocation3], %s4791
          %s4793 = sand.u32 %s179, 1
          %s4794 = smul.addr %s4793, 256
          %s4795 = scalar_lea.vmem [#allocation2], %s4794
          %4797 = dma.done %s4792, 4096
        $region56: #{aspp_forward.1} parent=51 // pred_fallthru
          _
      $region52: #{aspp_forward.1} parent=5 // pred_fallthru
        _
    $region6: #{aspp_forward.1} parent=1 // loop_footer
      %s19 = sadd.s32 1, %s15
    $region7: #{aspp_forward.1} parent=1 // loop_footer_branch
      %14 = sbr.rel target = $region3
    $region8: #{aspp_forward.1} parent=1 // loop_exit
      _
    %4798 = vsyncpa [#allocation3], 1
    %s4799 = scalar_lea.sflag [#allocation3], 1
    %4800 = vsyncpa %s4799, 1

</llo_original>
